<compile_context>
chip_gen: v7x
topology: tpu7x:2x2x1
jax: 0.10.0
libtpu: 0.0.40
codegen_flags: <defaults>
</compile_context>

<pallas_src>
import functools

import jax
import jax.numpy as jnp
from jax.experimental import pallas as pl
from jax.experimental.pallas import tpu as pltpu

_LANE = 128
_SUBLANE = 8


def _round_up(n, m):
    return ((n + m - 1) // m) * m


def _cdiv(a, b):
    return -(-a // b)


def _pad2(a, rows, cols):
    r, c = a.shape
    if r == rows and c == cols:
        return a
    return jnp.pad(a, ((0, rows - r), (0, cols - c)))


def _vmem_cap_bytes():
    """Generation-aware VMEM budget (leave headroom for Mosaic scratch)."""
    try:
        info = pltpu.get_tpu_info()
        cap = int(getattr(info, "vmem_capacity_bytes", 0) or 0)
        if cap > 0:
            return int(0.75 * cap)      # ~96 MiB on v5e/v6e, ~48 MiB on v7x
    except Exception:
        pass
    return 48 * 1024 * 1024             # conservative fallback (fits v7x)


def _gated_fusion_kernel(x_ref, y_ref,
                         wxt_ref, bx_ref,
                         wyt_ref, by_ref,
                         wot_ref, bo_ref,
                         *refs,
                         x_gate: bool, emit_xy: bool):
    if emit_xy:
        out_x_ref, out_y_ref, out_ref, acc_ref = refs
    else:
        out_ref, acc_ref = refs

    k = pl.program_id(1)
    nk = pl.num_programs(1)

    @pl.when(k == 0)
    def _():
        acc_ref[...] = jnp.zeros_like(acc_ref)

    x = x_ref[...]
    y = y_ref[...]

    # fc_x / fc_y: weights already transposed to [in, d-slice] in the wrapper;
    # operands may be bf16, accumulation is f32.
    out_x = jnp.dot(x, wxt_ref[...], preferred_element_type=jnp.float32) + bx_ref[...]
    out_y = jnp.dot(y, wyt_ref[...], preferred_element_type=jnp.float32) + by_ref[...]

    # Gate + multiply in f32 (VPU/EUP); zero-padded d-columns stay exactly 0.
    if x_gate:
        fused = jax.nn.sigmoid(out_x) * out_y
    else:
        fused = out_x * jax.nn.sigmoid(out_y)

    # fc_out: K-tiled contraction over the hidden dim, accumulated in f32.
    acc_ref[...] += jnp.dot(fused.astype(wot_ref.dtype), wot_ref[...],
                            preferred_element_type=jnp.float32)

    if emit_xy:
        out_x_ref[...] = out_x.astype(out_x_ref.dtype)
        out_y_ref[...] = out_y.astype(out_y_ref.dtype)

    @pl.when(k == nk - 1)
    def _():
        out_ref[...] = (acc_ref[...] + bo_ref[...]).astype(out_ref.dtype)


def gated_fusion(x, y, params, *, x_gate=True, tb=None, td=None,
                 return_intermediates=True, matmul_dtype=jnp.bfloat16,
                 out_dtype=None):
    """Pallas implementation of GatedFusion.forward.

    params = (W_x, b_x, W_y, b_y, W_out, b_out) in PyTorch nn.Linear layout
    (W: [out_features, in_features], b: [out_features] or [1, out_features]).

    Returns (out_x, out_y, output) if return_intermediates else output.
    """
    B, input_dim = x.shape
    wx, bx, wy, by, wo, bo = params
    dim = wx.shape[0]
    output_dim = wo.shape[0]

    out_dtype = x.dtype if out_dtype is None else out_dtype
    op_dtype = x.dtype if matmul_dtype is None else matmul_dtype

    # ---- padding / tile plan ---------------------------------------------
    in_p = _round_up(input_dim, _LANE)
    o_p = _round_up(output_dim, _LANE)
    d_base = _round_up(dim, _LANE)

    if td is None:
        td = min(d_base, 1024)
    td = max(_LANE, min(_round_up(int(td), _LANE), d_base))

    def plan_d(td_):
        steps = _cdiv(d_base, td_)
        return steps, steps * td_

    d_steps, d_p = plan_d(td)

    if tb is None:
        tb = 512                                   # big tile: amortize grid-step
    tb = max(_SUBLANE, min(_round_up(int(tb), _SUBLANE), _round_up(B, _SUBLANE)))

    act_bytes = jnp.dtype(op_dtype).itemsize
    out_bytes = jnp.dtype(out_dtype).itemsize

    def vmem_est(tb_, td_, d_steps_):
        n_wbuf = 1 if d_steps_ == 1 else 2         # resident weights: 1 buffer
        e = 2 * 2 * tb_ * in_p * act_bytes                         # x, y tiles
        e += n_wbuf * (2 * in_p * td_ + td_ * o_p) * act_bytes     # weight blocks
        e += n_wbuf * 2 * td_ * 4 + o_p * 4                        # bias blocks (f32)
        out_elems = (2 * td_ + o_p) if return_intermediates else o_p
        e += 2 * tb_ * out_elems * out_bytes                       # output tiles
        e += tb_ * o_p * 4                                         # f32 accumulator
        return int(e)

    cap = _vmem_cap_bytes()
    while vmem_est(tb, td, d_steps) > cap and tb > 64:
        tb = _round_up(max(tb // 2, _SUBLANE), _SUBLANE)
    while vmem_est(tb, td, d_steps) > cap and td > _LANE:
        td = _round_up(max(td // 2, _LANE), _LANE)
        d_steps, d_p = plan_d(td)

    b_p = _round_up(B, tb)
    # Keep >=2 batch steps (when the tile stays >=256) so the "parallel" axis
    # can shard across v7x's 2 TensorCores; one extra step (~0.35us) is
    # negligible on single-TC v5e/v6e.
    if b_p // tb < 2:
        half = _round_up(_cdiv(b_p, 2), _SUBLANE)
        if half >= 256:
            tb = half
            b_p = _round_up(B, tb)

    grid = (b_p // tb, d_steps)

    # ---- wrapper-side layout + dtype work (one-time, done by XLA) ---------
    x_p = _pad2(x, b_p, in_p).astype(op_dtype)
    y_p = _pad2(y, b_p, in_p).astype(op_dtype)
    wxt = _pad2(wx.T, in_p, d_p).astype(op_dtype)     # [in_p, d_p]
    wyt = _pad2(wy.T, in_p, d_p).astype(op_dtype)     # [in_p, d_p]
    wot = _pad2(wo.T, d_p, o_p).astype(op_dtype)      # [d_p,  o_p]
    bx_p = _pad2(bx.reshape(1, -1).astype(jnp.float32), 1, d_p)
    by_p = _pad2(by.reshape(1, -1).astype(jnp.float32), 1, d_p)
    bo_p = _pad2(bo.reshape(1, -1).astype(jnp.float32), 1, o_p)

    if return_intermediates:
        out_shape = (
            jax.ShapeDtypeStruct((b_p, d_p), out_dtype),
            jax.ShapeDtypeStruct((b_p, d_p), out_dtype),
            jax.ShapeDtypeStruct((b_p, o_p), out_dtype),
        )
    else:
        out_shape = jax.ShapeDtypeStruct((b_p, o_p), out_dtype)

    vmem_limit = int(min(cap, max(32 * 1024 * 1024,
                                  1.25 * vmem_est(tb, td, d_steps))))

    kernel = functools.partial(_gated_fusion_kernel,
                               x_gate=x_gate,
                               emit_xy=return_intermediates)

    def build_specs(allow_single_buffer):
        def spec(shape, index_map, bufs=None):
            if bufs is not None and allow_single_buffer and hasattr(pl, "Buffered"):
                try:
                    return pl.BlockSpec(shape, index_map,
                                        pipeline_mode=pl.Buffered(bufs))
                except TypeError:
                    pass
            return pl.BlockSpec(shape, index_map)

        # Weight/bias blocks are never re-fetched when the whole hidden dim
        # fits in one d-tile -> single-buffer them (halves weight VMEM).
        w_bufs = 1 if d_steps == 1 else None
        in_specs = [
            spec((tb, in_p), lambda i, k: (i, 0)),            # x tile
            spec((tb, in_p), lambda i, k: (i, 0)),            # y tile
            spec((in_p, td), lambda i, k: (0, k), w_bufs),    # W_x^T d-slice
            spec((1, td),   lambda i, k: (0, k), w_bufs),     # b_x d-slice
            spec((in_p, td), lambda i, k: (0, k), w_bufs),    # W_y^T d-slice
            spec((1, td),   lambda i, k: (0, k), w_bufs),     # b_y d-slice
            spec((td, o_p), lambda i, k: (k, 0), w_bufs),     # W_out^T d-slice
            spec((1, o_p),  lambda i, k: (0, 0), 1),          # b_out (constant)
        ]
        out_spec = spec((tb, o_p), lambda i, k: (i, 0))       # accumulated output
        if return_intermediates:
            out_specs = (spec((tb, td), lambda i, k: (i, k)),
                         spec((tb, td), lambda i, k: (i, k)),
                         out_spec)
        else:
            out_specs = out_spec
        return in_specs, out_specs

    def run(allow_single_buffer):
        in_specs, out_specs = build_specs(allow_single_buffer)
        return pl.pallas_call(
            kernel,
            out_shape=out_shape,
            grid=grid,
            in_specs=in_specs,
            out_specs=out_specs,
            scratch_shapes=[pltpu.VMEM((tb, o_p), jnp.float32)],
            compiler_params=pltpu.CompilerParams(
                dimension_semantics=("parallel", "arbitrary"),
                vmem_limit_bytes=vmem_limit,
            ),
        )(x_p, y_p, wxt, bx_p, wyt, by_p, wot, bo_p)

    try:
        result = run(True)
    except Exception:
        # Fallback: this Pallas build rejects pl.Buffered(1) on constant-index
        # blocks -> use default (double-buffered) pipelining.
        result = run(False)

    # ---- strip the padding back off ---------------------------------------
    if return_intermediates:
        out_x_p, out_y_p, out_p = result
        return (out_x_p[:B, :dim], out_y_p[:B, :dim], out_p[:B, :output_dim])
    return result[:B, :output_dim]


def init_params(key, input_dim, dim, output_dim):
    """Deterministic parameter init (PyTorch-style uniform(-1/sqrt(fan_in), ...))."""
    ks = jax.random.split(key, 6)

    def lin(kw, kb, fan_in, fan_out):
        bound = 1.0 / jnp.sqrt(fan_in)
        w = jax.random.uniform(kw, (fan_out, fan_in), jnp.float32, -bound, bound)
        b = jax.random.uniform(kb, (1, fan_out), jnp.float32, -bound, bound)
        return w, b

    wx, bx = lin(ks[0], ks[1], input_dim, dim)
    wy, by = lin(ks[2], ks[3], input_dim, dim)
    wo, bo = lin(ks[4], ks[5], dim, output_dim)
    return wx, bx, wy, by, wo, bo


def _reference(x, y, params, x_gate=True):
    wx, bx, wy, by, wo, bo = params
    hp = jax.lax.Precision.HIGHEST
    out_x = jnp.dot(x, wx.T, precision=hp) + bx
    out_y = jnp.dot(y, wy.T, precision=hp) + by
    if x_gate:
        fused = jax.nn.sigmoid(out_x) * out_y
    else:
        fused = out_x * jax.nn.sigmoid(out_y)
    out = jnp.dot(fused, wo.T, precision=hp) + bo
    return out_x, out_y, out


if __name__ == "__main__":
    key = jax.random.PRNGKey(0)

    # ---- Case 1: module-default-like small shapes, f32 matmul path --------
    batch, input_dim, dim, output_dim = 200, 32, 32, 2
    kx, ky, kp = jax.random.split(key, 3)
    x = jax.random.normal(kx, (batch, input_dim), jnp.float32)
    y = jax.random.normal(ky, (batch, input_dim), jnp.float32)
    params = init_params(kp, input_dim, dim, output_dim)
    r_out_x, r_out_y, r_output = _reference(x, y, params, x_gate=True)

    out_x, out_y, output = gated_fusion(x, y, params, x_gate=True,
                                        matmul_dtype=None)
    jax.block_until_ready((out_x, out_y, output))
    assert out_x.shape == r_out_x.shape and output.shape == r_output.shape
    assert jnp.allclose(out_x, r_out_x, atol=5e-3, rtol=5e-3)
    assert jnp.allclose(out_y, r_out_y, atol=5e-3, rtol=5e-3)
    assert jnp.allclose(output, r_output, atol=5e-3, rtol=5e-3)

    # ---- Case 2: default bf16-MXU path (f32 accumulation) -----------------
    out_x_b, out_y_b, output_b = gated_fusion(x, y, params, x_gate=True)
    jax.block_until_ready((out_x_b, out_y_b, output_b))
    assert jnp.allclose(out_x_b, r_out_x, atol=7.5e-2, rtol=7.5e-2)
    assert jnp.allclose(out_y_b, r_out_y, atol=7.5e-2, rtol=7.5e-2)
    assert jnp.allclose(output_b, r_output, atol=7.5e-2, rtol=7.5e-2)

    # ---- Case 3: output-only variant, gate on y ----------------------------
    out_only = gated_fusion(x, y, params, x_gate=False,
                            return_intermediates=False)
    jax.block_until_ready(out_only)
    r_out_only = _reference(x, y, params, x_gate=False)[2]
    assert jnp.allclose(out_only, r_out_only, atol=7.5e-2, rtol=7.5e-2)

    # ---- Case 4: exercise the hidden-dim reduction axis (d_steps > 1) -----
    b2, in2, d2, o2 = 64, 96, 320, 10
    k2x, k2y, k2p = jax.random.split(jax.random.PRNGKey(1), 3)
    x2 = jax.random.normal(k2x, (b2, in2), jnp.float32)
    y2 = jax.random.normal(k2y, (b2, in2), jnp.float32)
    params2 = init_params(k2p, in2, d2, o2)
    ox2, oy2, oo2 = gated_fusion(x2, y2, params2, x_gate=True,
                                 td=128, matmul_dtype=None)
    jax.block_until_ready((ox2, oy2, oo2))
    r_ox2, r_oy2, r_oo2 = _reference(x2, y2, params2, x_gate=True)
    assert jnp.allclose(ox2, r_ox2, atol=5e-3, rtol=5e-3)
    assert jnp.allclose(oy2, r_oy2, atol=5e-3, rtol=5e-3)
    assert jnp.allclose(oo2, r_oo2, atol=5e-3, rtol=5e-3)

    print("KERNEL_OK")
</pallas_src>

<mosaic_0001>
module attributes {stable_mosaic.version = 11 : i64} {
  func.func @_gated_fusion_kernel(%arg0: i32, %arg1: i32, %arg2: memref<200x128xf32, #tpu.memory_space<vmem>>, %arg3: memref<200x128xf32, #tpu.memory_space<vmem>>, %arg4: memref<128x128xf32, #tpu.memory_space<vmem>>, %arg5: memref<1x128xf32, #tpu.memory_space<vmem>>, %arg6: memref<128x128xf32, #tpu.memory_space<vmem>>, %arg7: memref<1x128xf32, #tpu.memory_space<vmem>>, %arg8: memref<128x128xf32, #tpu.memory_space<vmem>>, %arg9: memref<1x128xf32, #tpu.memory_space<vmem>>, %arg10: memref<200x128xf32, #tpu.memory_space<vmem>>, %arg11: memref<200x128xf32, #tpu.memory_space<vmem>>, %arg12: memref<200x128xf32, #tpu.memory_space<vmem>>, %arg13: memref<200x128xf32, #tpu.memory_space<vmem>>) attributes {dimension_semantics = [#tpu.dimension_semantics<parallel>, #tpu.dimension_semantics<arbitrary>], iteration_bounds = array<i64: 1, 1>, scalar_prefetch = 0 : i64, scratch_operands = 1 : i64, tpu.core_type = #tpu.core_type<tc>, window_params = [{transform_indices = @transform_0, window_bounds = array<i64: 200, 128>}, {transform_indices = @transform_1, window_bounds = array<i64: 200, 128>}, {pipeline_mode = #tpu.pipeline_mode<synchronous>, transform_indices = @transform_2, window_bounds = array<i64: 128, 128>}, {pipeline_mode = #tpu.pipeline_mode<synchronous>, transform_indices = @transform_3, window_bounds = array<i64: 1, 128>}, {pipeline_mode = #tpu.pipeline_mode<synchronous>, transform_indices = @transform_4, window_bounds = array<i64: 128, 128>}, {pipeline_mode = #tpu.pipeline_mode<synchronous>, transform_indices = @transform_5, window_bounds = array<i64: 1, 128>}, {pipeline_mode = #tpu.pipeline_mode<synchronous>, transform_indices = @transform_6, window_bounds = array<i64: 128, 128>}, {pipeline_mode = #tpu.pipeline_mode<synchronous>, transform_indices = @transform_7, window_bounds = array<i64: 1, 128>}, {transform_indices = @transform_8, window_bounds = array<i64: 200, 128>}, {transform_indices = @transform_9, window_bounds = array<i64: 200, 128>}, {transform_indices = @transform_10, window_bounds = array<i64: 200, 128>}]} {
    %c0_i32 = arith.constant 0 : i32
    %0 = arith.cmpi eq, %arg1, %c0_i32 : i32
    %1 = arith.extui %0 : i1 to i32
    %c0_i32_0 = arith.constant 0 : i32
    %2 = arith.cmpi ne, %1, %c0_i32_0 : i32
    scf.if %2 {
      %cst_27 = arith.constant 0.000000e+00 : f32
      %31 = vector.broadcast %cst_27 : f32 to vector<200x128xf32>
      %c0_28 = arith.constant 0 : index
      %c0_29 = arith.constant 0 : index
      %32 = vector.load %arg13[%c0_28, %c0_29] : memref<200x128xf32, #tpu.memory_space<vmem>>, vector<200x128xf32>
      tpu.vector_store %arg13[%c0_28, %c0_29], %31 {strides = array<i32>} : memref<200x128xf32, #tpu.memory_space<vmem>>, vector<200x128xf32>,
    } else {
    }
    %c0 = arith.constant 0 : index
    %c0_1 = arith.constant 0 : index
    %3 = vector.load %arg2[%c0, %c0_1] : memref<200x128xf32, #tpu.memory_space<vmem>>, vector<200x128xf32>
    %c0_2 = arith.constant 0 : index
    %c0_3 = arith.constant 0 : index
    %4 = vector.load %arg3[%c0_2, %c0_3] : memref<200x128xf32, #tpu.memory_space<vmem>>, vector<200x128xf32>
    %c0_4 = arith.constant 0 : index
    %c0_5 = arith.constant 0 : index
    %5 = vector.load %arg4[%c0_4, %c0_5] : memref<128x128xf32, #tpu.memory_space<vmem>>, vector<128x128xf32>
    %cst = arith.constant dense<0.000000e+00> : vector<200x128xf32>
    %6 = tpu.matmul %3, %5, %cst {dimension_numbers = #tpu.dot_dimension_numbers<[1], [0], [0], [1], [0, 0, 1, 1], [], []>} : vector<200x128xf32>, vector<128x128xf32>, vector<200x128xf32> -> vector<200x128xf32>
    %c0_6 = arith.constant 0 : index
    %c0_7 = arith.constant 0 : index
    %7 = vector.load %arg5[%c0_6, %c0_7] : memref<1x128xf32, #tpu.memory_space<vmem>>, vector<1x128xf32>
    %8 = vector.broadcast %7 : vector<1x128xf32> to vector<200x128xf32>
    %9 = arith.addf %6, %8 : vector<200x128xf32>
    %c0_8 = arith.constant 0 : index
    %c0_9 = arith.constant 0 : index
    %10 = vector.load %arg6[%c0_8, %c0_9] : memref<128x128xf32, #tpu.memory_space<vmem>>, vector<128x128xf32>
    %cst_10 = arith.constant dense<0.000000e+00> : vector<200x128xf32>
    %11 = tpu.matmul %4, %10, %cst_10 {dimension_numbers = #tpu.dot_dimension_numbers<[1], [0], [0], [1], [0, 0, 1, 1], [], []>} : vector<200x128xf32>, vector<128x128xf32>, vector<200x128xf32> -> vector<200x128xf32>
    %c0_11 = arith.constant 0 : index
    %c0_12 = arith.constant 0 : index
    %12 = vector.load %arg7[%c0_11, %c0_12] : memref<1x128xf32, #tpu.memory_space<vmem>>, vector<1x128xf32>
    %13 = vector.broadcast %12 : vector<1x128xf32> to vector<200x128xf32>
    %14 = arith.addf %11, %13 : vector<200x128xf32>
    %15 = arith.negf %9 : vector<200x128xf32>
    %16 = math.exp %15 : vector<200x128xf32>
    %cst_13 = arith.constant 1.000000e+00 : f32
    %17 = vector.broadcast %cst_13 : f32 to vector<200x128xf32>
    %18 = arith.addf %17, %16 : vector<200x128xf32>
    %19 = arith.divf %17, %18 : vector<200x128xf32>
    %20 = arith.mulf %19, %14 : vector<200x128xf32>
    %c0_14 = arith.constant 0 : index
    %c0_15 = arith.constant 0 : index
    %21 = vector.load %arg13[%c0_14, %c0_15] : memref<200x128xf32, #tpu.memory_space<vmem>>, vector<200x128xf32>
    %c0_16 = arith.constant 0 : index
    %c0_17 = arith.constant 0 : index
    %22 = vector.load %arg8[%c0_16, %c0_17] : memref<128x128xf32, #tpu.memory_space<vmem>>, vector<128x128xf32>
    %cst_18 = arith.constant dense<0.000000e+00> : vector<200x128xf32>
    %23 = tpu.matmul %20, %22, %cst_18 {dimension_numbers = #tpu.dot_dimension_numbers<[1], [0], [0], [1], [0, 0, 1, 1], [], []>} : vector<200x128xf32>, vector<128x128xf32>, vector<200x128xf32> -> vector<200x128xf32>
    %24 = arith.addf %21, %23 : vector<200x128xf32>
    %c0_19 = arith.constant 0 : index
    %c0_20 = arith.constant 0 : index
    %25 = vector.load %arg13[%c0_19, %c0_20] : memref<200x128xf32, #tpu.memory_space<vmem>>, vector<200x128xf32>
    tpu.vector_store %arg13[%c0_19, %c0_20], %24 {strides = array<i32>} : memref<200x128xf32, #tpu.memory_space<vmem>>, vector<200x128xf32>,
    %c0_21 = arith.constant 0 : index
    %c0_22 = arith.constant 0 : index
    %26 = vector.load %arg10[%c0_21, %c0_22] : memref<200x128xf32, #tpu.memory_space<vmem>>, vector<200x128xf32>
    tpu.vector_store %arg10[%c0_21, %c0_22], %9 {strides = array<i32>} : memref<200x128xf32, #tpu.memory_space<vmem>>, vector<200x128xf32>,
    %c0_23 = arith.constant 0 : index
    %c0_24 = arith.constant 0 : index
    %27 = vector.load %arg11[%c0_23, %c0_24] : memref<200x128xf32, #tpu.memory_space<vmem>>, vector<200x128xf32>
    tpu.vector_store %arg11[%c0_23, %c0_24], %14 {strides = array<i32>} : memref<200x128xf32, #tpu.memory_space<vmem>>, vector<200x128xf32>,
    %c0_i32_25 = arith.constant 0 : i32
    %28 = arith.cmpi eq, %arg1, %c0_i32_25 : i32
    %29 = arith.extui %28 : i1 to i32
    %c0_i32_26 = arith.constant 0 : i32
    %30 = arith.cmpi ne, %29, %c0_i32_26 : i32
    scf.if %30 {
      %c0_27 = arith.constant 0 : index
      %c0_28 = arith.constant 0 : index
      %31 = vector.load %arg13[%c0_27, %c0_28] : memref<200x128xf32, #tpu.memory_space<vmem>>, vector<200x128xf32>
      %c0_29 = arith.constant 0 : index
      %c0_30 = arith.constant 0 : index
      %32 = vector.load %arg9[%c0_29, %c0_30] : memref<1x128xf32, #tpu.memory_space<vmem>>, vector<1x128xf32>
      %33 = vector.broadcast %32 : vector<1x128xf32> to vector<200x128xf32>
      %34 = arith.addf %31, %33 : vector<200x128xf32>
      %c0_31 = arith.constant 0 : index
      %c0_32 = arith.constant 0 : index
      %35 = vector.load %arg12[%c0_31, %c0_32] : memref<200x128xf32, #tpu.memory_space<vmem>>, vector<200x128xf32>
      tpu.vector_store %arg12[%c0_31, %c0_32], %34 {strides = array<i32>} : memref<200x128xf32, #tpu.memory_space<vmem>>, vector<200x128xf32>,
    } else {
    }
    return
  }
  func.func @transform_0(%arg0: i32, %arg1: i32) -> (i32, i32) {
    %c0_i32 = arith.constant 0 : i32
    %c0_i32_0 = arith.constant 0 : i32
    return %arg0, %c0_i32 : i32, i32
  }
  func.func @transform_1(%arg0: i32, %arg1: i32) -> (i32, i32) {
    %c0_i32 = arith.constant 0 : i32
    %c0_i32_0 = arith.constant 0 : i32
    return %arg0, %c0_i32 : i32, i32
  }
  func.func @transform_2(%arg0: i32, %arg1: i32) -> (i32, i32) {
    %c0_i32 = arith.constant 0 : i32
    %c0_i32_0 = arith.constant 0 : i32
    return %c0_i32, %arg1 : i32, i32
  }
  func.func @transform_3(%arg0: i32, %arg1: i32) -> (i32, i32) {
    %c0_i32 = arith.constant 0 : i32
    %c0_i32_0 = arith.constant 0 : i32
    return %c0_i32, %arg1 : i32, i32
  }
  func.func @transform_4(%arg0: i32, %arg1: i32) -> (i32, i32) {
    %c0_i32 = arith.constant 0 : i32
    %c0_i32_0 = arith.constant 0 : i32
    return %c0_i32, %arg1 : i32, i32
  }
  func.func @transform_5(%arg0: i32, %arg1: i32) -> (i32, i32) {
    %c0_i32 = arith.constant 0 : i32
    %c0_i32_0 = arith.constant 0 : i32
    return %c0_i32, %arg1 : i32, i32
  }
  func.func @transform_6(%arg0: i32, %arg1: i32) -> (i32, i32) {
    %c0_i32 = arith.constant 0 : i32
    %c0_i32_0 = arith.constant 0 : i32
    return %arg1, %c0_i32 : i32, i32
  }
  func.func @transform_7(%arg0: i32, %arg1: i32) -> (i32, i32) {
    %c0_i32 = arith.constant 0 : i32
    %c0_i32_0 = arith.constant 0 : i32
    %c0_i32_1 = arith.constant 0 : i32
    return %c0_i32, %c0_i32_0 : i32, i32
  }
  func.func @transform_8(%arg0: i32, %arg1: i32) -> (i32, i32) {
    %c0_i32 = arith.constant 0 : i32
    return %arg0, %arg1 : i32, i32
  }
  func.func @transform_9(%arg0: i32, %arg1: i32) -> (i32, i32) {
    %c0_i32 = arith.constant 0 : i32
    return %arg0, %arg1 : i32, i32
  }
  func.func @transform_10(%arg0: i32, %arg1: i32) -> (i32, i32) {
    %c0_i32 = arith.constant 0 : i32
    %c0_i32_0 = arith.constant 0 : i32
    return %arg0, %c0_i32 : i32, i32
  }
}

module attributes {stable_mosaic.version = 11 : i64} {
  func.func @_gated_fusion_kernel(%arg0: i32, %arg1: i32, %arg2: memref<200x128xf32, #tpu.memory_space<vmem>>, %arg3: memref<200x128xf32, #tpu.memory_space<vmem>>, %arg4: memref<128x128xf32, #tpu.memory_space<vmem>>, %arg5: memref<1x128xf32, #tpu.memory_space<vmem>>, %arg6: memref<128x128xf32, #tpu.memory_space<vmem>>, %arg7: memref<1x128xf32, #tpu.memory_space<vmem>>, %arg8: memref<128x128xf32, #tpu.memory_space<vmem>>, %arg9: memref<1x128xf32, #tpu.memory_space<vmem>>, %arg10: memref<200x128xf32, #tpu.memory_space<vmem>>, %arg11: memref<200x128xf32, #tpu.memory_space<vmem>>, %arg12: memref<200x128xf32, #tpu.memory_space<vmem>>, %arg13: memref<200x128xf32, #tpu.memory_space<vmem>>) attributes {dimension_semantics = [#tpu.dimension_semantics<parallel>, #tpu.dimension_semantics<arbitrary>], iteration_bounds = array<i64: 1, 1>, scalar_prefetch = 0 : i64, scratch_operands = 1 : i64, tpu.core_type = #tpu.core_type<tc>, window_params = [{transform_indices = @transform_0, window_bounds = array<i64: 200, 128>}, {transform_indices = @transform_1, window_bounds = array<i64: 200, 128>}, {transform_indices = @transform_2, window_bounds = array<i64: 128, 128>}, {transform_indices = @transform_3, window_bounds = array<i64: 1, 128>}, {transform_indices = @transform_4, window_bounds = array<i64: 128, 128>}, {transform_indices = @transform_5, window_bounds = array<i64: 1, 128>}, {transform_indices = @transform_6, window_bounds = array<i64: 128, 128>}, {pipeline_mode = #tpu.pipeline_mode<synchronous>, transform_indices = @transform_7, window_bounds = array<i64: 1, 128>}, {transform_indices = @transform_8, window_bounds = array<i64: 200, 128>}, {transform_indices = @transform_9, window_bounds = array<i64: 200, 128>}, {transform_indices = @transform_10, window_bounds = array<i64: 200, 128>}]} {
    %c0_i32 = arith.constant 0 : i32
    %0 = arith.cmpi eq, %arg1, %c0_i32 : i32
    %1 = arith.extui %0 : i1 to i32
    %c0_i32_0 = arith.constant 0 : i32
    %2 = arith.cmpi ne, %1, %c0_i32_0 : i32
    scf.if %2 {
      %cst_27 = arith.constant 0.000000e+00 : f32
      %31 = vector.broadcast %cst_27 : f32 to vector<200x128xf32>
      %c0_28 = arith.constant 0 : index
      %c0_29 = arith.constant 0 : index
      %32 = vector.load %arg13[%c0_28, %c0_29] : memref<200x128xf32, #tpu.memory_space<vmem>>, vector<200x128xf32>
      tpu.vector_store %arg13[%c0_28, %c0_29], %31 {strides = array<i32>} : memref<200x128xf32, #tpu.memory_space<vmem>>, vector<200x128xf32>,
    } else {
    }
    %c0 = arith.constant 0 : index
    %c0_1 = arith.constant 0 : index
    %3 = vector.load %arg2[%c0, %c0_1] : memref<200x128xf32, #tpu.memory_space<vmem>>, vector<200x128xf32>
    %c0_2 = arith.constant 0 : index
    %c0_3 = arith.constant 0 : index
    %4 = vector.load %arg3[%c0_2, %c0_3] : memref<200x128xf32, #tpu.memory_space<vmem>>, vector<200x128xf32>
    %c0_4 = arith.constant 0 : index
    %c0_5 = arith.constant 0 : index
    %5 = vector.load %arg4[%c0_4, %c0_5] : memref<128x128xf32, #tpu.memory_space<vmem>>, vector<128x128xf32>
    %cst = arith.constant dense<0.000000e+00> : vector<200x128xf32>
    %6 = tpu.matmul %3, %5, %cst {dimension_numbers = #tpu.dot_dimension_numbers<[1], [0], [0], [1], [0, 0, 1, 1], [], []>} : vector<200x128xf32>, vector<128x128xf32>, vector<200x128xf32> -> vector<200x128xf32>
    %c0_6 = arith.constant 0 : index
    %c0_7 = arith.constant 0 : index
    %7 = vector.load %arg5[%c0_6, %c0_7] : memref<1x128xf32, #tpu.memory_space<vmem>>, vector<1x128xf32>
    %8 = vector.broadcast %7 : vector<1x128xf32> to vector<200x128xf32>
    %9 = arith.addf %6, %8 : vector<200x128xf32>
    %c0_8 = arith.constant 0 : index
    %c0_9 = arith.constant 0 : index
    %10 = vector.load %arg6[%c0_8, %c0_9] : memref<128x128xf32, #tpu.memory_space<vmem>>, vector<128x128xf32>
    %cst_10 = arith.constant dense<0.000000e+00> : vector<200x128xf32>
    %11 = tpu.matmul %4, %10, %cst_10 {dimension_numbers = #tpu.dot_dimension_numbers<[1], [0], [0], [1], [0, 0, 1, 1], [], []>} : vector<200x128xf32>, vector<128x128xf32>, vector<200x128xf32> -> vector<200x128xf32>
    %c0_11 = arith.constant 0 : index
    %c0_12 = arith.constant 0 : index
    %12 = vector.load %arg7[%c0_11, %c0_12] : memref<1x128xf32, #tpu.memory_space<vmem>>, vector<1x128xf32>
    %13 = vector.broadcast %12 : vector<1x128xf32> to vector<200x128xf32>
    %14 = arith.addf %11, %13 : vector<200x128xf32>
    %15 = arith.negf %9 : vector<200x128xf32>
    %16 = math.exp %15 : vector<200x128xf32>
    %cst_13 = arith.constant 1.000000e+00 : f32
    %17 = vector.broadcast %cst_13 : f32 to vector<200x128xf32>
    %18 = arith.addf %17, %16 : vector<200x128xf32>
    %19 = arith.divf %17, %18 : vector<200x128xf32>
    %20 = arith.mulf %19, %14 : vector<200x128xf32>
    %c0_14 = arith.constant 0 : index
    %c0_15 = arith.constant 0 : index
    %21 = vector.load %arg13[%c0_14, %c0_15] : memref<200x128xf32, #tpu.memory_space<vmem>>, vector<200x128xf32>
    %c0_16 = arith.constant 0 : index
    %c0_17 = arith.constant 0 : index
    %22 = vector.load %arg8[%c0_16, %c0_17] : memref<128x128xf32, #tpu.memory_space<vmem>>, vector<128x128xf32>
    %cst_18 = arith.constant dense<0.000000e+00> : vector<200x128xf32>
    %23 = tpu.matmul %20, %22, %cst_18 {dimension_numbers = #tpu.dot_dimension_numbers<[1], [0], [0], [1], [0, 0, 1, 1], [], []>} : vector<200x128xf32>, vector<128x128xf32>, vector<200x128xf32> -> vector<200x128xf32>
    %24 = arith.addf %21, %23 : vector<200x128xf32>
    %c0_19 = arith.constant 0 : index
    %c0_20 = arith.constant 0 : index
    %25 = vector.load %arg13[%c0_19, %c0_20] : memref<200x128xf32, #tpu.memory_space<vmem>>, vector<200x128xf32>
    tpu.vector_store %arg13[%c0_19, %c0_20], %24 {strides = array<i32>} : memref<200x128xf32, #tpu.memory_space<vmem>>, vector<200x128xf32>,
    %c0_21 = arith.constant 0 : index
    %c0_22 = arith.constant 0 : index
    %26 = vector.load %arg10[%c0_21, %c0_22] : memref<200x128xf32, #tpu.memory_space<vmem>>, vector<200x128xf32>
    tpu.vector_store %arg10[%c0_21, %c0_22], %9 {strides = array<i32>} : memref<200x128xf32, #tpu.memory_space<vmem>>, vector<200x128xf32>,
    %c0_23 = arith.constant 0 : index
    %c0_24 = arith.constant 0 : index
    %27 = vector.load %arg11[%c0_23, %c0_24] : memref<200x128xf32, #tpu.memory_space<vmem>>, vector<200x128xf32>
    tpu.vector_store %arg11[%c0_23, %c0_24], %14 {strides = array<i32>} : memref<200x128xf32, #tpu.memory_space<vmem>>, vector<200x128xf32>,
    %c0_i32_25 = arith.constant 0 : i32
    %28 = arith.cmpi eq, %arg1, %c0_i32_25 : i32
    %29 = arith.extui %28 : i1 to i32
    %c0_i32_26 = arith.constant 0 : i32
    %30 = arith.cmpi ne, %29, %c0_i32_26 : i32
    scf.if %30 {
      %c0_27 = arith.constant 0 : index
      %c0_28 = arith.constant 0 : index
      %31 = vector.load %arg13[%c0_27, %c0_28] : memref<200x128xf32, #tpu.memory_space<vmem>>, vector<200x128xf32>
      %c0_29 = arith.constant 0 : index
      %c0_30 = arith.constant 0 : index
      %32 = vector.load %arg9[%c0_29, %c0_30] : memref<1x128xf32, #tpu.memory_space<vmem>>, vector<1x128xf32>
      %33 = vector.broadcast %32 : vector<1x128xf32> to vector<200x128xf32>
      %34 = arith.addf %31, %33 : vector<200x128xf32>
      %c0_31 = arith.constant 0 : index
      %c0_32 = arith.constant 0 : index
      %35 = vector.load %arg12[%c0_31, %c0_32] : memref<200x128xf32, #tpu.memory_space<vmem>>, vector<200x128xf32>
      tpu.vector_store %arg12[%c0_31, %c0_32], %34 {strides = array<i32>} : memref<200x128xf32, #tpu.memory_space<vmem>>, vector<200x128xf32>,
    } else {
    }
    return
  }
  func.func @transform_0(%arg0: i32, %arg1: i32) -> (i32, i32) {
    %c0_i32 = arith.constant 0 : i32
    %c0_i32_0 = arith.constant 0 : i32
    return %arg0, %c0_i32 : i32, i32
  }
  func.func @transform_1(%arg0: i32, %arg1: i32) -> (i32, i32) {
    %c0_i32 = arith.constant 0 : i32
    %c0_i32_0 = arith.constant 0 : i32
    return %arg0, %c0_i32 : i32, i32
  }
  func.func @transform_2(%arg0: i32, %arg1: i32) -> (i32, i32) {
    %c0_i32 = arith.constant 0 : i32
    %c0_i32_0 = arith.constant 0 : i32
    return %c0_i32, %arg1 : i32, i32
  }
  func.func @transform_3(%arg0: i32, %arg1: i32) -> (i32, i32) {
    %c0_i32 = arith.constant 0 : i32
    %c0_i32_0 = arith.constant 0 : i32
    return %c0_i32, %arg1 : i32, i32
  }
  func.func @transform_4(%arg0: i32, %arg1: i32) -> (i32, i32) {
    %c0_i32 = arith.constant 0 : i32
    %c0_i32_0 = arith.constant 0 : i32
    return %c0_i32, %arg1 : i32, i32
  }
  func.func @transform_5(%arg0: i32, %arg1: i32) -> (i32, i32) {
    %c0_i32 = arith.constant 0 : i32
    %c0_i32_0 = arith.constant 0 : i32
    return %c0_i32, %arg1 : i32, i32
  }
  func.func @transform_6(%arg0: i32, %arg1: i32) -> (i32, i32) {
    %c0_i32 = arith.constant 0 : i32
    %c0_i32_0 = arith.constant 0 : i32
    return %arg1, %c0_i32 : i32, i32
  }
  func.func @transform_7(%arg0: i32, %arg1: i32) -> (i32, i32) {
    %c0_i32 = arith.constant 0 : i32
    %c0_i32_0 = arith.constant 0 : i32
    %c0_i32_1 = arith.constant 0 : i32
    return %c0_i32, %c0_i32_0 : i32, i32
  }
  func.func @transform_8(%arg0: i32, %arg1: i32) -> (i32, i32) {
    %c0_i32 = arith.constant 0 : i32
    return %arg0, %arg1 : i32, i32
  }
  func.func @transform_9(%arg0: i32, %arg1: i32) -> (i32, i32) {
    %c0_i32 = arith.constant 0 : i32
    return %arg0, %arg1 : i32, i32
  }
  func.func @transform_10(%arg0: i32, %arg1: i32) -> (i32, i32) {
    %c0_i32 = arith.constant 0 : i32
    %c0_i32_0 = arith.constant 0 : i32
    return %arg0, %c0_i32 : i32, i32
  }
}

</mosaic_0001>

<llo_original>
// kernel: tpu_custom_call.1
$region0: #{tpu_custom_call.1}
  #allocation0 [shape = 'u32[]', space=smem, size = 0x4, offset = 0x4, fixed_abs, tag = 'smem constant byte address 0x4 - core index']
  #allocation1 [shape = 'u32[144,128]{1,0:T(1,128)}', space=vmem, size = 0x12000, scoped, tag = 'internal scratch']
  #allocation2 [shape = 'f32[200,128]{1,0:T(8,128)}', space=vmem, size = 0x19000, scoped, tag = 'scratch operand']
  %s0 = inlined_call_operand.hbm [shape: f32[200,128], index: 0, kind: input, shape index: {}]
  %s1 = inlined_call_operand.hbm [shape: f32[200,128], index: 1, kind: input, shape index: {}]
  %s2 = inlined_call_operand.hbm [shape: f32[128,128], index: 2, kind: input, shape index: {}]
  %s3 = inlined_call_operand.vmem [shape: f32[1,128], index: 3, kind: input, shape index: {}]
  %s4 = inlined_call_operand.hbm [shape: f32[128,128], index: 4, kind: input, shape index: {}]
  %s5 = inlined_call_operand.vmem [shape: f32[1,128], index: 5, kind: input, shape index: {}]
  %s6 = inlined_call_operand.hbm [shape: f32[128,128], index: 6, kind: input, shape index: {}]
  %s7 = inlined_call_operand.vmem [shape: f32[1,128], index: 7, kind: input, shape index: {}]
  %s8 = inlined_call_operand.hbm [shape: f32[200,128], index: 8, kind: output, shape index: {0}]
  %s9 = inlined_call_operand.hbm [shape: f32[200,128], index: 9, kind: output, shape index: {1}]
  %s10 = inlined_call_operand.hbm [shape: f32[200,128], index: 10, kind: output, shape index: {2}]
  %11 = xla_tuple %s8, %s9, %s10
  %s12 = sld [smem:[#allocation0]]
  $region86: #{tpu_custom_call.1} parent=0
    _
  %s14 = ssub.s32 1, %s12
  %s15 = scalar_select 0, %s14, %s12
  $region1: #{tpu_custom_call.1} parent=0
    #allocation3 [shape = 'u8[102400]{0}', space=vmem, size = 0x19000, scoped, tag = 'input window, operand 0, single buffered']
    #allocation4 [shape = 's32[1]{0}', space=sflag, size = 0x4, scoped, tag = 'scoped memory for tpu_custom_call.1']
    #allocation5 [shape = 's32[1]{0}', space=sflag, size = 0x4, scoped, tag = 'scoped memory for tpu_custom_call.1']
    #allocation6 [shape = 'u8[102400]{0}', space=vmem, size = 0x19000, scoped, tag = 'input window, operand 1, single buffered']
    #allocation7 [shape = 's32[1]{0}', space=sflag, size = 0x4, scoped, tag = 'scoped memory for tpu_custom_call.1']
    #allocation8 [shape = 'u8[65536]{0}', space=vmem, size = 0x10000, scoped, tag = 'input window, operand 2, single buffered']
    #allocation9 [shape = 'u8[65536]{0}', space=vmem, size = 0x10000, scoped, tag = 'input window, operand 4, single buffered']
    #allocation10 [shape = 's32[1]{0}', space=sflag, size = 0x4, scoped, tag = 'scoped memory for tpu_custom_call.1']
    #allocation11 [shape = 'u8[65536]{0}', space=vmem, size = 0x10000, scoped, tag = 'input window, operand 6, single buffered']
    #allocation12 [shape = 'u8[102400]{0}', space=vmem, size = 0x19000, scoped, tag = 'output window, operand 0, single buffered']
    #allocation13 [shape = 'u8[102400]{0}', space=vmem, size = 0x19000, scoped, tag = 'output window, operand 1, single buffered']
    #allocation14 [shape = 's32[1]{0}', space=sflag, size = 0x4, scoped, tag = 'scoped memory for tpu_custom_call.1']
    #allocation15 [shape = 'u8[102400]{0}', space=vmem, size = 0x19000, scoped, tag = 'output window, operand 2, single buffered']
    %16 = vsyncpa [#allocation4], 0
    %17 = vsyncpa [#allocation7], 0
    %18 = vsyncpa [#allocation10], 0
    %19 = vsyncpa [#allocation5], 0
    %20 = vsyncpa [#allocation14], 0
    // Predicated region
    $region2: #{tpu_custom_call.1} parent=1 // pred_check
      _
    $region3: #{tpu_custom_call.1} parent=1 // pred_check_branch
      %22 = sbr.rel (0) target = $region5
    $region4: #{tpu_custom_call.1} parent=1 // pred_region
      %s24 = ssub.s32 3200, 3200
      %25 = vsyncadd [#allocation4], %s24
      %s26 = sshll.u32 [#allocation3], 4
      %s27 = int_to_ptr.vmem [resolvable:$true] %s26
      %32 = dma.hbm_to_vmem [thread:$0]  %s0, 3200, %s27, [#allocation4], 128, 128, 8
    $region5: #{tpu_custom_call.1} parent=1 // pred_fallthru
      _
    // Predicated region
    $region6: #{tpu_custom_call.1} parent=1 // pred_check
      _
    $region7: #{tpu_custom_call.1} parent=1 // pred_check_branch
      %34 = sbr.rel (0) target = $region9
    $region8: #{tpu_custom_call.1} parent=1 // pred_region
      %s36 = ssub.s32 3200, 3200
      %37 = vsyncadd [#allocation7], %s36
      %s38 = sshll.u32 [#allocation6], 4
      %s39 = int_to_ptr.vmem [resolvable:$true] %s38
      %44 = dma.hbm_to_vmem [thread:$0]  %s1, 3200, %s39, [#allocation7], 128, 128, 8
    $region9: #{tpu_custom_call.1} parent=1 // pred_fallthru
      _
    // Predicated region
    $region10: #{tpu_custom_call.1} parent=1 // pred_check
      _
    $region11: #{tpu_custom_call.1} parent=1 // pred_check_branch
      %46 = sbr.rel (0) target = $region13
    $region12: #{tpu_custom_call.1} parent=1 // pred_region
      %s48 = ssub.s32 2048, 2048
      %49 = vsyncadd [#allocation7], %s48
      %s50 = sshll.u32 [#allocation8], 4
      %s51 = int_to_ptr.vmem [resolvable:$true] %s50
      %56 = dma.hbm_to_vmem [thread:$0]  %s2, 2048, %s51, [#allocation7], 128, 128, 8
    $region13: #{tpu_custom_call.1} parent=1 // pred_fallthru
      _
    // Predicated region
    $region14: #{tpu_custom_call.1} parent=1 // pred_check
      _
    $region15: #{tpu_custom_call.1} parent=1 // pred_check_branch
      %58 = sbr.rel (0) target = $region17
    $region16: #{tpu_custom_call.1} parent=1 // pred_region
      _
    $region17: #{tpu_custom_call.1} parent=1 // pred_fallthru
      _
    // Predicated region
    $region18: #{tpu_custom_call.1} parent=1 // pred_check
      _
    $region19: #{tpu_custom_call.1} parent=1 // pred_check_branch
      %60 = sbr.rel (0) target = $region21
    $region20: #{tpu_custom_call.1} parent=1 // pred_region
      %s62 = ssub.s32 2048, 2048
      %63 = vsyncadd [#allocation10], %s62
      %s64 = sshll.u32 [#allocation9], 4
      %s65 = int_to_ptr.vmem [resolvable:$true] %s64
      %70 = dma.hbm_to_vmem [thread:$0]  %s4, 2048, %s65, [#allocation10], 128, 128, 8
    $region21: #{tpu_custom_call.1} parent=1 // pred_fallthru
      _
    // Predicated region
    $region22: #{tpu_custom_call.1} parent=1 // pred_check
      _
    $region23: #{tpu_custom_call.1} parent=1 // pred_check_branch
      %72 = sbr.rel (0) target = $region25
    $region24: #{tpu_custom_call.1} parent=1 // pred_region
      _
    $region25: #{tpu_custom_call.1} parent=1 // pred_fallthru
      _
    // Predicated region
    $region26: #{tpu_custom_call.1} parent=1 // pred_check
      _
    $region27: #{tpu_custom_call.1} parent=1 // pred_check_branch
      %74 = sbr.rel (0) target = $region29
    $region28: #{tpu_custom_call.1} parent=1 // pred_region
      %s76 = ssub.s32 2048, 2048
      %77 = vsyncadd [#allocation10], %s76
      %s78 = sshll.u32 [#allocation11], 4
      %s79 = int_to_ptr.vmem [resolvable:$true] %s78
      %84 = dma.hbm_to_vmem [thread:$0]  %s6, 2048, %s79, [#allocation10], 128, 128, 8
    $region29: #{tpu_custom_call.1} parent=1 // pred_fallthru
      _
    // Predicated region
    $region30: #{tpu_custom_call.1} parent=1 // pred_check
      _
    $region31: #{tpu_custom_call.1} parent=1 // pred_check_branch
      %86 = sbr.rel (0) target = $region33
    $region32: #{tpu_custom_call.1} parent=1 // pred_region
      _
    $region33: #{tpu_custom_call.1} parent=1 // pred_fallthru
      _
    // Predicated region
    $region34: #{tpu_custom_call.1} parent=1 // pred_check
      _
    $region35: #{tpu_custom_call.1} parent=1 // pred_check_branch
      %88 = sbr.rel (0) target = $region37
    $region36: #{tpu_custom_call.1} parent=1 // pred_region
      %89 = dma.done [#allocation4], 3200
    $region37: #{tpu_custom_call.1} parent=1 // pred_fallthru
      _
    // Predicated region
    $region38: #{tpu_custom_call.1} parent=1 // pred_check
      _
    $region39: #{tpu_custom_call.1} parent=1 // pred_check_branch
      %91 = sbr.rel (0) target = $region41
    $region40: #{tpu_custom_call.1} parent=1 // pred_region
      %92 = dma.done [#allocation7], 3200
    $region41: #{tpu_custom_call.1} parent=1 // pred_fallthru
      _
    // Predicated region
    $region42: #{tpu_custom_call.1} parent=1 // pred_check
      _
    $region43: #{tpu_custom_call.1} parent=1 // pred_check_branch
      %94 = sbr.rel (0) target = $region45
    $region44: #{tpu_custom_call.1} parent=1 // pred_region
      %95 = dma.done [#allocation7], 2048
    $region45: #{tpu_custom_call.1} parent=1 // pred_fallthru
      _
    // Predicated region
    $region46: #{tpu_custom_call.1} parent=1 // pred_check
      _
    $region47: #{tpu_custom_call.1} parent=1 // pred_check_branch
      %97 = sbr.rel (0) target = $region49
    $region48: #{tpu_custom_call.1} parent=1 // pred_region
      %98 = dma.done [#allocation10], 2048
    $region49: #{tpu_custom_call.1} parent=1 // pred_fallthru
      _
    // Predicated region
    $region50: #{tpu_custom_call.1} parent=1 // pred_check
      _
    $region51: #{tpu_custom_call.1} parent=1 // pred_check_branch
      %100 = sbr.rel (0) target = $region53
    $region52: #{tpu_custom_call.1} parent=1 // pred_region
      %101 = dma.done [#allocation10], 2048
    $region53: #{tpu_custom_call.1} parent=1 // pred_fallthru
      _
    %p102 = scmp.eq.s32.totalorder 0, 0
    // Predicated region
    $region54: #{tpu_custom_call.1} parent=1 // pred_check
      %p103 = pneg %p102
    $region55: #{tpu_custom_call.1} parent=1 // pred_check_branch
      %105 = sbr.rel (%p103) target = $region57
    $region56: #{tpu_custom_call.1} parent=1 // pred_region
      %106 = vst [vmem:[#allocation2] sm:$0xff] 0.0
      %107 = vst [vmem:[#allocation2 + $0x8] sm:$0xff] 0.0
      %108 = vst [vmem:[#allocation2 + $0x10] sm:$0xff] 0.0
      %109 = vst [vmem:[#allocation2 + $0x18] sm:$0xff] 0.0
      %110 = vst [vmem:[#allocation2 + $0x20] sm:$0xff] 0.0
      %111 = vst [vmem:[#allocation2 + $0x28] sm:$0xff] 0.0
      %112 = vst [vmem:[#allocation2 + $0x30] sm:$0xff] 0.0
      %113 = vst [vmem:[#allocation2 + $0x38] sm:$0xff] 0.0
      %114 = vst [vmem:[#allocation2 + $0x40] sm:$0xff] 0.0
      %115 = vst [vmem:[#allocation2 + $0x48] sm:$0xff] 0.0
      %116 = vst [vmem:[#allocation2 + $0x50] sm:$0xff] 0.0
      %117 = vst [vmem:[#allocation2 + $0x58] sm:$0xff] 0.0
      %118 = vst [vmem:[#allocation2 + $0x60] sm:$0xff] 0.0
      %119 = vst [vmem:[#allocation2 + $0x68] sm:$0xff] 0.0
      %120 = vst [vmem:[#allocation2 + $0x70] sm:$0xff] 0.0
      %121 = vst [vmem:[#allocation2 + $0x78] sm:$0xff] 0.0
      %122 = vst [vmem:[#allocation2 + $0x80] sm:$0xff] 0.0
      %123 = vst [vmem:[#allocation2 + $0x88] sm:$0xff] 0.0
      %124 = vst [vmem:[#allocation2 + $0x90] sm:$0xff] 0.0
      %125 = vst [vmem:[#allocation2 + $0x98] sm:$0xff] 0.0
      %126 = vst [vmem:[#allocation2 + $0xa0] sm:$0xff] 0.0
      %127 = vst [vmem:[#allocation2 + $0xa8] sm:$0xff] 0.0
      %128 = vst [vmem:[#allocation2 + $0xb0] sm:$0xff] 0.0
      %129 = vst [vmem:[#allocation2 + $0xb8] sm:$0xff] 0.0
      %130 = vst [vmem:[#allocation2 + $0xc0] sm:$0xff] 0.0
    $region57: #{tpu_custom_call.1} parent=1 // pred_fallthru
      _
    %v131 = vld [vmem:[#allocation3] sm:$0xff]
    %v132 = vld [vmem:[#allocation3 + $0x8] sm:$0xff]
    %v133 = vld [vmem:[#allocation3 + $0x10] sm:$0xff]
    %v134 = vld [vmem:[#allocation3 + $0x18] sm:$0xff]
    %v135 = vld [vmem:[#allocation3 + $0x20] sm:$0xff]
    %v136 = vld [vmem:[#allocation3 + $0x28] sm:$0xff]
    %v137 = vld [vmem:[#allocation3 + $0x30] sm:$0xff]
    %v138 = vld [vmem:[#allocation3 + $0x38] sm:$0xff]
    %v139 = vld [vmem:[#allocation3 + $0x40] sm:$0xff]
    %v140 = vld [vmem:[#allocation3 + $0x48] sm:$0xff]
    %v141 = vld [vmem:[#allocation3 + $0x50] sm:$0xff]
    %v142 = vld [vmem:[#allocation3 + $0x58] sm:$0xff]
    %v143 = vld [vmem:[#allocation3 + $0x60] sm:$0xff]
    %v144 = vld [vmem:[#allocation3 + $0x68] sm:$0xff]
    %v145 = vld [vmem:[#allocation3 + $0x70] sm:$0xff]
    %v146 = vld [vmem:[#allocation3 + $0x78] sm:$0xff]
    %v147 = vld [vmem:[#allocation3 + $0x80] sm:$0xff]
    %v148 = vld [vmem:[#allocation3 + $0x88] sm:$0xff]
    %v149 = vld [vmem:[#allocation3 + $0x90] sm:$0xff]
    %v150 = vld [vmem:[#allocation3 + $0x98] sm:$0xff]
    %v151 = vld [vmem:[#allocation3 + $0xa0] sm:$0xff]
    %v152 = vld [vmem:[#allocation3 + $0xa8] sm:$0xff]
    %v153 = vld [vmem:[#allocation3 + $0xb0] sm:$0xff]
    %v154 = vld [vmem:[#allocation3 + $0xb8] sm:$0xff]
    %v155 = vld [vmem:[#allocation3 + $0xc0] sm:$0xff]
    %v156 = vld [vmem:[#allocation6] sm:$0xff]
    %v157 = vld [vmem:[#allocation6 + $0x8] sm:$0xff]
    %v158 = vld [vmem:[#allocation6 + $0x10] sm:$0xff]
    %v159 = vld [vmem:[#allocation6 + $0x18] sm:$0xff]
    %v160 = vld [vmem:[#allocation6 + $0x20] sm:$0xff]
    %v161 = vld [vmem:[#allocation6 + $0x28] sm:$0xff]
    %v162 = vld [vmem:[#allocation6 + $0x30] sm:$0xff]
    %v163 = vld [vmem:[#allocation6 + $0x38] sm:$0xff]
    %v164 = vld [vmem:[#allocation6 + $0x40] sm:$0xff]
    %v165 = vld [vmem:[#allocation6 + $0x48] sm:$0xff]
    %v166 = vld [vmem:[#allocation6 + $0x50] sm:$0xff]
    %v167 = vld [vmem:[#allocation6 + $0x58] sm:$0xff]
    %v168 = vld [vmem:[#allocation6 + $0x60] sm:$0xff]
    %v169 = vld [vmem:[#allocation6 + $0x68] sm:$0xff]
    %v170 = vld [vmem:[#allocation6 + $0x70] sm:$0xff]
    %v171 = vld [vmem:[#allocation6 + $0x78] sm:$0xff]
    %v172 = vld [vmem:[#allocation6 + $0x80] sm:$0xff]
    %v173 = vld [vmem:[#allocation6 + $0x88] sm:$0xff]
    %v174 = vld [vmem:[#allocation6 + $0x90] sm:$0xff]
    %v175 = vld [vmem:[#allocation6 + $0x98] sm:$0xff]
    %v176 = vld [vmem:[#allocation6 + $0xa0] sm:$0xff]
    %v177 = vld [vmem:[#allocation6 + $0xa8] sm:$0xff]
    %v178 = vld [vmem:[#allocation6 + $0xb0] sm:$0xff]
    %v179 = vld [vmem:[#allocation6 + $0xb8] sm:$0xff]
    %v180 = vld [vmem:[#allocation6 + $0xc0] sm:$0xff]
    %v181 = vld [vmem:[#allocation8] sm:$0xff]
    %v182 = vld [vmem:[#allocation8 + $0x8] sm:$0xff]
    %v183 = vld [vmem:[#allocation8 + $0x10] sm:$0xff]
    %v184 = vld [vmem:[#allocation8 + $0x18] sm:$0xff]
    %v185 = vld [vmem:[#allocation8 + $0x20] sm:$0xff]
    %v186 = vld [vmem:[#allocation8 + $0x28] sm:$0xff]
    %v187 = vld [vmem:[#allocation8 + $0x30] sm:$0xff]
    %v188 = vld [vmem:[#allocation8 + $0x38] sm:$0xff]
    %v189 = vld [vmem:[#allocation8 + $0x40] sm:$0xff]
    %v190 = vld [vmem:[#allocation8 + $0x48] sm:$0xff]
    %v191 = vld [vmem:[#allocation8 + $0x50] sm:$0xff]
    %v192 = vld [vmem:[#allocation8 + $0x58] sm:$0xff]
    %v193 = vld [vmem:[#allocation8 + $0x60] sm:$0xff]
    %v194 = vld [vmem:[#allocation8 + $0x68] sm:$0xff]
    %v195 = vld [vmem:[#allocation8 + $0x70] sm:$0xff]
    %v196 = vld [vmem:[#allocation8 + $0x78] sm:$0xff]
    %v197 = vld [vmem:[%s3] sm:$0x1]
    %v199 = vlaneseq
    %v200 = vshrl.u32 %v199, 7
    %v201 = vsub.s32 0, %v200
    %v202 = vrot.slane %v197, %v201
    %204 = vmatprep.subr.mxu0 0.0
    %205 = vmatpush1.msra.mxu0 %v181
    %206 = vmatprep.subr.mxu0 0.0
    %207 = vmatpush1.msra.mxu0 %v182
    %208 = vmatprep.subr.mxu0 0.0
    %209 = vmatpush1.msra.mxu0 %v183
    %210 = vmatprep.subr.mxu0 0.0
    %211 = vmatpush1.msra.mxu0 %v184
    %212 = vmatprep.subr.mxu0 0.0
    %213 = vmatpush1.msra.mxu0 %v185
    %214 = vmatprep.subr.mxu0 0.0
    %215 = vmatpush1.msra.mxu0 %v186
    %216 = vmatprep.subr.mxu0 0.0
    %217 = vmatpush1.msra.mxu0 %v187
    %218 = vmatprep.subr.mxu0 0.0
    %219 = vmatpush1.msra.mxu0 %v188
    %220 = vmatprep.subr.mxu0 0.0
    %221 = vmatpush1.msra.mxu0 %v189
    %222 = vmatprep.subr.mxu0 0.0
    %223 = vmatpush1.msra.mxu0 %v190
    %224 = vmatprep.subr.mxu0 0.0
    %225 = vmatpush1.msra.mxu0 %v191
    %226 = vmatprep.subr.mxu0 0.0
    %227 = vmatpush1.msra.mxu0 %v192
    %228 = vmatprep.subr.mxu0 0.0
    %229 = vmatpush1.msra.mxu0 %v193
    %230 = vmatprep.subr.mxu0 0.0
    %231 = vmatpush1.msra.mxu0 %v194
    %232 = vmatprep.subr.mxu0 0.0
    %233 = vmatpush1.msra.mxu0 %v195
    %234 = vmatprep.subr.mxu0 0.0
    %235 = vmatpush1.msra.mxu0 %v196
    %236 = vmatprep.subr.mxu0 0.0
    %237 = vmatpush1.msra.mxu0 0.0
    %238 = vmatprep.subr.mxu0 0.0
    %239 = vmatpush1.msra.mxu0 0.0
    %240 = vmatprep.subr.mxu0 0.0
    %241 = vmatpush1.msra.mxu0 0.0
    %242 = vmatprep.subr.mxu0 0.0
    %243 = vmatpush1.msra.mxu0 0.0
    %244 = vmatprep.subr.mxu0 0.0
    %245 = vmatpush1.msra.mxu0 0.0
    %246 = vmatprep.subr.mxu0 0.0
    %247 = vmatpush1.msra.mxu0 0.0
    %248 = vmatprep.subr.mxu0 0.0
    %249 = vmatpush1.msra.mxu0 0.0
    %250 = vmatprep.subr.mxu0 0.0
    %251 = vmatpush1.msra.mxu0 0.0
    %252 = vmatprep.subr.mxu0 0.0
    %253 = vmatpush1.msra.mxu0 0.0
    %254 = vmatprep.subr.mxu0 0.0
    %255 = vmatpush1.msra.mxu0 0.0
    %256 = vmatprep.subr.mxu0 0.0
    %257 = vmatpush1.msra.mxu0 0.0
    %258 = vmatprep.subr.mxu0 0.0
    %259 = vmatpush1.msra.mxu0 0.0
    %260 = vmatprep.subr.mxu0 0.0
    %261 = vmatpush1.msra.mxu0 0.0
    %262 = vmatprep.subr.mxu0 0.0
    %263 = vmatpush1.msra.mxu0 0.0
    %264 = vmatprep.subr.mxu0 0.0
    %265 = vmatpush1.msra.mxu0 0.0
    %266 = vmatprep.subr.mxu0 0.0
    %267 = vmatpush1.msra.mxu0 0.0
    %268 = vmatprep.mubr.f32.mxu0 0.0
    %269 = vmatmul.mubr.f32.gmra.mrb[0].mxu0 %v131
    %v270 = vpop.f32.mrb[0].mxu0
    %v271 = vadd.f32 %v202, %v270
    %v272 = vpop.f32.mrb[0].mxu0
    %273 = vmatprep.mubr.f32.mxu0 0.0
    %274 = vmatmul.mubr.f32.gmra.mrb[0].mxu0 %v132
    %v275 = vpop.f32.mrb[0].mxu0
    %v276 = vadd.f32 %v202, %v275
    %v277 = vpop.f32.mrb[0].mxu0
    %278 = vmatprep.mubr.f32.mxu0 0.0
    %279 = vmatmul.mubr.f32.gmra.mrb[0].mxu0 %v133
    %v280 = vpop.f32.mrb[0].mxu0
    %v281 = vadd.f32 %v202, %v280
    %v282 = vpop.f32.mrb[0].mxu0
    %283 = vmatprep.mubr.f32.mxu0 0.0
    %284 = vmatmul.mubr.f32.gmra.mrb[0].mxu0 %v134
    %v285 = vpop.f32.mrb[0].mxu0
    %v286 = vadd.f32 %v202, %v285
    %v287 = vpop.f32.mrb[0].mxu0
    %288 = vmatprep.mubr.f32.mxu0 0.0
    %289 = vmatmul.mubr.f32.gmra.mrb[0].mxu0 %v135
    %v290 = vpop.f32.mrb[0].mxu0
    %v291 = vadd.f32 %v202, %v290
    %v292 = vpop.f32.mrb[0].mxu0
    %293 = vmatprep.mubr.f32.mxu0 0.0
    %294 = vmatmul.mubr.f32.gmra.mrb[0].mxu0 %v136
    %v295 = vpop.f32.mrb[0].mxu0
    %v296 = vadd.f32 %v202, %v295
    %v297 = vpop.f32.mrb[0].mxu0
    %298 = vmatprep.mubr.f32.mxu0 0.0
    %299 = vmatmul.mubr.f32.gmra.mrb[0].mxu0 %v137
    %v300 = vpop.f32.mrb[0].mxu0
    %v301 = vadd.f32 %v202, %v300
    %v302 = vpop.f32.mrb[0].mxu0
    %303 = vmatprep.mubr.f32.mxu0 0.0
    %304 = vmatmul.mubr.f32.gmra.mrb[0].mxu0 %v138
    %v305 = vpop.f32.mrb[0].mxu0
    %v306 = vadd.f32 %v202, %v305
    %v307 = vpop.f32.mrb[0].mxu0
    %308 = vmatprep.mubr.f32.mxu0 0.0
    %309 = vmatmul.mubr.f32.gmra.mrb[0].mxu0 %v139
    %v310 = vpop.f32.mrb[0].mxu0
    %v311 = vadd.f32 %v202, %v310
    %v312 = vpop.f32.mrb[0].mxu0
    %313 = vmatprep.mubr.f32.mxu0 0.0
    %314 = vmatmul.mubr.f32.gmra.mrb[0].mxu0 %v140
    %v315 = vpop.f32.mrb[0].mxu0
    %v316 = vadd.f32 %v202, %v315
    %v317 = vpop.f32.mrb[0].mxu0
    %318 = vmatprep.mubr.f32.mxu0 0.0
    %319 = vmatmul.mubr.f32.gmra.mrb[0].mxu0 %v141
    %v320 = vpop.f32.mrb[0].mxu0
    %v321 = vadd.f32 %v202, %v320
    %v322 = vpop.f32.mrb[0].mxu0
    %323 = vmatprep.mubr.f32.mxu0 0.0
    %324 = vmatmul.mubr.f32.gmra.mrb[0].mxu0 %v142
    %v325 = vpop.f32.mrb[0].mxu0
    %v326 = vadd.f32 %v202, %v325
    %v327 = vpop.f32.mrb[0].mxu0
    %328 = vmatprep.mubr.f32.mxu0 0.0
    %329 = vmatmul.mubr.f32.gmra.mrb[0].mxu0 %v143
    %v330 = vpop.f32.mrb[0].mxu0
    %v331 = vadd.f32 %v202, %v330
    %v332 = vpop.f32.mrb[0].mxu0
    %333 = vmatprep.mubr.f32.mxu0 0.0
    %334 = vmatmul.mubr.f32.gmra.mrb[0].mxu0 %v144
    %v335 = vpop.f32.mrb[0].mxu0
    %v336 = vadd.f32 %v202, %v335
    %v337 = vpop.f32.mrb[0].mxu0
    %338 = vmatprep.mubr.f32.mxu0 0.0
    %339 = vmatmul.mubr.f32.gmra.mrb[0].mxu0 %v145
    %v340 = vpop.f32.mrb[0].mxu0
    %v341 = vadd.f32 %v202, %v340
    %v342 = vpop.f32.mrb[0].mxu0
    %343 = vmatprep.mubr.f32.mxu0 0.0
    %344 = vmatmul.mubr.f32.gmra.mrb[0].mxu0 %v146
    %v345 = vpop.f32.mrb[0].mxu0
    %v346 = vadd.f32 %v202, %v345
    %v347 = vpop.f32.mrb[0].mxu0
    %348 = vmatprep.mubr.f32.mxu0 0.0
    %349 = vmatmul.mubr.f32.gmra.mrb[0].mxu0 %v147
    %v350 = vpop.f32.mrb[0].mxu0
    %v351 = vadd.f32 %v202, %v350
    %v352 = vpop.f32.mrb[0].mxu0
    %353 = vmatprep.mubr.f32.mxu0 0.0
    %354 = vmatmul.mubr.f32.gmra.mrb[0].mxu0 %v148
    %v355 = vpop.f32.mrb[0].mxu0
    %v356 = vadd.f32 %v202, %v355
    %v357 = vpop.f32.mrb[0].mxu0
    %358 = vmatprep.mubr.f32.mxu0 0.0
    %359 = vmatmul.mubr.f32.gmra.mrb[0].mxu0 %v149
    %v360 = vpop.f32.mrb[0].mxu0
    %v361 = vadd.f32 %v202, %v360
    %v362 = vpop.f32.mrb[0].mxu0
    %363 = vmatprep.mubr.f32.mxu0 0.0
    %364 = vmatmul.mubr.f32.gmra.mrb[0].mxu0 %v150
    %v365 = vpop.f32.mrb[0].mxu0
    %v366 = vadd.f32 %v202, %v365
    %v367 = vpop.f32.mrb[0].mxu0
    %368 = vmatprep.mubr.f32.mxu0 0.0
    %369 = vmatmul.mubr.f32.gmra.mrb[0].mxu0 %v151
    %v370 = vpop.f32.mrb[0].mxu0
    %v371 = vadd.f32 %v202, %v370
    %v372 = vpop.f32.mrb[0].mxu0
    %373 = vmatprep.mubr.f32.mxu0 0.0
    %374 = vmatmul.mubr.f32.gmra.mrb[0].mxu0 %v152
    %v375 = vpop.f32.mrb[0].mxu0
    %v376 = vadd.f32 %v202, %v375
    %v377 = vpop.f32.mrb[0].mxu0
    %378 = vmatprep.mubr.f32.mxu0 0.0
    %379 = vmatmul.mubr.f32.gmra.mrb[0].mxu0 %v153
    %v380 = vpop.f32.mrb[0].mxu0
    %v381 = vadd.f32 %v202, %v380
    %v382 = vpop.f32.mrb[0].mxu0
    %383 = vmatprep.mubr.f32.mxu0 0.0
    %384 = vmatmul.mubr.f32.gmra.mrb[0].mxu0 %v154
    %v385 = vpop.f32.mrb[0].mxu0
    %v386 = vadd.f32 %v202, %v385
    %v387 = vpop.f32.mrb[0].mxu0
    %388 = vmatprep.mubr.f32.mxu0 0.0
    %389 = vmatmul.mubr.f32.gmra.mrb[0].mxu0 %v155
    %v390 = vpop.f32.mrb[0].mxu0
    %v391 = vadd.f32 %v202, %v390
    %v392 = vpop.f32.mrb[0].mxu0
    %393 = vdwg.mxu0
    %v394 = vld [vmem:[#allocation9] sm:$0xff]
    %v395 = vld [vmem:[#allocation9 + $0x8] sm:$0xff]
    %v396 = vld [vmem:[#allocation9 + $0x10] sm:$0xff]
    %v397 = vld [vmem:[#allocation9 + $0x18] sm:$0xff]
    %v398 = vld [vmem:[#allocation9 + $0x20] sm:$0xff]
    %v399 = vld [vmem:[#allocation9 + $0x28] sm:$0xff]
    %v400 = vld [vmem:[#allocation9 + $0x30] sm:$0xff]
    %v401 = vld [vmem:[#allocation9 + $0x38] sm:$0xff]
    %v402 = vld [vmem:[#allocation9 + $0x40] sm:$0xff]
    %v403 = vld [vmem:[#allocation9 + $0x48] sm:$0xff]
    %v404 = vld [vmem:[#allocation9 + $0x50] sm:$0xff]
    %v405 = vld [vmem:[#allocation9 + $0x58] sm:$0xff]
    %v406 = vld [vmem:[#allocation9 + $0x60] sm:$0xff]
    %v407 = vld [vmem:[#allocation9 + $0x68] sm:$0xff]
    %v408 = vld [vmem:[#allocation9 + $0x70] sm:$0xff]
    %v409 = vld [vmem:[#allocation9 + $0x78] sm:$0xff]
    %v410 = vld [vmem:[%s5] sm:$0x1]
    %v412 = vlaneseq
    %v413 = vshrl.u32 %v412, 7
    %v414 = vsub.s32 0, %v413
    %v415 = vrot.slane %v410, %v414
    %417 = vmatprep.subr.mxu0 0.0
    %418 = vmatpush1.msra.mxu0 %v394
    %419 = vmatprep.subr.mxu0 0.0
    %420 = vmatpush1.msra.mxu0 %v395
    %421 = vmatprep.subr.mxu0 0.0
    %422 = vmatpush1.msra.mxu0 %v396
    %423 = vmatprep.subr.mxu0 0.0
    %424 = vmatpush1.msra.mxu0 %v397
    %425 = vmatprep.subr.mxu0 0.0
    %426 = vmatpush1.msra.mxu0 %v398
    %427 = vmatprep.subr.mxu0 0.0
    %428 = vmatpush1.msra.mxu0 %v399
    %429 = vmatprep.subr.mxu0 0.0
    %430 = vmatpush1.msra.mxu0 %v400
    %431 = vmatprep.subr.mxu0 0.0
    %432 = vmatpush1.msra.mxu0 %v401
    %433 = vmatprep.subr.mxu0 0.0
    %434 = vmatpush1.msra.mxu0 %v402
    %435 = vmatprep.subr.mxu0 0.0
    %436 = vmatpush1.msra.mxu0 %v403
    %437 = vmatprep.subr.mxu0 0.0
    %438 = vmatpush1.msra.mxu0 %v404
    %439 = vmatprep.subr.mxu0 0.0
    %440 = vmatpush1.msra.mxu0 %v405
    %441 = vmatprep.subr.mxu0 0.0
    %442 = vmatpush1.msra.mxu0 %v406
    %443 = vmatprep.subr.mxu0 0.0
    %444 = vmatpush1.msra.mxu0 %v407
    %445 = vmatprep.subr.mxu0 0.0
    %446 = vmatpush1.msra.mxu0 %v408
    %447 = vmatprep.subr.mxu0 0.0
    %448 = vmatpush1.msra.mxu0 %v409
    %449 = vmatprep.subr.mxu0 0.0
    %450 = vmatpush1.msra.mxu0 0.0
    %451 = vmatprep.subr.mxu0 0.0
    %452 = vmatpush1.msra.mxu0 0.0
    %453 = vmatprep.subr.mxu0 0.0
    %454 = vmatpush1.msra.mxu0 0.0
    %455 = vmatprep.subr.mxu0 0.0
    %456 = vmatpush1.msra.mxu0 0.0
    %457 = vmatprep.subr.mxu0 0.0
    %458 = vmatpush1.msra.mxu0 0.0
    %459 = vmatprep.subr.mxu0 0.0
    %460 = vmatpush1.msra.mxu0 0.0
    %461 = vmatprep.subr.mxu0 0.0
    %462 = vmatpush1.msra.mxu0 0.0
    %463 = vmatprep.subr.mxu0 0.0
    %464 = vmatpush1.msra.mxu0 0.0
    %465 = vmatprep.subr.mxu0 0.0
    %466 = vmatpush1.msra.mxu0 0.0
    %467 = vmatprep.subr.mxu0 0.0
    %468 = vmatpush1.msra.mxu0 0.0
    %469 = vmatprep.subr.mxu0 0.0
    %470 = vmatpush1.msra.mxu0 0.0
    %471 = vmatprep.subr.mxu0 0.0
    %472 = vmatpush1.msra.mxu0 0.0
    %473 = vmatprep.subr.mxu0 0.0
    %474 = vmatpush1.msra.mxu0 0.0
    %475 = vmatprep.subr.mxu0 0.0
    %476 = vmatpush1.msra.mxu0 0.0
    %477 = vmatprep.subr.mxu0 0.0
    %478 = vmatpush1.msra.mxu0 0.0
    %479 = vmatprep.subr.mxu0 0.0
    %480 = vmatpush1.msra.mxu0 0.0
    %481 = vmatprep.mubr.f32.mxu0 0.0
    %482 = vmatmul.mubr.f32.gmra.mrb[0].mxu0 %v156
    %v483 = vpop.f32.mrb[0].mxu0
    %v484 = vadd.f32 %v415, %v483
    %v485 = vpop.f32.mrb[0].mxu0
    %486 = vmatprep.mubr.f32.mxu0 0.0
    %487 = vmatmul.mubr.f32.gmra.mrb[0].mxu0 %v157
    %v488 = vpop.f32.mrb[0].mxu0
    %v489 = vadd.f32 %v415, %v488
    %v490 = vpop.f32.mrb[0].mxu0
    %491 = vmatprep.mubr.f32.mxu0 0.0
    %492 = vmatmul.mubr.f32.gmra.mrb[0].mxu0 %v158
    %v493 = vpop.f32.mrb[0].mxu0
    %v494 = vadd.f32 %v415, %v493
    %v495 = vpop.f32.mrb[0].mxu0
    %496 = vmatprep.mubr.f32.mxu0 0.0
    %497 = vmatmul.mubr.f32.gmra.mrb[0].mxu0 %v159
    %v498 = vpop.f32.mrb[0].mxu0
    %v499 = vadd.f32 %v415, %v498
    %v500 = vpop.f32.mrb[0].mxu0
    %501 = vmatprep.mubr.f32.mxu0 0.0
    %502 = vmatmul.mubr.f32.gmra.mrb[0].mxu0 %v160
    %v503 = vpop.f32.mrb[0].mxu0
    %v504 = vadd.f32 %v415, %v503
    %v505 = vpop.f32.mrb[0].mxu0
    %506 = vmatprep.mubr.f32.mxu0 0.0
    %507 = vmatmul.mubr.f32.gmra.mrb[0].mxu0 %v161
    %v508 = vpop.f32.mrb[0].mxu0
    %v509 = vadd.f32 %v415, %v508
    %v510 = vpop.f32.mrb[0].mxu0
    %511 = vmatprep.mubr.f32.mxu0 0.0
    %512 = vmatmul.mubr.f32.gmra.mrb[0].mxu0 %v162
    %v513 = vpop.f32.mrb[0].mxu0
    %v514 = vadd.f32 %v415, %v513
    %v515 = vpop.f32.mrb[0].mxu0
    %516 = vmatprep.mubr.f32.mxu0 0.0
    %517 = vmatmul.mubr.f32.gmra.mrb[0].mxu0 %v163
    %v518 = vpop.f32.mrb[0].mxu0
    %v519 = vadd.f32 %v415, %v518
    %v520 = vpop.f32.mrb[0].mxu0
    %521 = vmatprep.mubr.f32.mxu0 0.0
    %522 = vmatmul.mubr.f32.gmra.mrb[0].mxu0 %v164
    %v523 = vpop.f32.mrb[0].mxu0
    %v524 = vadd.f32 %v415, %v523
    %v525 = vpop.f32.mrb[0].mxu0
    %526 = vmatprep.mubr.f32.mxu0 0.0
    %527 = vmatmul.mubr.f32.gmra.mrb[0].mxu0 %v165
    %v528 = vpop.f32.mrb[0].mxu0
    %v529 = vadd.f32 %v415, %v528
    %v530 = vpop.f32.mrb[0].mxu0
    %531 = vmatprep.mubr.f32.mxu0 0.0
    %532 = vmatmul.mubr.f32.gmra.mrb[0].mxu0 %v166
    %v533 = vpop.f32.mrb[0].mxu0
    %v534 = vadd.f32 %v415, %v533
    %v535 = vpop.f32.mrb[0].mxu0
    %536 = vmatprep.mubr.f32.mxu0 0.0
    %537 = vmatmul.mubr.f32.gmra.mrb[0].mxu0 %v167
    %v538 = vpop.f32.mrb[0].mxu0
    %v539 = vadd.f32 %v415, %v538
    %v540 = vpop.f32.mrb[0].mxu0
    %541 = vmatprep.mubr.f32.mxu0 0.0
    %542 = vmatmul.mubr.f32.gmra.mrb[0].mxu0 %v168
    %v543 = vpop.f32.mrb[0].mxu0
    %v544 = vadd.f32 %v415, %v543
    %v545 = vpop.f32.mrb[0].mxu0
    %546 = vmatprep.mubr.f32.mxu0 0.0
    %547 = vmatmul.mubr.f32.gmra.mrb[0].mxu0 %v169
    %v548 = vpop.f32.mrb[0].mxu0
    %v549 = vadd.f32 %v415, %v548
    %v550 = vpop.f32.mrb[0].mxu0
    %551 = vmatprep.mubr.f32.mxu0 0.0
    %552 = vmatmul.mubr.f32.gmra.mrb[0].mxu0 %v170
    %v553 = vpop.f32.mrb[0].mxu0
    %v554 = vadd.f32 %v415, %v553
    %v555 = vpop.f32.mrb[0].mxu0
    %556 = vmatprep.mubr.f32.mxu0 0.0
    %557 = vmatmul.mubr.f32.gmra.mrb[0].mxu0 %v171
    %v558 = vpop.f32.mrb[0].mxu0
    %v559 = vadd.f32 %v415, %v558
    %v560 = vpop.f32.mrb[0].mxu0
    %561 = vmatprep.mubr.f32.mxu0 0.0
    %562 = vmatmul.mubr.f32.gmra.mrb[0].mxu0 %v172
    %v563 = vpop.f32.mrb[0].mxu0
    %v564 = vadd.f32 %v415, %v563
    %v565 = vpop.f32.mrb[0].mxu0
    %566 = vmatprep.mubr.f32.mxu0 0.0
    %567 = vmatmul.mubr.f32.gmra.mrb[0].mxu0 %v173
    %v568 = vpop.f32.mrb[0].mxu0
    %v569 = vadd.f32 %v415, %v568
    %v570 = vpop.f32.mrb[0].mxu0
    %571 = vmatprep.mubr.f32.mxu0 0.0
    %572 = vmatmul.mubr.f32.gmra.mrb[0].mxu0 %v174
    %v573 = vpop.f32.mrb[0].mxu0
    %v574 = vadd.f32 %v415, %v573
    %v575 = vpop.f32.mrb[0].mxu0
    %576 = vmatprep.mubr.f32.mxu0 0.0
    %577 = vmatmul.mubr.f32.gmra.mrb[0].mxu0 %v175
    %v578 = vpop.f32.mrb[0].mxu0
    %v579 = vadd.f32 %v415, %v578
    %v580 = vpop.f32.mrb[0].mxu0
    %581 = vmatprep.mubr.f32.mxu0 0.0
    %582 = vmatmul.mubr.f32.gmra.mrb[0].mxu0 %v176
    %v583 = vpop.f32.mrb[0].mxu0
    %v584 = vadd.f32 %v415, %v583
    %v585 = vpop.f32.mrb[0].mxu0
    %586 = vmatprep.mubr.f32.mxu0 0.0
    %587 = vmatmul.mubr.f32.gmra.mrb[0].mxu0 %v177
    %v588 = vpop.f32.mrb[0].mxu0
    %v589 = vadd.f32 %v415, %v588
    %v590 = vpop.f32.mrb[0].mxu0
    %591 = vmatprep.mubr.f32.mxu0 0.0
    %592 = vmatmul.mubr.f32.gmra.mrb[0].mxu0 %v178
    %v593 = vpop.f32.mrb[0].mxu0
    %v594 = vadd.f32 %v415, %v593
    %v595 = vpop.f32.mrb[0].mxu0
    %596 = vmatprep.mubr.f32.mxu0 0.0
    %597 = vmatmul.mubr.f32.gmra.mrb[0].mxu0 %v179
    %v598 = vpop.f32.mrb[0].mxu0
    %v599 = vadd.f32 %v415, %v598
    %v600 = vpop.f32.mrb[0].mxu0
    %601 = vmatprep.mubr.f32.mxu0 0.0
    %602 = vmatmul.mubr.f32.gmra.mrb[0].mxu0 %v180
    %v603 = vpop.f32.mrb[0].mxu0
    %v604 = vadd.f32 %v415, %v603
    %v605 = vpop.f32.mrb[0].mxu0
    %606 = vdwg.mxu0
    %v607 = vxor.u32 %v271, 2147483648
    %v608 = vxor.u32 %v276, 2147483648
    %v609 = vxor.u32 %v281, 2147483648
    %v610 = vxor.u32 %v286, 2147483648
    %v611 = vxor.u32 %v291, 2147483648
    %v612 = vxor.u32 %v296, 2147483648
    %v613 = vxor.u32 %v301, 2147483648
    %v614 = vxor.u32 %v306, 2147483648
    %v615 = vxor.u32 %v311, 2147483648
    %v616 = vxor.u32 %v316, 2147483648
    %v617 = vxor.u32 %v321, 2147483648
    %v618 = vxor.u32 %v326, 2147483648
    %v619 = vxor.u32 %v331, 2147483648
    %v620 = vxor.u32 %v336, 2147483648
    %v621 = vxor.u32 %v341, 2147483648
    %v622 = vxor.u32 %v346, 2147483648
    %v623 = vxor.u32 %v351, 2147483648
    %v624 = vxor.u32 %v356, 2147483648
    %v625 = vxor.u32 %v361, 2147483648
    %v626 = vxor.u32 %v366, 2147483648
    %v627 = vxor.u32 %v371, 2147483648
    %v628 = vxor.u32 %v376, 2147483648
    %v629 = vxor.u32 %v381, 2147483648
    %v630 = vxor.u32 %v386, 2147483648
    %v631 = vxor.u32 %v391, 2147483648
    %v632 = vmul.f32 %v607, 1.442695
    %v633 = vpow.pop %v632
    %v634 = vmul.f32 %v608, 1.442695
    %v635 = vpow.pop %v634
    %v636 = vmul.f32 %v609, 1.442695
    %v637 = vpow.pop %v636
    %v638 = vmul.f32 %v610, 1.442695
    %v639 = vpow.pop %v638
    %v640 = vmul.f32 %v611, 1.442695
    %v641 = vpow.pop %v640
    %v642 = vmul.f32 %v612, 1.442695
    %v643 = vpow.pop %v642
    %v644 = vmul.f32 %v613, 1.442695
    %v645 = vpow.pop %v644
    %v646 = vmul.f32 %v614, 1.442695
    %v647 = vpow.pop %v646
    %v648 = vmul.f32 %v615, 1.442695
    %v649 = vpow.pop %v648
    %v650 = vmul.f32 %v616, 1.442695
    %v651 = vpow.pop %v650
    %v652 = vmul.f32 %v617, 1.442695
    %v653 = vpow.pop %v652
    %v654 = vmul.f32 %v618, 1.442695
    %v655 = vpow.pop %v654
    %v656 = vmul.f32 %v619, 1.442695
    %v657 = vpow.pop %v656
    %v658 = vmul.f32 %v620, 1.442695
    %v659 = vpow.pop %v658
    %v660 = vmul.f32 %v621, 1.442695
    %v661 = vpow.pop %v660
    %v662 = vmul.f32 %v622, 1.442695
    %v663 = vpow.pop %v662
    %v664 = vmul.f32 %v623, 1.442695
    %v665 = vpow.pop %v664
    %v666 = vmul.f32 %v624, 1.442695
    %v667 = vpow.pop %v666
    %v668 = vmul.f32 %v625, 1.442695
    %v669 = vpow.pop %v668
    %v670 = vmul.f32 %v626, 1.442695
    %v671 = vpow.pop %v670
    %v672 = vmul.f32 %v627, 1.442695
    %v673 = vpow.pop %v672
    %v674 = vmul.f32 %v628, 1.442695
    %v675 = vpow.pop %v674
    %v676 = vmul.f32 %v629, 1.442695
    %v677 = vpow.pop %v676
    %v678 = vmul.f32 %v630, 1.442695
    %v679 = vpow.pop %v678
    %v680 = vmul.f32 %v631, 1.442695
    %v681 = vpow.pop %v680
    %v682 = vadd.f32 %v633, 1.0
    %v683 = vadd.f32 %v635, 1.0
    %v684 = vadd.f32 %v637, 1.0
    %v685 = vadd.f32 %v639, 1.0
    %v686 = vadd.f32 %v641, 1.0
    %v687 = vadd.f32 %v643, 1.0
    %v688 = vadd.f32 %v645, 1.0
    %v689 = vadd.f32 %v647, 1.0
    %v690 = vadd.f32 %v649, 1.0
    %v691 = vadd.f32 %v651, 1.0
    %v692 = vadd.f32 %v653, 1.0
    %v693 = vadd.f32 %v655, 1.0
    %v694 = vadd.f32 %v657, 1.0
    %v695 = vadd.f32 %v659, 1.0
    %v696 = vadd.f32 %v661, 1.0
    %v697 = vadd.f32 %v663, 1.0
    %v698 = vadd.f32 %v665, 1.0
    %v699 = vadd.f32 %v667, 1.0
    %v700 = vadd.f32 %v669, 1.0
    %v701 = vadd.f32 %v671, 1.0
    %v702 = vadd.f32 %v673, 1.0
    %v703 = vadd.f32 %v675, 1.0
    %v704 = vadd.f32 %v677, 1.0
    %v705 = vadd.f32 %v679, 1.0
    %v706 = vadd.f32 %v681, 1.0
    %v707 = vrcp.pop %v682
    %v708 = vmul.f32 1.0, %v707
    %v709 = vrcp.pop %v683
    %v710 = vmul.f32 1.0, %v709
    %v711 = vrcp.pop %v684
    %v712 = vmul.f32 1.0, %v711
    %v713 = vrcp.pop %v685
    %v714 = vmul.f32 1.0, %v713
    %v715 = vrcp.pop %v686
    %v716 = vmul.f32 1.0, %v715
    %v717 = vrcp.pop %v687
    %v718 = vmul.f32 1.0, %v717
    %v719 = vrcp.pop %v688
    %v720 = vmul.f32 1.0, %v719
    %v721 = vrcp.pop %v689
    %v722 = vmul.f32 1.0, %v721
    %v723 = vrcp.pop %v690
    %v724 = vmul.f32 1.0, %v723
    %v725 = vrcp.pop %v691
    %v726 = vmul.f32 1.0, %v725
    %v727 = vrcp.pop %v692
    %v728 = vmul.f32 1.0, %v727
    %v729 = vrcp.pop %v693
    %v730 = vmul.f32 1.0, %v729
    %v731 = vrcp.pop %v694
    %v732 = vmul.f32 1.0, %v731
    %v733 = vrcp.pop %v695
    %v734 = vmul.f32 1.0, %v733
    %v735 = vrcp.pop %v696
    %v736 = vmul.f32 1.0, %v735
    %v737 = vrcp.pop %v697
    %v738 = vmul.f32 1.0, %v737
    %v739 = vrcp.pop %v698
    %v740 = vmul.f32 1.0, %v739
    %v741 = vrcp.pop %v699
    %v742 = vmul.f32 1.0, %v741
    %v743 = vrcp.pop %v700
    %v744 = vmul.f32 1.0, %v743
    %v745 = vrcp.pop %v701
    %v746 = vmul.f32 1.0, %v745
    %v747 = vrcp.pop %v702
    %v748 = vmul.f32 1.0, %v747
    %v749 = vrcp.pop %v703
    %v750 = vmul.f32 1.0, %v749
    %v751 = vrcp.pop %v704
    %v752 = vmul.f32 1.0, %v751
    %v753 = vrcp.pop %v705
    %v754 = vmul.f32 1.0, %v753
    %v755 = vrcp.pop %v706
    %v756 = vmul.f32 1.0, %v755
    %v757 = vmul.f32 %v708, %v484
    %v758 = vmul.f32 %v710, %v489
    %v759 = vmul.f32 %v712, %v494
    %v760 = vmul.f32 %v714, %v499
    %v761 = vmul.f32 %v716, %v504
    %v762 = vmul.f32 %v718, %v509
    %v763 = vmul.f32 %v720, %v514
    %v764 = vmul.f32 %v722, %v519
    %v765 = vmul.f32 %v724, %v524
    %v766 = vmul.f32 %v726, %v529
    %v767 = vmul.f32 %v728, %v534
    %v768 = vmul.f32 %v730, %v539
    %v769 = vmul.f32 %v732, %v544
    %v770 = vmul.f32 %v734, %v549
    %v771 = vmul.f32 %v736, %v554
    %v772 = vmul.f32 %v738, %v559
    %v773 = vmul.f32 %v740, %v564
    %v774 = vmul.f32 %v742, %v569
    %v775 = vmul.f32 %v744, %v574
    %v776 = vmul.f32 %v746, %v579
    %v777 = vmul.f32 %v748, %v584
    %v778 = vmul.f32 %v750, %v589
    %v779 = vmul.f32 %v752, %v594
    %v780 = vmul.f32 %v754, %v599
    %v781 = vmul.f32 %v756, %v604
    %v782 = vld [vmem:[#allocation2] sm:$0xff]
    %v783 = vld [vmem:[#allocation2 + $0x8] sm:$0xff]
    %v784 = vld [vmem:[#allocation2 + $0x10] sm:$0xff]
    %v785 = vld [vmem:[#allocation2 + $0x18] sm:$0xff]
    %v786 = vld [vmem:[#allocation2 + $0x20] sm:$0xff]
    %v787 = vld [vmem:[#allocation2 + $0x28] sm:$0xff]
    %v788 = vld [vmem:[#allocation2 + $0x30] sm:$0xff]
    %v789 = vld [vmem:[#allocation2 + $0x38] sm:$0xff]
    %v790 = vld [vmem:[#allocation2 + $0x40] sm:$0xff]
    %v791 = vld [vmem:[#allocation2 + $0x48] sm:$0xff]
    %v792 = vld [vmem:[#allocation2 + $0x50] sm:$0xff]
    %v793 = vld [vmem:[#allocation2 + $0x58] sm:$0xff]
    %v794 = vld [vmem:[#allocation2 + $0x60] sm:$0xff]
    %v795 = vld [vmem:[#allocation2 + $0x68] sm:$0xff]
    %v796 = vld [vmem:[#allocation2 + $0x70] sm:$0xff]
    %v797 = vld [vmem:[#allocation2 + $0x78] sm:$0xff]
    %v798 = vld [vmem:[#allocation2 + $0x80] sm:$0xff]
    %v799 = vld [vmem:[#allocation2 + $0x88] sm:$0xff]
    %v800 = vld [vmem:[#allocation2 + $0x90] sm:$0xff]
    %v801 = vld [vmem:[#allocation2 + $0x98] sm:$0xff]
    %v802 = vld [vmem:[#allocation2 + $0xa0] sm:$0xff]
    %v803 = vld [vmem:[#allocation2 + $0xa8] sm:$0xff]
    %v804 = vld [vmem:[#allocation2 + $0xb0] sm:$0xff]
    %v805 = vld [vmem:[#allocation2 + $0xb8] sm:$0xff]
    %v806 = vld [vmem:[#allocation2 + $0xc0] sm:$0xff]
    %v807 = vld [vmem:[#allocation11] sm:$0xff]
    %v808 = vld [vmem:[#allocation11 + $0x8] sm:$0xff]
    %v809 = vld [vmem:[#allocation11 + $0x10] sm:$0xff]
    %v810 = vld [vmem:[#allocation11 + $0x18] sm:$0xff]
    %v811 = vld [vmem:[#allocation11 + $0x20] sm:$0xff]
    %v812 = vld [vmem:[#allocation11 + $0x28] sm:$0xff]
    %v813 = vld [vmem:[#allocation11 + $0x30] sm:$0xff]
    %v814 = vld [vmem:[#allocation11 + $0x38] sm:$0xff]
    %v815 = vld [vmem:[#allocation11 + $0x40] sm:$0xff]
    %v816 = vld [vmem:[#allocation11 + $0x48] sm:$0xff]
    %v817 = vld [vmem:[#allocation11 + $0x50] sm:$0xff]
    %v818 = vld [vmem:[#allocation11 + $0x58] sm:$0xff]
    %v819 = vld [vmem:[#allocation11 + $0x60] sm:$0xff]
    %v820 = vld [vmem:[#allocation11 + $0x68] sm:$0xff]
    %v821 = vld [vmem:[#allocation11 + $0x70] sm:$0xff]
    %v822 = vld [vmem:[#allocation11 + $0x78] sm:$0xff]
    %823 = vmatprep.subr.mxu0 0.0
    %824 = vmatpush1.msra.mxu0 %v807
    %825 = vmatprep.subr.mxu0 0.0
    %826 = vmatpush1.msra.mxu0 %v808
    %827 = vmatprep.subr.mxu0 0.0
    %828 = vmatpush1.msra.mxu0 %v809
    %829 = vmatprep.subr.mxu0 0.0
    %830 = vmatpush1.msra.mxu0 %v810
    %831 = vmatprep.subr.mxu0 0.0
    %832 = vmatpush1.msra.mxu0 %v811
    %833 = vmatprep.subr.mxu0 0.0
    %834 = vmatpush1.msra.mxu0 %v812
    %835 = vmatprep.subr.mxu0 0.0
    %836 = vmatpush1.msra.mxu0 %v813
    %837 = vmatprep.subr.mxu0 0.0
    %838 = vmatpush1.msra.mxu0 %v814
    %839 = vmatprep.subr.mxu0 0.0
    %840 = vmatpush1.msra.mxu0 %v815
    %841 = vmatprep.subr.mxu0 0.0
    %842 = vmatpush1.msra.mxu0 %v816
    %843 = vmatprep.subr.mxu0 0.0
    %844 = vmatpush1.msra.mxu0 %v817
    %845 = vmatprep.subr.mxu0 0.0
    %846 = vmatpush1.msra.mxu0 %v818
    %847 = vmatprep.subr.mxu0 0.0
    %848 = vmatpush1.msra.mxu0 %v819
    %849 = vmatprep.subr.mxu0 0.0
    %850 = vmatpush1.msra.mxu0 %v820
    %851 = vmatprep.subr.mxu0 0.0
    %852 = vmatpush1.msra.mxu0 %v821
    %853 = vmatprep.subr.mxu0 0.0
    %854 = vmatpush1.msra.mxu0 %v822
    %855 = vmatprep.subr.mxu0 0.0
    %856 = vmatpush1.msra.mxu0 0.0
    %857 = vmatprep.subr.mxu0 0.0
    %858 = vmatpush1.msra.mxu0 0.0
    %859 = vmatprep.subr.mxu0 0.0
    %860 = vmatpush1.msra.mxu0 0.0
    %861 = vmatprep.subr.mxu0 0.0
    %862 = vmatpush1.msra.mxu0 0.0
    %863 = vmatprep.subr.mxu0 0.0
    %864 = vmatpush1.msra.mxu0 0.0
    %865 = vmatprep.subr.mxu0 0.0
    %866 = vmatpush1.msra.mxu0 0.0
    %867 = vmatprep.subr.mxu0 0.0
    %868 = vmatpush1.msra.mxu0 0.0
    %869 = vmatprep.subr.mxu0 0.0
    %870 = vmatpush1.msra.mxu0 0.0
    %871 = vmatprep.subr.mxu0 0.0
    %872 = vmatpush1.msra.mxu0 0.0
    %873 = vmatprep.subr.mxu0 0.0
    %874 = vmatpush1.msra.mxu0 0.0
    %875 = vmatprep.subr.mxu0 0.0
    %876 = vmatpush1.msra.mxu0 0.0
    %877 = vmatprep.subr.mxu0 0.0
    %878 = vmatpush1.msra.mxu0 0.0
    %879 = vmatprep.subr.mxu0 0.0
    %880 = vmatpush1.msra.mxu0 0.0
    %881 = vmatprep.subr.mxu0 0.0
    %882 = vmatpush1.msra.mxu0 0.0
    %883 = vmatprep.subr.mxu0 0.0
    %884 = vmatpush1.msra.mxu0 0.0
    %885 = vmatprep.subr.mxu0 0.0
    %886 = vmatpush1.msra.mxu0 0.0
    %887 = vmatprep.mubr.f32.mxu0 0.0
    %888 = vmatmul.mubr.f32.gmra.mrb[0].mxu0 %v757
    %v889 = vpop.f32.mrb[0].mxu0
    %v890 = vadd.f32 0.0, %v889
    %v891 = vpop.f32.mrb[0].mxu0
    %892 = vmatprep.mubr.f32.mxu0 0.0
    %893 = vmatmul.mubr.f32.gmra.mrb[0].mxu0 %v758
    %v894 = vpop.f32.mrb[0].mxu0
    %v895 = vadd.f32 0.0, %v894
    %v896 = vpop.f32.mrb[0].mxu0
    %897 = vmatprep.mubr.f32.mxu0 0.0
    %898 = vmatmul.mubr.f32.gmra.mrb[0].mxu0 %v759
    %v899 = vpop.f32.mrb[0].mxu0
    %v900 = vadd.f32 0.0, %v899
    %v901 = vpop.f32.mrb[0].mxu0
    %902 = vmatprep.mubr.f32.mxu0 0.0
    %903 = vmatmul.mubr.f32.gmra.mrb[0].mxu0 %v760
    %v904 = vpop.f32.mrb[0].mxu0
    %v905 = vadd.f32 0.0, %v904
    %v906 = vpop.f32.mrb[0].mxu0
    %907 = vmatprep.mubr.f32.mxu0 0.0
    %908 = vmatmul.mubr.f32.gmra.mrb[0].mxu0 %v761
    %v909 = vpop.f32.mrb[0].mxu0
    %v910 = vadd.f32 0.0, %v909
    %v911 = vpop.f32.mrb[0].mxu0
    %912 = vmatprep.mubr.f32.mxu0 0.0
    %913 = vmatmul.mubr.f32.gmra.mrb[0].mxu0 %v762
    %v914 = vpop.f32.mrb[0].mxu0
    %v915 = vadd.f32 0.0, %v914
    %v916 = vpop.f32.mrb[0].mxu0
    %917 = vmatprep.mubr.f32.mxu0 0.0
    %918 = vmatmul.mubr.f32.gmra.mrb[0].mxu0 %v763
    %v919 = vpop.f32.mrb[0].mxu0
    %v920 = vadd.f32 0.0, %v919
    %v921 = vpop.f32.mrb[0].mxu0
    %922 = vmatprep.mubr.f32.mxu0 0.0
    %923 = vmatmul.mubr.f32.gmra.mrb[0].mxu0 %v764
    %v924 = vpop.f32.mrb[0].mxu0
    %v925 = vadd.f32 0.0, %v924
    %v926 = vpop.f32.mrb[0].mxu0
    %927 = vmatprep.mubr.f32.mxu0 0.0
    %928 = vmatmul.mubr.f32.gmra.mrb[0].mxu0 %v765
    %v929 = vpop.f32.mrb[0].mxu0
    %v930 = vadd.f32 0.0, %v929
    %v931 = vpop.f32.mrb[0].mxu0
    %932 = vmatprep.mubr.f32.mxu0 0.0
    %933 = vmatmul.mubr.f32.gmra.mrb[0].mxu0 %v766
    %v934 = vpop.f32.mrb[0].mxu0
    %v935 = vadd.f32 0.0, %v934
    %v936 = vpop.f32.mrb[0].mxu0
    %937 = vmatprep.mubr.f32.mxu0 0.0
    %938 = vmatmul.mubr.f32.gmra.mrb[0].mxu0 %v767
    %v939 = vpop.f32.mrb[0].mxu0
    %v940 = vadd.f32 0.0, %v939
    %v941 = vpop.f32.mrb[0].mxu0
    %942 = vmatprep.mubr.f32.mxu0 0.0
    %943 = vmatmul.mubr.f32.gmra.mrb[0].mxu0 %v768
    %v944 = vpop.f32.mrb[0].mxu0
    %v945 = vadd.f32 0.0, %v944
    %v946 = vpop.f32.mrb[0].mxu0
    %947 = vmatprep.mubr.f32.mxu0 0.0
    %948 = vmatmul.mubr.f32.gmra.mrb[0].mxu0 %v769
    %v949 = vpop.f32.mrb[0].mxu0
    %v950 = vadd.f32 0.0, %v949
    %v951 = vpop.f32.mrb[0].mxu0
    %952 = vmatprep.mubr.f32.mxu0 0.0
    %953 = vmatmul.mubr.f32.gmra.mrb[0].mxu0 %v770
    %v954 = vpop.f32.mrb[0].mxu0
    %v955 = vadd.f32 0.0, %v954
    %v956 = vpop.f32.mrb[0].mxu0
    %957 = vmatprep.mubr.f32.mxu0 0.0
    %958 = vmatmul.mubr.f32.gmra.mrb[0].mxu0 %v771
    %v959 = vpop.f32.mrb[0].mxu0
    %v960 = vadd.f32 0.0, %v959
    %v961 = vpop.f32.mrb[0].mxu0
    %962 = vmatprep.mubr.f32.mxu0 0.0
    %963 = vmatmul.mubr.f32.gmra.mrb[0].mxu0 %v772
    %v964 = vpop.f32.mrb[0].mxu0
    %v965 = vadd.f32 0.0, %v964
    %v966 = vpop.f32.mrb[0].mxu0
    %967 = vmatprep.mubr.f32.mxu0 0.0
    %968 = vmatmul.mubr.f32.gmra.mrb[0].mxu0 %v773
    %v969 = vpop.f32.mrb[0].mxu0
    %v970 = vadd.f32 0.0, %v969
    %v971 = vpop.f32.mrb[0].mxu0
    %972 = vmatprep.mubr.f32.mxu0 0.0
    %973 = vmatmul.mubr.f32.gmra.mrb[0].mxu0 %v774
    %v974 = vpop.f32.mrb[0].mxu0
    %v975 = vadd.f32 0.0, %v974
    %v976 = vpop.f32.mrb[0].mxu0
    %977 = vmatprep.mubr.f32.mxu0 0.0
    %978 = vmatmul.mubr.f32.gmra.mrb[0].mxu0 %v775
    %v979 = vpop.f32.mrb[0].mxu0
    %v980 = vadd.f32 0.0, %v979
    %v981 = vpop.f32.mrb[0].mxu0
    %982 = vmatprep.mubr.f32.mxu0 0.0
    %983 = vmatmul.mubr.f32.gmra.mrb[0].mxu0 %v776
    %v984 = vpop.f32.mrb[0].mxu0
    %v985 = vadd.f32 0.0, %v984
    %v986 = vpop.f32.mrb[0].mxu0
    %987 = vmatprep.mubr.f32.mxu0 0.0
    %988 = vmatmul.mubr.f32.gmra.mrb[0].mxu0 %v777
    %v989 = vpop.f32.mrb[0].mxu0
    %v990 = vadd.f32 0.0, %v989
    %v991 = vpop.f32.mrb[0].mxu0
    %992 = vmatprep.mubr.f32.mxu0 0.0
    %993 = vmatmul.mubr.f32.gmra.mrb[0].mxu0 %v778
    %v994 = vpop.f32.mrb[0].mxu0
    %v995 = vadd.f32 0.0, %v994
    %v996 = vpop.f32.mrb[0].mxu0
    %997 = vmatprep.mubr.f32.mxu0 0.0
    %998 = vmatmul.mubr.f32.gmra.mrb[0].mxu0 %v779
    %v999 = vpop.f32.mrb[0].mxu0
    %v1000 = vadd.f32 0.0, %v999
    %v1001 = vpop.f32.mrb[0].mxu0
    %1002 = vmatprep.mubr.f32.mxu0 0.0
    %1003 = vmatmul.mubr.f32.gmra.mrb[0].mxu0 %v780
    %v1004 = vpop.f32.mrb[0].mxu0
    %v1005 = vadd.f32 0.0, %v1004
    %v1006 = vpop.f32.mrb[0].mxu0
    %1007 = vmatprep.mubr.f32.mxu0 0.0
    %1008 = vmatmul.mubr.f32.gmra.mrb[0].mxu0 %v781
    %v1009 = vpop.f32.mrb[0].mxu0
    %v1010 = vadd.f32 0.0, %v1009
    %v1011 = vpop.f32.mrb[0].mxu0
    %1012 = vdwg.mxu0
    %v1013 = vadd.f32 %v782, %v890
    %v1014 = vadd.f32 %v783, %v895
    %v1015 = vadd.f32 %v784, %v900
    %v1016 = vadd.f32 %v785, %v905
    %v1017 = vadd.f32 %v786, %v910
    %v1018 = vadd.f32 %v787, %v915
    %v1019 = vadd.f32 %v788, %v920
    %v1020 = vadd.f32 %v789, %v925
    %v1021 = vadd.f32 %v790, %v930
    %v1022 = vadd.f32 %v791, %v935
    %v1023 = vadd.f32 %v792, %v940
    %v1024 = vadd.f32 %v793, %v945
    %v1025 = vadd.f32 %v794, %v950
    %v1026 = vadd.f32 %v795, %v955
    %v1027 = vadd.f32 %v796, %v960
    %v1028 = vadd.f32 %v797, %v965
    %v1029 = vadd.f32 %v798, %v970
    %v1030 = vadd.f32 %v799, %v975
    %v1031 = vadd.f32 %v800, %v980
    %v1032 = vadd.f32 %v801, %v985
    %v1033 = vadd.f32 %v802, %v990
    %v1034 = vadd.f32 %v803, %v995
    %v1035 = vadd.f32 %v804, %v1000
    %v1036 = vadd.f32 %v805, %v1005
    %v1037 = vadd.f32 %v806, %v1010
    %1038 = vst [vmem:[#allocation2] sm:$0xff] %v1013
    %1039 = vst [vmem:[#allocation2 + $0x8] sm:$0xff] %v1014
    %1040 = vst [vmem:[#allocation2 + $0x10] sm:$0xff] %v1015
    %1041 = vst [vmem:[#allocation2 + $0x18] sm:$0xff] %v1016
    %1042 = vst [vmem:[#allocation2 + $0x20] sm:$0xff] %v1017
    %1043 = vst [vmem:[#allocation2 + $0x28] sm:$0xff] %v1018
    %1044 = vst [vmem:[#allocation2 + $0x30] sm:$0xff] %v1019
    %1045 = vst [vmem:[#allocation2 + $0x38] sm:$0xff] %v1020
    %1046 = vst [vmem:[#allocation2 + $0x40] sm:$0xff] %v1021
    %1047 = vst [vmem:[#allocation2 + $0x48] sm:$0xff] %v1022
    %1048 = vst [vmem:[#allocation2 + $0x50] sm:$0xff] %v1023
    %1049 = vst [vmem:[#allocation2 + $0x58] sm:$0xff] %v1024
    %1050 = vst [vmem:[#allocation2 + $0x60] sm:$0xff] %v1025
    %1051 = vst [vmem:[#allocation2 + $0x68] sm:$0xff] %v1026
    %1052 = vst [vmem:[#allocation2 + $0x70] sm:$0xff] %v1027
    %1053 = vst [vmem:[#allocation2 + $0x78] sm:$0xff] %v1028
    %1054 = vst [vmem:[#allocation2 + $0x80] sm:$0xff] %v1029
    %1055 = vst [vmem:[#allocation2 + $0x88] sm:$0xff] %v1030
    %1056 = vst [vmem:[#allocation2 + $0x90] sm:$0xff] %v1031
    %1057 = vst [vmem:[#allocation2 + $0x98] sm:$0xff] %v1032
    %1058 = vst [vmem:[#allocation2 + $0xa0] sm:$0xff] %v1033
    %1059 = vst [vmem:[#allocation2 + $0xa8] sm:$0xff] %v1034
    %1060 = vst [vmem:[#allocation2 + $0xb0] sm:$0xff] %v1035
    %1061 = vst [vmem:[#allocation2 + $0xb8] sm:$0xff] %v1036
    %1062 = vst [vmem:[#allocation2 + $0xc0] sm:$0xff] %v1037
    %1063 = vst [vmem:[#allocation12] sm:$0xff] %v271
    %1064 = vst [vmem:[#allocation12 + $0x8] sm:$0xff] %v276
    %1065 = vst [vmem:[#allocation12 + $0x10] sm:$0xff] %v281
    %1066 = vst [vmem:[#allocation12 + $0x18] sm:$0xff] %v286
    %1067 = vst [vmem:[#allocation12 + $0x20] sm:$0xff] %v291
    %1068 = vst [vmem:[#allocation12 + $0x28] sm:$0xff] %v296
    %1069 = vst [vmem:[#allocation12 + $0x30] sm:$0xff] %v301
    %1070 = vst [vmem:[#allocation12 + $0x38] sm:$0xff] %v306
    %1071 = vst [vmem:[#allocation12 + $0x40] sm:$0xff] %v311
    %1072 = vst [vmem:[#allocation12 + $0x48] sm:$0xff] %v316
    %1073 = vst [vmem:[#allocation12 + $0x50] sm:$0xff] %v321
    %1074 = vst [vmem:[#allocation12 + $0x58] sm:$0xff] %v326
    %1075 = vst [vmem:[#allocation12 + $0x60] sm:$0xff] %v331
    %1076 = vst [vmem:[#allocation12 + $0x68] sm:$0xff] %v336
    %1077 = vst [vmem:[#allocation12 + $0x70] sm:$0xff] %v341
    %1078 = vst [vmem:[#allocation12 + $0x78] sm:$0xff] %v346
    %1079 = vst [vmem:[#allocation12 + $0x80] sm:$0xff] %v351
    %1080 = vst [vmem:[#allocation12 + $0x88] sm:$0xff] %v356
    %1081 = vst [vmem:[#allocation12 + $0x90] sm:$0xff] %v361
    %1082 = vst [vmem:[#allocation12 + $0x98] sm:$0xff] %v366
    %1083 = vst [vmem:[#allocation12 + $0xa0] sm:$0xff] %v371
    %1084 = vst [vmem:[#allocation12 + $0xa8] sm:$0xff] %v376
    %1085 = vst [vmem:[#allocation12 + $0xb0] sm:$0xff] %v381
    %1086 = vst [vmem:[#allocation12 + $0xb8] sm:$0xff] %v386
    %1087 = vst [vmem:[#allocation12 + $0xc0] sm:$0xff] %v391
    %1088 = vst [vmem:[#allocation13] sm:$0xff] %v484
    %1089 = vst [vmem:[#allocation13 + $0x8] sm:$0xff] %v489
    %1090 = vst [vmem:[#allocation13 + $0x10] sm:$0xff] %v494
    %1091 = vst [vmem:[#allocation13 + $0x18] sm:$0xff] %v499
    %1092 = vst [vmem:[#allocation13 + $0x20] sm:$0xff] %v504
    %1093 = vst [vmem:[#allocation13 + $0x28] sm:$0xff] %v509
    %1094 = vst [vmem:[#allocation13 + $0x30] sm:$0xff] %v514
    %1095 = vst [vmem:[#allocation13 + $0x38] sm:$0xff] %v519
    %1096 = vst [vmem:[#allocation13 + $0x40] sm:$0xff] %v524
    %1097 = vst [vmem:[#allocation13 + $0x48] sm:$0xff] %v529
    %1098 = vst [vmem:[#allocation13 + $0x50] sm:$0xff] %v534
    %1099 = vst [vmem:[#allocation13 + $0x58] sm:$0xff] %v539
    %1100 = vst [vmem:[#allocation13 + $0x60] sm:$0xff] %v544
    %1101 = vst [vmem:[#allocation13 + $0x68] sm:$0xff] %v549
    %1102 = vst [vmem:[#allocation13 + $0x70] sm:$0xff] %v554
    %1103 = vst [vmem:[#allocation13 + $0x78] sm:$0xff] %v559
    %1104 = vst [vmem:[#allocation13 + $0x80] sm:$0xff] %v564
    %1105 = vst [vmem:[#allocation13 + $0x88] sm:$0xff] %v569
    %1106 = vst [vmem:[#allocation13 + $0x90] sm:$0xff] %v574
    %1107 = vst [vmem:[#allocation13 + $0x98] sm:$0xff] %v579
    %1108 = vst [vmem:[#allocation13 + $0xa0] sm:$0xff] %v584
    %1109 = vst [vmem:[#allocation13 + $0xa8] sm:$0xff] %v589
    %1110 = vst [vmem:[#allocation13 + $0xb0] sm:$0xff] %v594
    %1111 = vst [vmem:[#allocation13 + $0xb8] sm:$0xff] %v599
    %1112 = vst [vmem:[#allocation13 + $0xc0] sm:$0xff] %v604
    // Predicated region
    $region58: #{tpu_custom_call.1} parent=1 // pred_check
      %p1113 = pneg %p102
    $region59: #{tpu_custom_call.1} parent=1 // pred_check_branch
      %1115 = sbr.rel (%p1113) target = $region61
    $region60: #{tpu_custom_call.1} parent=1 // pred_region
      %v1116 = vld [vmem:[#allocation2] sm:$0xff]
      %v1117 = vld [vmem:[#allocation2 + $0x8] sm:$0xff]
      %v1118 = vld [vmem:[#allocation2 + $0x10] sm:$0xff]
      %v1119 = vld [vmem:[#allocation2 + $0x18] sm:$0xff]
      %v1120 = vld [vmem:[#allocation2 + $0x20] sm:$0xff]
      %v1121 = vld [vmem:[#allocation2 + $0x28] sm:$0xff]
      %v1122 = vld [vmem:[#allocation2 + $0x30] sm:$0xff]
      %v1123 = vld [vmem:[#allocation2 + $0x38] sm:$0xff]
      %v1124 = vld [vmem:[#allocation2 + $0x40] sm:$0xff]
      %v1125 = vld [vmem:[#allocation2 + $0x48] sm:$0xff]
      %v1126 = vld [vmem:[#allocation2 + $0x50] sm:$0xff]
      %v1127 = vld [vmem:[#allocation2 + $0x58] sm:$0xff]
      %v1128 = vld [vmem:[#allocation2 + $0x60] sm:$0xff]
      %v1129 = vld [vmem:[#allocation2 + $0x68] sm:$0xff]
      %v1130 = vld [vmem:[#allocation2 + $0x70] sm:$0xff]
      %v1131 = vld [vmem:[#allocation2 + $0x78] sm:$0xff]
      %v1132 = vld [vmem:[#allocation2 + $0x80] sm:$0xff]
      %v1133 = vld [vmem:[#allocation2 + $0x88] sm:$0xff]
      %v1134 = vld [vmem:[#allocation2 + $0x90] sm:$0xff]
      %v1135 = vld [vmem:[#allocation2 + $0x98] sm:$0xff]
      %v1136 = vld [vmem:[#allocation2 + $0xa0] sm:$0xff]
      %v1137 = vld [vmem:[#allocation2 + $0xa8] sm:$0xff]
      %v1138 = vld [vmem:[#allocation2 + $0xb0] sm:$0xff]
      %v1139 = vld [vmem:[#allocation2 + $0xb8] sm:$0xff]
      %v1140 = vld [vmem:[#allocation2 + $0xc0] sm:$0xff]
      %v1141 = vld [vmem:[%s7] sm:$0x1]
      %v1143 = vlaneseq
      %v1144 = vshrl.u32 %v1143, 7
      %v1145 = vsub.s32 0, %v1144
      %v1146 = vrot.slane %v1141, %v1145
      %v1148 = vadd.f32 %v1116, %v1146
      %v1149 = vadd.f32 %v1117, %v1146
      %v1150 = vadd.f32 %v1118, %v1146
      %v1151 = vadd.f32 %v1119, %v1146
      %v1152 = vadd.f32 %v1120, %v1146
      %v1153 = vadd.f32 %v1121, %v1146
      %v1154 = vadd.f32 %v1122, %v1146
      %v1155 = vadd.f32 %v1123, %v1146
      %v1156 = vadd.f32 %v1124, %v1146
      %v1157 = vadd.f32 %v1125, %v1146
      %v1158 = vadd.f32 %v1126, %v1146
      %v1159 = vadd.f32 %v1127, %v1146
      %v1160 = vadd.f32 %v1128, %v1146
      %v1161 = vadd.f32 %v1129, %v1146
      %v1162 = vadd.f32 %v1130, %v1146
      %v1163 = vadd.f32 %v1131, %v1146
      %v1164 = vadd.f32 %v1132, %v1146
      %v1165 = vadd.f32 %v1133, %v1146
      %v1166 = vadd.f32 %v1134, %v1146
      %v1167 = vadd.f32 %v1135, %v1146
      %v1168 = vadd.f32 %v1136, %v1146
      %v1169 = vadd.f32 %v1137, %v1146
      %v1170 = vadd.f32 %v1138, %v1146
      %v1171 = vadd.f32 %v1139, %v1146
      %v1172 = vadd.f32 %v1140, %v1146
      %1173 = vst [vmem:[#allocation15] sm:$0xff] %v1148
      %1174 = vst [vmem:[#allocation15 + $0x8] sm:$0xff] %v1149
      %1175 = vst [vmem:[#allocation15 + $0x10] sm:$0xff] %v1150
      %1176 = vst [vmem:[#allocation15 + $0x18] sm:$0xff] %v1151
      %1177 = vst [vmem:[#allocation15 + $0x20] sm:$0xff] %v1152
      %1178 = vst [vmem:[#allocation15 + $0x28] sm:$0xff] %v1153
      %1179 = vst [vmem:[#allocation15 + $0x30] sm:$0xff] %v1154
      %1180 = vst [vmem:[#allocation15 + $0x38] sm:$0xff] %v1155
      %1181 = vst [vmem:[#allocation15 + $0x40] sm:$0xff] %v1156
      %1182 = vst [vmem:[#allocation15 + $0x48] sm:$0xff] %v1157
      %1183 = vst [vmem:[#allocation15 + $0x50] sm:$0xff] %v1158
      %1184 = vst [vmem:[#allocation15 + $0x58] sm:$0xff] %v1159
      %1185 = vst [vmem:[#allocation15 + $0x60] sm:$0xff] %v1160
      %1186 = vst [vmem:[#allocation15 + $0x68] sm:$0xff] %v1161
      %1187 = vst [vmem:[#allocation15 + $0x70] sm:$0xff] %v1162
      %1188 = vst [vmem:[#allocation15 + $0x78] sm:$0xff] %v1163
      %1189 = vst [vmem:[#allocation15 + $0x80] sm:$0xff] %v1164
      %1190 = vst [vmem:[#allocation15 + $0x88] sm:$0xff] %v1165
      %1191 = vst [vmem:[#allocation15 + $0x90] sm:$0xff] %v1166
      %1192 = vst [vmem:[#allocation15 + $0x98] sm:$0xff] %v1167
      %1193 = vst [vmem:[#allocation15 + $0xa0] sm:$0xff] %v1168
      %1194 = vst [vmem:[#allocation15 + $0xa8] sm:$0xff] %v1169
      %1195 = vst [vmem:[#allocation15 + $0xb0] sm:$0xff] %v1170
      %1196 = vst [vmem:[#allocation15 + $0xb8] sm:$0xff] %v1171
      %1197 = vst [vmem:[#allocation15 + $0xc0] sm:$0xff] %v1172
    $region61: #{tpu_custom_call.1} parent=1 // pred_fallthru
      _
    // Predicated region
    $region62: #{tpu_custom_call.1} parent=1 // pred_check
      _
    $region63: #{tpu_custom_call.1} parent=1 // pred_check_branch
      %1199 = sbr.rel (0) target = $region65
    $region64: #{tpu_custom_call.1} parent=1 // pred_region
      %s1201 = ssub.s32 3200, 3200
      %1202 = vsyncadd [#allocation5], %s1201
      %s1203 = sshll.u32 [#allocation12], 4
      %s1204 = int_to_ptr.vmem [resolvable:$true] %s1203
      %1209 = dma.vmem_to_hbm [thread:$0]  %s1204, 3200, %s8, [#allocation5], 128, 128, 8
    $region65: #{tpu_custom_call.1} parent=1 // pred_fallthru
      _
    // Predicated region
    $region66: #{tpu_custom_call.1} parent=1 // pred_check
      _
    $region67: #{tpu_custom_call.1} parent=1 // pred_check_branch
      %1211 = sbr.rel (0) target = $region69
    $region68: #{tpu_custom_call.1} parent=1 // pred_region
      %s1213 = ssub.s32 3200, 3200
      %1214 = vsyncadd [#allocation14], %s1213
      %s1215 = sshll.u32 [#allocation13], 4
      %s1216 = int_to_ptr.vmem [resolvable:$true] %s1215
      %1221 = dma.vmem_to_hbm [thread:$0]  %s1216, 3200, %s9, [#allocation14], 128, 128, 8
    $region69: #{tpu_custom_call.1} parent=1 // pred_fallthru
      _
    // Predicated region
    $region70: #{tpu_custom_call.1} parent=1 // pred_check
      _
    $region71: #{tpu_custom_call.1} parent=1 // pred_check_branch
      %1223 = sbr.rel (0) target = $region73
    $region72: #{tpu_custom_call.1} parent=1 // pred_region
      %s1225 = ssub.s32 3200, 3200
      %1226 = vsyncadd [#allocation14], %s1225
      %s1227 = sshll.u32 [#allocation15], 4
      %s1228 = int_to_ptr.vmem [resolvable:$true] %s1227
      %1233 = dma.vmem_to_hbm [thread:$0]  %s1228, 3200, %s10, [#allocation14], 128, 128, 8
    $region73: #{tpu_custom_call.1} parent=1 // pred_fallthru
      _
    // Predicated region
    $region74: #{tpu_custom_call.1} parent=1 // pred_check
      _
    $region75: #{tpu_custom_call.1} parent=1 // pred_check_branch
      %1235 = sbr.rel (0) target = $region77
    $region76: #{tpu_custom_call.1} parent=1 // pred_region
      %1236 = dma.done [#allocation5], 3200
    $region77: #{tpu_custom_call.1} parent=1 // pred_fallthru
      _
    // Predicated region
    $region78: #{tpu_custom_call.1} parent=1 // pred_check
      _
    $region79: #{tpu_custom_call.1} parent=1 // pred_check_branch
      %1238 = sbr.rel (0) target = $region81
    $region80: #{tpu_custom_call.1} parent=1 // pred_region
      %1239 = dma.done [#allocation14], 3200
    $region81: #{tpu_custom_call.1} parent=1 // pred_fallthru
      _
    // Predicated region
    $region82: #{tpu_custom_call.1} parent=1 // pred_check
      _
    $region83: #{tpu_custom_call.1} parent=1 // pred_check_branch
      %1241 = sbr.rel (0) target = $region85
    $region84: #{tpu_custom_call.1} parent=1 // pred_region
      %1242 = dma.done [#allocation14], 3200
    $region85: #{tpu_custom_call.1} parent=1 // pred_fallthru
      _
    %1243 = vsyncpa [#allocation4], 1
    %1244 = vsyncpa [#allocation7], 1
    %1245 = vsyncpa [#allocation10], 1
    %1246 = vsyncpa [#allocation5], 1
    %1247 = vsyncpa [#allocation14], 1

// kernel: tpu_custom_call.1
$region0: #{tpu_custom_call.1}
  #allocation0 [shape = 'u32[]', space=smem, size = 0x4, offset = 0x4, fixed_abs, tag = 'smem constant byte address 0x4 - core index']
  #allocation1 [shape = 'u32[144,128]{1,0:T(1,128)}', space=vmem, size = 0x12000, scoped, tag = 'internal scratch']
  #allocation2 [shape = 'f32[200,128]{1,0:T(8,128)}', space=vmem, size = 0x19000, scoped, tag = 'scratch operand']
  %s0 = inlined_call_operand.hbm [shape: f32[200,128], index: 0, kind: input, shape index: {}]
  %s1 = inlined_call_operand.hbm [shape: f32[200,128], index: 1, kind: input, shape index: {}]
  %s2 = inlined_call_operand.hbm [shape: f32[128,128], index: 2, kind: input, shape index: {}]
  %s3 = inlined_call_operand.vmem [shape: f32[1,128], index: 3, kind: input, shape index: {}]
  %s4 = inlined_call_operand.hbm [shape: f32[128,128], index: 4, kind: input, shape index: {}]
  %s5 = inlined_call_operand.vmem [shape: f32[1,128], index: 5, kind: input, shape index: {}]
  %s6 = inlined_call_operand.hbm [shape: f32[128,128], index: 6, kind: input, shape index: {}]
  %s7 = inlined_call_operand.vmem [shape: f32[1,128], index: 7, kind: input, shape index: {}]
  %s8 = inlined_call_operand.hbm [shape: f32[200,128], index: 8, kind: output, shape index: {0}]
  %s9 = inlined_call_operand.hbm [shape: f32[200,128], index: 9, kind: output, shape index: {1}]
  %s10 = inlined_call_operand.hbm [shape: f32[200,128], index: 10, kind: output, shape index: {2}]
  %11 = xla_tuple %s8, %s9, %s10
  %s12 = sld [smem:[#allocation0]]
  $region86: #{tpu_custom_call.1} parent=0
    _
  %s14 = ssub.s32 1, %s12
  %s15 = scalar_select 0, %s14, %s12
  $region1: #{tpu_custom_call.1} parent=0
    #allocation3 [shape = 'u8[102400]{0}', space=vmem, size = 0x19000, scoped, tag = 'input window, operand 0, single buffered']
    #allocation4 [shape = 's32[1]{0}', space=sflag, size = 0x4, scoped, tag = 'scoped memory for tpu_custom_call.1']
    #allocation5 [shape = 's32[1]{0}', space=sflag, size = 0x4, scoped, tag = 'scoped memory for tpu_custom_call.1']
    #allocation6 [shape = 'u8[102400]{0}', space=vmem, size = 0x19000, scoped, tag = 'input window, operand 1, single buffered']
    #allocation7 [shape = 's32[1]{0}', space=sflag, size = 0x4, scoped, tag = 'scoped memory for tpu_custom_call.1']
    #allocation8 [shape = 'u8[65536]{0}', space=vmem, size = 0x10000, scoped, tag = 'input window, operand 2, single buffered']
    #allocation9 [shape = 'u8[65536]{0}', space=vmem, size = 0x10000, scoped, tag = 'input window, operand 4, single buffered']
    #allocation10 [shape = 's32[1]{0}', space=sflag, size = 0x4, scoped, tag = 'scoped memory for tpu_custom_call.1']
    #allocation11 [shape = 'u8[65536]{0}', space=vmem, size = 0x10000, scoped, tag = 'input window, operand 6, single buffered']
    #allocation12 [shape = 'u8[102400]{0}', space=vmem, size = 0x19000, scoped, tag = 'output window, operand 0, single buffered']
    #allocation13 [shape = 'u8[102400]{0}', space=vmem, size = 0x19000, scoped, tag = 'output window, operand 1, single buffered']
    #allocation14 [shape = 's32[1]{0}', space=sflag, size = 0x4, scoped, tag = 'scoped memory for tpu_custom_call.1']
    #allocation15 [shape = 'u8[102400]{0}', space=vmem, size = 0x19000, scoped, tag = 'output window, operand 2, single buffered']
    %16 = vsyncpa [#allocation4], 0
    %17 = vsyncpa [#allocation7], 0
    %18 = vsyncpa [#allocation10], 0
    %19 = vsyncpa [#allocation5], 0
    %20 = vsyncpa [#allocation14], 0
    // Predicated region
    $region2: #{tpu_custom_call.1} parent=1 // pred_check
      _
    $region3: #{tpu_custom_call.1} parent=1 // pred_check_branch
      %22 = sbr.rel (0) target = $region5
    $region4: #{tpu_custom_call.1} parent=1 // pred_region
      %s24 = ssub.s32 3200, 3200
      %25 = vsyncadd [#allocation4], %s24
      %s26 = sshll.u32 [#allocation3], 4
      %s27 = int_to_ptr.vmem [resolvable:$true] %s26
      %32 = dma.hbm_to_vmem [thread:$0]  %s0, 3200, %s27, [#allocation4], 128, 128, 8
    $region5: #{tpu_custom_call.1} parent=1 // pred_fallthru
      _
    // Predicated region
    $region6: #{tpu_custom_call.1} parent=1 // pred_check
      _
    $region7: #{tpu_custom_call.1} parent=1 // pred_check_branch
      %34 = sbr.rel (0) target = $region9
    $region8: #{tpu_custom_call.1} parent=1 // pred_region
      %s36 = ssub.s32 3200, 3200
      %37 = vsyncadd [#allocation7], %s36
      %s38 = sshll.u32 [#allocation6], 4
      %s39 = int_to_ptr.vmem [resolvable:$true] %s38
      %44 = dma.hbm_to_vmem [thread:$0]  %s1, 3200, %s39, [#allocation7], 128, 128, 8
    $region9: #{tpu_custom_call.1} parent=1 // pred_fallthru
      _
    // Predicated region
    $region10: #{tpu_custom_call.1} parent=1 // pred_check
      _
    $region11: #{tpu_custom_call.1} parent=1 // pred_check_branch
      %46 = sbr.rel (0) target = $region13
    $region12: #{tpu_custom_call.1} parent=1 // pred_region
      %s48 = ssub.s32 2048, 2048
      %49 = vsyncadd [#allocation7], %s48
      %s50 = sshll.u32 [#allocation8], 4
      %s51 = int_to_ptr.vmem [resolvable:$true] %s50
      %56 = dma.hbm_to_vmem [thread:$0]  %s2, 2048, %s51, [#allocation7], 128, 128, 8
    $region13: #{tpu_custom_call.1} parent=1 // pred_fallthru
      _
    // Predicated region
    $region14: #{tpu_custom_call.1} parent=1 // pred_check
      _
    $region15: #{tpu_custom_call.1} parent=1 // pred_check_branch
      %58 = sbr.rel (0) target = $region17
    $region16: #{tpu_custom_call.1} parent=1 // pred_region
      _
    $region17: #{tpu_custom_call.1} parent=1 // pred_fallthru
      _
    // Predicated region
    $region18: #{tpu_custom_call.1} parent=1 // pred_check
      _
    $region19: #{tpu_custom_call.1} parent=1 // pred_check_branch
      %60 = sbr.rel (0) target = $region21
    $region20: #{tpu_custom_call.1} parent=1 // pred_region
      %s62 = ssub.s32 2048, 2048
      %63 = vsyncadd [#allocation10], %s62
      %s64 = sshll.u32 [#allocation9], 4
      %s65 = int_to_ptr.vmem [resolvable:$true] %s64
      %70 = dma.hbm_to_vmem [thread:$0]  %s4, 2048, %s65, [#allocation10], 128, 128, 8
    $region21: #{tpu_custom_call.1} parent=1 // pred_fallthru
      _
    // Predicated region
    $region22: #{tpu_custom_call.1} parent=1 // pred_check
      _
    $region23: #{tpu_custom_call.1} parent=1 // pred_check_branch
      %72 = sbr.rel (0) target = $region25
    $region24: #{tpu_custom_call.1} parent=1 // pred_region
      _
    $region25: #{tpu_custom_call.1} parent=1 // pred_fallthru
      _
    // Predicated region
    $region26: #{tpu_custom_call.1} parent=1 // pred_check
      _
    $region27: #{tpu_custom_call.1} parent=1 // pred_check_branch
      %74 = sbr.rel (0) target = $region29
    $region28: #{tpu_custom_call.1} parent=1 // pred_region
      %s76 = ssub.s32 2048, 2048
      %77 = vsyncadd [#allocation10], %s76
      %s78 = sshll.u32 [#allocation11], 4
      %s79 = int_to_ptr.vmem [resolvable:$true] %s78
      %84 = dma.hbm_to_vmem [thread:$0]  %s6, 2048, %s79, [#allocation10], 128, 128, 8
    $region29: #{tpu_custom_call.1} parent=1 // pred_fallthru
      _
    // Predicated region
    $region30: #{tpu_custom_call.1} parent=1 // pred_check
      _
    $region31: #{tpu_custom_call.1} parent=1 // pred_check_branch
      %86 = sbr.rel (0) target = $region33
    $region32: #{tpu_custom_call.1} parent=1 // pred_region
      _
    $region33: #{tpu_custom_call.1} parent=1 // pred_fallthru
      _
    // Predicated region
    $region34: #{tpu_custom_call.1} parent=1 // pred_check
      _
    $region35: #{tpu_custom_call.1} parent=1 // pred_check_branch
      %88 = sbr.rel (0) target = $region37
    $region36: #{tpu_custom_call.1} parent=1 // pred_region
      %89 = dma.done [#allocation4], 3200
    $region37: #{tpu_custom_call.1} parent=1 // pred_fallthru
      _
    // Predicated region
    $region38: #{tpu_custom_call.1} parent=1 // pred_check
      _
    $region39: #{tpu_custom_call.1} parent=1 // pred_check_branch
      %91 = sbr.rel (0) target = $region41
    $region40: #{tpu_custom_call.1} parent=1 // pred_region
      %92 = dma.done [#allocation7], 3200
    $region41: #{tpu_custom_call.1} parent=1 // pred_fallthru
      _
    // Predicated region
    $region42: #{tpu_custom_call.1} parent=1 // pred_check
      _
    $region43: #{tpu_custom_call.1} parent=1 // pred_check_branch
      %94 = sbr.rel (0) target = $region45
    $region44: #{tpu_custom_call.1} parent=1 // pred_region
      %95 = dma.done [#allocation7], 2048
    $region45: #{tpu_custom_call.1} parent=1 // pred_fallthru
      _
    // Predicated region
    $region46: #{tpu_custom_call.1} parent=1 // pred_check
      _
    $region47: #{tpu_custom_call.1} parent=1 // pred_check_branch
      %97 = sbr.rel (0) target = $region49
    $region48: #{tpu_custom_call.1} parent=1 // pred_region
      %98 = dma.done [#allocation10], 2048
    $region49: #{tpu_custom_call.1} parent=1 // pred_fallthru
      _
    // Predicated region
    $region50: #{tpu_custom_call.1} parent=1 // pred_check
      _
    $region51: #{tpu_custom_call.1} parent=1 // pred_check_branch
      %100 = sbr.rel (0) target = $region53
    $region52: #{tpu_custom_call.1} parent=1 // pred_region
      %101 = dma.done [#allocation10], 2048
    $region53: #{tpu_custom_call.1} parent=1 // pred_fallthru
      _
    %p102 = scmp.eq.s32.totalorder 0, 0
    // Predicated region
    $region54: #{tpu_custom_call.1} parent=1 // pred_check
      %p103 = pneg %p102
    $region55: #{tpu_custom_call.1} parent=1 // pred_check_branch
      %105 = sbr.rel (%p103) target = $region57
    $region56: #{tpu_custom_call.1} parent=1 // pred_region
      %106 = vst [vmem:[#allocation2] sm:$0xff] 0.0
      %107 = vst [vmem:[#allocation2 + $0x8] sm:$0xff] 0.0
      %108 = vst [vmem:[#allocation2 + $0x10] sm:$0xff] 0.0
      %109 = vst [vmem:[#allocation2 + $0x18] sm:$0xff] 0.0
      %110 = vst [vmem:[#allocation2 + $0x20] sm:$0xff] 0.0
      %111 = vst [vmem:[#allocation2 + $0x28] sm:$0xff] 0.0
      %112 = vst [vmem:[#allocation2 + $0x30] sm:$0xff] 0.0
      %113 = vst [vmem:[#allocation2 + $0x38] sm:$0xff] 0.0
      %114 = vst [vmem:[#allocation2 + $0x40] sm:$0xff] 0.0
      %115 = vst [vmem:[#allocation2 + $0x48] sm:$0xff] 0.0
      %116 = vst [vmem:[#allocation2 + $0x50] sm:$0xff] 0.0
      %117 = vst [vmem:[#allocation2 + $0x58] sm:$0xff] 0.0
      %118 = vst [vmem:[#allocation2 + $0x60] sm:$0xff] 0.0
      %119 = vst [vmem:[#allocation2 + $0x68] sm:$0xff] 0.0
      %120 = vst [vmem:[#allocation2 + $0x70] sm:$0xff] 0.0
      %121 = vst [vmem:[#allocation2 + $0x78] sm:$0xff] 0.0
      %122 = vst [vmem:[#allocation2 + $0x80] sm:$0xff] 0.0
      %123 = vst [vmem:[#allocation2 + $0x88] sm:$0xff] 0.0
      %124 = vst [vmem:[#allocation2 + $0x90] sm:$0xff] 0.0
      %125 = vst [vmem:[#allocation2 + $0x98] sm:$0xff] 0.0
      %126 = vst [vmem:[#allocation2 + $0xa0] sm:$0xff] 0.0
      %127 = vst [vmem:[#allocation2 + $0xa8] sm:$0xff] 0.0
      %128 = vst [vmem:[#allocation2 + $0xb0] sm:$0xff] 0.0
      %129 = vst [vmem:[#allocation2 + $0xb8] sm:$0xff] 0.0
      %130 = vst [vmem:[#allocation2 + $0xc0] sm:$0xff] 0.0
    $region57: #{tpu_custom_call.1} parent=1 // pred_fallthru
      _
    %v131 = vld [vmem:[#allocation3] sm:$0xff]
    %v132 = vld [vmem:[#allocation3 + $0x8] sm:$0xff]
    %v133 = vld [vmem:[#allocation3 + $0x10] sm:$0xff]
    %v134 = vld [vmem:[#allocation3 + $0x18] sm:$0xff]
    %v135 = vld [vmem:[#allocation3 + $0x20] sm:$0xff]
    %v136 = vld [vmem:[#allocation3 + $0x28] sm:$0xff]
    %v137 = vld [vmem:[#allocation3 + $0x30] sm:$0xff]
    %v138 = vld [vmem:[#allocation3 + $0x38] sm:$0xff]
    %v139 = vld [vmem:[#allocation3 + $0x40] sm:$0xff]
    %v140 = vld [vmem:[#allocation3 + $0x48] sm:$0xff]
    %v141 = vld [vmem:[#allocation3 + $0x50] sm:$0xff]
    %v142 = vld [vmem:[#allocation3 + $0x58] sm:$0xff]
    %v143 = vld [vmem:[#allocation3 + $0x60] sm:$0xff]
    %v144 = vld [vmem:[#allocation3 + $0x68] sm:$0xff]
    %v145 = vld [vmem:[#allocation3 + $0x70] sm:$0xff]
    %v146 = vld [vmem:[#allocation3 + $0x78] sm:$0xff]
    %v147 = vld [vmem:[#allocation3 + $0x80] sm:$0xff]
    %v148 = vld [vmem:[#allocation3 + $0x88] sm:$0xff]
    %v149 = vld [vmem:[#allocation3 + $0x90] sm:$0xff]
    %v150 = vld [vmem:[#allocation3 + $0x98] sm:$0xff]
    %v151 = vld [vmem:[#allocation3 + $0xa0] sm:$0xff]
    %v152 = vld [vmem:[#allocation3 + $0xa8] sm:$0xff]
    %v153 = vld [vmem:[#allocation3 + $0xb0] sm:$0xff]
    %v154 = vld [vmem:[#allocation3 + $0xb8] sm:$0xff]
    %v155 = vld [vmem:[#allocation3 + $0xc0] sm:$0xff]
    %v156 = vld [vmem:[#allocation6] sm:$0xff]
    %v157 = vld [vmem:[#allocation6 + $0x8] sm:$0xff]
    %v158 = vld [vmem:[#allocation6 + $0x10] sm:$0xff]
    %v159 = vld [vmem:[#allocation6 + $0x18] sm:$0xff]
    %v160 = vld [vmem:[#allocation6 + $0x20] sm:$0xff]
    %v161 = vld [vmem:[#allocation6 + $0x28] sm:$0xff]
    %v162 = vld [vmem:[#allocation6 + $0x30] sm:$0xff]
    %v163 = vld [vmem:[#allocation6 + $0x38] sm:$0xff]
    %v164 = vld [vmem:[#allocation6 + $0x40] sm:$0xff]
    %v165 = vld [vmem:[#allocation6 + $0x48] sm:$0xff]
    %v166 = vld [vmem:[#allocation6 + $0x50] sm:$0xff]
    %v167 = vld [vmem:[#allocation6 + $0x58] sm:$0xff]
    %v168 = vld [vmem:[#allocation6 + $0x60] sm:$0xff]
    %v169 = vld [vmem:[#allocation6 + $0x68] sm:$0xff]
    %v170 = vld [vmem:[#allocation6 + $0x70] sm:$0xff]
    %v171 = vld [vmem:[#allocation6 + $0x78] sm:$0xff]
    %v172 = vld [vmem:[#allocation6 + $0x80] sm:$0xff]
    %v173 = vld [vmem:[#allocation6 + $0x88] sm:$0xff]
    %v174 = vld [vmem:[#allocation6 + $0x90] sm:$0xff]
    %v175 = vld [vmem:[#allocation6 + $0x98] sm:$0xff]
    %v176 = vld [vmem:[#allocation6 + $0xa0] sm:$0xff]
    %v177 = vld [vmem:[#allocation6 + $0xa8] sm:$0xff]
    %v178 = vld [vmem:[#allocation6 + $0xb0] sm:$0xff]
    %v179 = vld [vmem:[#allocation6 + $0xb8] sm:$0xff]
    %v180 = vld [vmem:[#allocation6 + $0xc0] sm:$0xff]
    %v181 = vld [vmem:[#allocation8] sm:$0xff]
    %v182 = vld [vmem:[#allocation8 + $0x8] sm:$0xff]
    %v183 = vld [vmem:[#allocation8 + $0x10] sm:$0xff]
    %v184 = vld [vmem:[#allocation8 + $0x18] sm:$0xff]
    %v185 = vld [vmem:[#allocation8 + $0x20] sm:$0xff]
    %v186 = vld [vmem:[#allocation8 + $0x28] sm:$0xff]
    %v187 = vld [vmem:[#allocation8 + $0x30] sm:$0xff]
    %v188 = vld [vmem:[#allocation8 + $0x38] sm:$0xff]
    %v189 = vld [vmem:[#allocation8 + $0x40] sm:$0xff]
    %v190 = vld [vmem:[#allocation8 + $0x48] sm:$0xff]
    %v191 = vld [vmem:[#allocation8 + $0x50] sm:$0xff]
    %v192 = vld [vmem:[#allocation8 + $0x58] sm:$0xff]
    %v193 = vld [vmem:[#allocation8 + $0x60] sm:$0xff]
    %v194 = vld [vmem:[#allocation8 + $0x68] sm:$0xff]
    %v195 = vld [vmem:[#allocation8 + $0x70] sm:$0xff]
    %v196 = vld [vmem:[#allocation8 + $0x78] sm:$0xff]
    %v197 = vld [vmem:[%s3] sm:$0x1]
    %v199 = vlaneseq
    %v200 = vshrl.u32 %v199, 7
    %v201 = vsub.s32 0, %v200
    %v202 = vrot.slane %v197, %v201
    %204 = vmatprep.subr.mxu0 0.0
    %205 = vmatpush1.msra.mxu0 %v181
    %206 = vmatprep.subr.mxu0 0.0
    %207 = vmatpush1.msra.mxu0 %v182
    %208 = vmatprep.subr.mxu0 0.0
    %209 = vmatpush1.msra.mxu0 %v183
    %210 = vmatprep.subr.mxu0 0.0
    %211 = vmatpush1.msra.mxu0 %v184
    %212 = vmatprep.subr.mxu0 0.0
    %213 = vmatpush1.msra.mxu0 %v185
    %214 = vmatprep.subr.mxu0 0.0
    %215 = vmatpush1.msra.mxu0 %v186
    %216 = vmatprep.subr.mxu0 0.0
    %217 = vmatpush1.msra.mxu0 %v187
    %218 = vmatprep.subr.mxu0 0.0
    %219 = vmatpush1.msra.mxu0 %v188
    %220 = vmatprep.subr.mxu0 0.0
    %221 = vmatpush1.msra.mxu0 %v189
    %222 = vmatprep.subr.mxu0 0.0
    %223 = vmatpush1.msra.mxu0 %v190
    %224 = vmatprep.subr.mxu0 0.0
    %225 = vmatpush1.msra.mxu0 %v191
    %226 = vmatprep.subr.mxu0 0.0
    %227 = vmatpush1.msra.mxu0 %v192
    %228 = vmatprep.subr.mxu0 0.0
    %229 = vmatpush1.msra.mxu0 %v193
    %230 = vmatprep.subr.mxu0 0.0
    %231 = vmatpush1.msra.mxu0 %v194
    %232 = vmatprep.subr.mxu0 0.0
    %233 = vmatpush1.msra.mxu0 %v195
    %234 = vmatprep.subr.mxu0 0.0
    %235 = vmatpush1.msra.mxu0 %v196
    %236 = vmatprep.subr.mxu0 0.0
    %237 = vmatpush1.msra.mxu0 0.0
    %238 = vmatprep.subr.mxu0 0.0
    %239 = vmatpush1.msra.mxu0 0.0
    %240 = vmatprep.subr.mxu0 0.0
    %241 = vmatpush1.msra.mxu0 0.0
    %242 = vmatprep.subr.mxu0 0.0
    %243 = vmatpush1.msra.mxu0 0.0
    %244 = vmatprep.subr.mxu0 0.0
    %245 = vmatpush1.msra.mxu0 0.0
    %246 = vmatprep.subr.mxu0 0.0
    %247 = vmatpush1.msra.mxu0 0.0
    %248 = vmatprep.subr.mxu0 0.0
    %249 = vmatpush1.msra.mxu0 0.0
    %250 = vmatprep.subr.mxu0 0.0
    %251 = vmatpush1.msra.mxu0 0.0
    %252 = vmatprep.subr.mxu0 0.0
    %253 = vmatpush1.msra.mxu0 0.0
    %254 = vmatprep.subr.mxu0 0.0
    %255 = vmatpush1.msra.mxu0 0.0
    %256 = vmatprep.subr.mxu0 0.0
    %257 = vmatpush1.msra.mxu0 0.0
    %258 = vmatprep.subr.mxu0 0.0
    %259 = vmatpush1.msra.mxu0 0.0
    %260 = vmatprep.subr.mxu0 0.0
    %261 = vmatpush1.msra.mxu0 0.0
    %262 = vmatprep.subr.mxu0 0.0
    %263 = vmatpush1.msra.mxu0 0.0
    %264 = vmatprep.subr.mxu0 0.0
    %265 = vmatpush1.msra.mxu0 0.0
    %266 = vmatprep.subr.mxu0 0.0
    %267 = vmatpush1.msra.mxu0 0.0
    %268 = vmatprep.mubr.f32.mxu0 0.0
    %269 = vmatmul.mubr.f32.gmra.mrb[0].mxu0 %v131
    %v270 = vpop.f32.mrb[0].mxu0
    %v271 = vadd.f32 %v202, %v270
    %v272 = vpop.f32.mrb[0].mxu0
    %273 = vmatprep.mubr.f32.mxu0 0.0
    %274 = vmatmul.mubr.f32.gmra.mrb[0].mxu0 %v132
    %v275 = vpop.f32.mrb[0].mxu0
    %v276 = vadd.f32 %v202, %v275
    %v277 = vpop.f32.mrb[0].mxu0
    %278 = vmatprep.mubr.f32.mxu0 0.0
    %279 = vmatmul.mubr.f32.gmra.mrb[0].mxu0 %v133
    %v280 = vpop.f32.mrb[0].mxu0
    %v281 = vadd.f32 %v202, %v280
    %v282 = vpop.f32.mrb[0].mxu0
    %283 = vmatprep.mubr.f32.mxu0 0.0
    %284 = vmatmul.mubr.f32.gmra.mrb[0].mxu0 %v134
    %v285 = vpop.f32.mrb[0].mxu0
    %v286 = vadd.f32 %v202, %v285
    %v287 = vpop.f32.mrb[0].mxu0
    %288 = vmatprep.mubr.f32.mxu0 0.0
    %289 = vmatmul.mubr.f32.gmra.mrb[0].mxu0 %v135
    %v290 = vpop.f32.mrb[0].mxu0
    %v291 = vadd.f32 %v202, %v290
    %v292 = vpop.f32.mrb[0].mxu0
    %293 = vmatprep.mubr.f32.mxu0 0.0
    %294 = vmatmul.mubr.f32.gmra.mrb[0].mxu0 %v136
    %v295 = vpop.f32.mrb[0].mxu0
    %v296 = vadd.f32 %v202, %v295
    %v297 = vpop.f32.mrb[0].mxu0
    %298 = vmatprep.mubr.f32.mxu0 0.0
    %299 = vmatmul.mubr.f32.gmra.mrb[0].mxu0 %v137
    %v300 = vpop.f32.mrb[0].mxu0
    %v301 = vadd.f32 %v202, %v300
    %v302 = vpop.f32.mrb[0].mxu0
    %303 = vmatprep.mubr.f32.mxu0 0.0
    %304 = vmatmul.mubr.f32.gmra.mrb[0].mxu0 %v138
    %v305 = vpop.f32.mrb[0].mxu0
    %v306 = vadd.f32 %v202, %v305
    %v307 = vpop.f32.mrb[0].mxu0
    %308 = vmatprep.mubr.f32.mxu0 0.0
    %309 = vmatmul.mubr.f32.gmra.mrb[0].mxu0 %v139
    %v310 = vpop.f32.mrb[0].mxu0
    %v311 = vadd.f32 %v202, %v310
    %v312 = vpop.f32.mrb[0].mxu0
    %313 = vmatprep.mubr.f32.mxu0 0.0
    %314 = vmatmul.mubr.f32.gmra.mrb[0].mxu0 %v140
    %v315 = vpop.f32.mrb[0].mxu0
    %v316 = vadd.f32 %v202, %v315
    %v317 = vpop.f32.mrb[0].mxu0
    %318 = vmatprep.mubr.f32.mxu0 0.0
    %319 = vmatmul.mubr.f32.gmra.mrb[0].mxu0 %v141
    %v320 = vpop.f32.mrb[0].mxu0
    %v321 = vadd.f32 %v202, %v320
    %v322 = vpop.f32.mrb[0].mxu0
    %323 = vmatprep.mubr.f32.mxu0 0.0
    %324 = vmatmul.mubr.f32.gmra.mrb[0].mxu0 %v142
    %v325 = vpop.f32.mrb[0].mxu0
    %v326 = vadd.f32 %v202, %v325
    %v327 = vpop.f32.mrb[0].mxu0
    %328 = vmatprep.mubr.f32.mxu0 0.0
    %329 = vmatmul.mubr.f32.gmra.mrb[0].mxu0 %v143
    %v330 = vpop.f32.mrb[0].mxu0
    %v331 = vadd.f32 %v202, %v330
    %v332 = vpop.f32.mrb[0].mxu0
    %333 = vmatprep.mubr.f32.mxu0 0.0
    %334 = vmatmul.mubr.f32.gmra.mrb[0].mxu0 %v144
    %v335 = vpop.f32.mrb[0].mxu0
    %v336 = vadd.f32 %v202, %v335
    %v337 = vpop.f32.mrb[0].mxu0
    %338 = vmatprep.mubr.f32.mxu0 0.0
    %339 = vmatmul.mubr.f32.gmra.mrb[0].mxu0 %v145
    %v340 = vpop.f32.mrb[0].mxu0
    %v341 = vadd.f32 %v202, %v340
    %v342 = vpop.f32.mrb[0].mxu0
    %343 = vmatprep.mubr.f32.mxu0 0.0
    %344 = vmatmul.mubr.f32.gmra.mrb[0].mxu0 %v146
    %v345 = vpop.f32.mrb[0].mxu0
    %v346 = vadd.f32 %v202, %v345
    %v347 = vpop.f32.mrb[0].mxu0
    %348 = vmatprep.mubr.f32.mxu0 0.0
    %349 = vmatmul.mubr.f32.gmra.mrb[0].mxu0 %v147
    %v350 = vpop.f32.mrb[0].mxu0
    %v351 = vadd.f32 %v202, %v350
    %v352 = vpop.f32.mrb[0].mxu0
    %353 = vmatprep.mubr.f32.mxu0 0.0
    %354 = vmatmul.mubr.f32.gmra.mrb[0].mxu0 %v148
    %v355 = vpop.f32.mrb[0].mxu0
    %v356 = vadd.f32 %v202, %v355
    %v357 = vpop.f32.mrb[0].mxu0
    %358 = vmatprep.mubr.f32.mxu0 0.0
    %359 = vmatmul.mubr.f32.gmra.mrb[0].mxu0 %v149
    %v360 = vpop.f32.mrb[0].mxu0
    %v361 = vadd.f32 %v202, %v360
    %v362 = vpop.f32.mrb[0].mxu0
    %363 = vmatprep.mubr.f32.mxu0 0.0
    %364 = vmatmul.mubr.f32.gmra.mrb[0].mxu0 %v150
    %v365 = vpop.f32.mrb[0].mxu0
    %v366 = vadd.f32 %v202, %v365
    %v367 = vpop.f32.mrb[0].mxu0
    %368 = vmatprep.mubr.f32.mxu0 0.0
    %369 = vmatmul.mubr.f32.gmra.mrb[0].mxu0 %v151
    %v370 = vpop.f32.mrb[0].mxu0
    %v371 = vadd.f32 %v202, %v370
    %v372 = vpop.f32.mrb[0].mxu0
    %373 = vmatprep.mubr.f32.mxu0 0.0
    %374 = vmatmul.mubr.f32.gmra.mrb[0].mxu0 %v152
    %v375 = vpop.f32.mrb[0].mxu0
    %v376 = vadd.f32 %v202, %v375
    %v377 = vpop.f32.mrb[0].mxu0
    %378 = vmatprep.mubr.f32.mxu0 0.0
    %379 = vmatmul.mubr.f32.gmra.mrb[0].mxu0 %v153
    %v380 = vpop.f32.mrb[0].mxu0
    %v381 = vadd.f32 %v202, %v380
    %v382 = vpop.f32.mrb[0].mxu0
    %383 = vmatprep.mubr.f32.mxu0 0.0
    %384 = vmatmul.mubr.f32.gmra.mrb[0].mxu0 %v154
    %v385 = vpop.f32.mrb[0].mxu0
    %v386 = vadd.f32 %v202, %v385
    %v387 = vpop.f32.mrb[0].mxu0
    %388 = vmatprep.mubr.f32.mxu0 0.0
    %389 = vmatmul.mubr.f32.gmra.mrb[0].mxu0 %v155
    %v390 = vpop.f32.mrb[0].mxu0
    %v391 = vadd.f32 %v202, %v390
    %v392 = vpop.f32.mrb[0].mxu0
    %393 = vdwg.mxu0
    %v394 = vld [vmem:[#allocation9] sm:$0xff]
    %v395 = vld [vmem:[#allocation9 + $0x8] sm:$0xff]
    %v396 = vld [vmem:[#allocation9 + $0x10] sm:$0xff]
    %v397 = vld [vmem:[#allocation9 + $0x18] sm:$0xff]
    %v398 = vld [vmem:[#allocation9 + $0x20] sm:$0xff]
    %v399 = vld [vmem:[#allocation9 + $0x28] sm:$0xff]
    %v400 = vld [vmem:[#allocation9 + $0x30] sm:$0xff]
    %v401 = vld [vmem:[#allocation9 + $0x38] sm:$0xff]
    %v402 = vld [vmem:[#allocation9 + $0x40] sm:$0xff]
    %v403 = vld [vmem:[#allocation9 + $0x48] sm:$0xff]
    %v404 = vld [vmem:[#allocation9 + $0x50] sm:$0xff]
    %v405 = vld [vmem:[#allocation9 + $0x58] sm:$0xff]
    %v406 = vld [vmem:[#allocation9 + $0x60] sm:$0xff]
    %v407 = vld [vmem:[#allocation9 + $0x68] sm:$0xff]
    %v408 = vld [vmem:[#allocation9 + $0x70] sm:$0xff]
    %v409 = vld [vmem:[#allocation9 + $0x78] sm:$0xff]
    %v410 = vld [vmem:[%s5] sm:$0x1]
    %v412 = vlaneseq
    %v413 = vshrl.u32 %v412, 7
    %v414 = vsub.s32 0, %v413
    %v415 = vrot.slane %v410, %v414
    %417 = vmatprep.subr.mxu0 0.0
    %418 = vmatpush1.msra.mxu0 %v394
    %419 = vmatprep.subr.mxu0 0.0
    %420 = vmatpush1.msra.mxu0 %v395
    %421 = vmatprep.subr.mxu0 0.0
    %422 = vmatpush1.msra.mxu0 %v396
    %423 = vmatprep.subr.mxu0 0.0
    %424 = vmatpush1.msra.mxu0 %v397
    %425 = vmatprep.subr.mxu0 0.0
    %426 = vmatpush1.msra.mxu0 %v398
    %427 = vmatprep.subr.mxu0 0.0
    %428 = vmatpush1.msra.mxu0 %v399
    %429 = vmatprep.subr.mxu0 0.0
    %430 = vmatpush1.msra.mxu0 %v400
    %431 = vmatprep.subr.mxu0 0.0
    %432 = vmatpush1.msra.mxu0 %v401
    %433 = vmatprep.subr.mxu0 0.0
    %434 = vmatpush1.msra.mxu0 %v402
    %435 = vmatprep.subr.mxu0 0.0
    %436 = vmatpush1.msra.mxu0 %v403
    %437 = vmatprep.subr.mxu0 0.0
    %438 = vmatpush1.msra.mxu0 %v404
    %439 = vmatprep.subr.mxu0 0.0
    %440 = vmatpush1.msra.mxu0 %v405
    %441 = vmatprep.subr.mxu0 0.0
    %442 = vmatpush1.msra.mxu0 %v406
    %443 = vmatprep.subr.mxu0 0.0
    %444 = vmatpush1.msra.mxu0 %v407
    %445 = vmatprep.subr.mxu0 0.0
    %446 = vmatpush1.msra.mxu0 %v408
    %447 = vmatprep.subr.mxu0 0.0
    %448 = vmatpush1.msra.mxu0 %v409
    %449 = vmatprep.subr.mxu0 0.0
    %450 = vmatpush1.msra.mxu0 0.0
    %451 = vmatprep.subr.mxu0 0.0
    %452 = vmatpush1.msra.mxu0 0.0
    %453 = vmatprep.subr.mxu0 0.0
    %454 = vmatpush1.msra.mxu0 0.0
    %455 = vmatprep.subr.mxu0 0.0
    %456 = vmatpush1.msra.mxu0 0.0
    %457 = vmatprep.subr.mxu0 0.0
    %458 = vmatpush1.msra.mxu0 0.0
    %459 = vmatprep.subr.mxu0 0.0
    %460 = vmatpush1.msra.mxu0 0.0
    %461 = vmatprep.subr.mxu0 0.0
    %462 = vmatpush1.msra.mxu0 0.0
    %463 = vmatprep.subr.mxu0 0.0
    %464 = vmatpush1.msra.mxu0 0.0
    %465 = vmatprep.subr.mxu0 0.0
    %466 = vmatpush1.msra.mxu0 0.0
    %467 = vmatprep.subr.mxu0 0.0
    %468 = vmatpush1.msra.mxu0 0.0
    %469 = vmatprep.subr.mxu0 0.0
    %470 = vmatpush1.msra.mxu0 0.0
    %471 = vmatprep.subr.mxu0 0.0
    %472 = vmatpush1.msra.mxu0 0.0
    %473 = vmatprep.subr.mxu0 0.0
    %474 = vmatpush1.msra.mxu0 0.0
    %475 = vmatprep.subr.mxu0 0.0
    %476 = vmatpush1.msra.mxu0 0.0
    %477 = vmatprep.subr.mxu0 0.0
    %478 = vmatpush1.msra.mxu0 0.0
    %479 = vmatprep.subr.mxu0 0.0
    %480 = vmatpush1.msra.mxu0 0.0
    %481 = vmatprep.mubr.f32.mxu0 0.0
    %482 = vmatmul.mubr.f32.gmra.mrb[0].mxu0 %v156
    %v483 = vpop.f32.mrb[0].mxu0
    %v484 = vadd.f32 %v415, %v483
    %v485 = vpop.f32.mrb[0].mxu0
    %486 = vmatprep.mubr.f32.mxu0 0.0
    %487 = vmatmul.mubr.f32.gmra.mrb[0].mxu0 %v157
    %v488 = vpop.f32.mrb[0].mxu0
    %v489 = vadd.f32 %v415, %v488
    %v490 = vpop.f32.mrb[0].mxu0
    %491 = vmatprep.mubr.f32.mxu0 0.0
    %492 = vmatmul.mubr.f32.gmra.mrb[0].mxu0 %v158
    %v493 = vpop.f32.mrb[0].mxu0
    %v494 = vadd.f32 %v415, %v493
    %v495 = vpop.f32.mrb[0].mxu0
    %496 = vmatprep.mubr.f32.mxu0 0.0
    %497 = vmatmul.mubr.f32.gmra.mrb[0].mxu0 %v159
    %v498 = vpop.f32.mrb[0].mxu0
    %v499 = vadd.f32 %v415, %v498
    %v500 = vpop.f32.mrb[0].mxu0
    %501 = vmatprep.mubr.f32.mxu0 0.0
    %502 = vmatmul.mubr.f32.gmra.mrb[0].mxu0 %v160
    %v503 = vpop.f32.mrb[0].mxu0
    %v504 = vadd.f32 %v415, %v503
    %v505 = vpop.f32.mrb[0].mxu0
    %506 = vmatprep.mubr.f32.mxu0 0.0
    %507 = vmatmul.mubr.f32.gmra.mrb[0].mxu0 %v161
    %v508 = vpop.f32.mrb[0].mxu0
    %v509 = vadd.f32 %v415, %v508
    %v510 = vpop.f32.mrb[0].mxu0
    %511 = vmatprep.mubr.f32.mxu0 0.0
    %512 = vmatmul.mubr.f32.gmra.mrb[0].mxu0 %v162
    %v513 = vpop.f32.mrb[0].mxu0
    %v514 = vadd.f32 %v415, %v513
    %v515 = vpop.f32.mrb[0].mxu0
    %516 = vmatprep.mubr.f32.mxu0 0.0
    %517 = vmatmul.mubr.f32.gmra.mrb[0].mxu0 %v163
    %v518 = vpop.f32.mrb[0].mxu0
    %v519 = vadd.f32 %v415, %v518
    %v520 = vpop.f32.mrb[0].mxu0
    %521 = vmatprep.mubr.f32.mxu0 0.0
    %522 = vmatmul.mubr.f32.gmra.mrb[0].mxu0 %v164
    %v523 = vpop.f32.mrb[0].mxu0
    %v524 = vadd.f32 %v415, %v523
    %v525 = vpop.f32.mrb[0].mxu0
    %526 = vmatprep.mubr.f32.mxu0 0.0
    %527 = vmatmul.mubr.f32.gmra.mrb[0].mxu0 %v165
    %v528 = vpop.f32.mrb[0].mxu0
    %v529 = vadd.f32 %v415, %v528
    %v530 = vpop.f32.mrb[0].mxu0
    %531 = vmatprep.mubr.f32.mxu0 0.0
    %532 = vmatmul.mubr.f32.gmra.mrb[0].mxu0 %v166
    %v533 = vpop.f32.mrb[0].mxu0
    %v534 = vadd.f32 %v415, %v533
    %v535 = vpop.f32.mrb[0].mxu0
    %536 = vmatprep.mubr.f32.mxu0 0.0
    %537 = vmatmul.mubr.f32.gmra.mrb[0].mxu0 %v167
    %v538 = vpop.f32.mrb[0].mxu0
    %v539 = vadd.f32 %v415, %v538
    %v540 = vpop.f32.mrb[0].mxu0
    %541 = vmatprep.mubr.f32.mxu0 0.0
    %542 = vmatmul.mubr.f32.gmra.mrb[0].mxu0 %v168
    %v543 = vpop.f32.mrb[0].mxu0
    %v544 = vadd.f32 %v415, %v543
    %v545 = vpop.f32.mrb[0].mxu0
    %546 = vmatprep.mubr.f32.mxu0 0.0
    %547 = vmatmul.mubr.f32.gmra.mrb[0].mxu0 %v169
    %v548 = vpop.f32.mrb[0].mxu0
    %v549 = vadd.f32 %v415, %v548
    %v550 = vpop.f32.mrb[0].mxu0
    %551 = vmatprep.mubr.f32.mxu0 0.0
    %552 = vmatmul.mubr.f32.gmra.mrb[0].mxu0 %v170
    %v553 = vpop.f32.mrb[0].mxu0
    %v554 = vadd.f32 %v415, %v553
    %v555 = vpop.f32.mrb[0].mxu0
    %556 = vmatprep.mubr.f32.mxu0 0.0
    %557 = vmatmul.mubr.f32.gmra.mrb[0].mxu0 %v171
    %v558 = vpop.f32.mrb[0].mxu0
    %v559 = vadd.f32 %v415, %v558
    %v560 = vpop.f32.mrb[0].mxu0
    %561 = vmatprep.mubr.f32.mxu0 0.0
    %562 = vmatmul.mubr.f32.gmra.mrb[0].mxu0 %v172
    %v563 = vpop.f32.mrb[0].mxu0
    %v564 = vadd.f32 %v415, %v563
    %v565 = vpop.f32.mrb[0].mxu0
    %566 = vmatprep.mubr.f32.mxu0 0.0
    %567 = vmatmul.mubr.f32.gmra.mrb[0].mxu0 %v173
    %v568 = vpop.f32.mrb[0].mxu0
    %v569 = vadd.f32 %v415, %v568
    %v570 = vpop.f32.mrb[0].mxu0
    %571 = vmatprep.mubr.f32.mxu0 0.0
    %572 = vmatmul.mubr.f32.gmra.mrb[0].mxu0 %v174
    %v573 = vpop.f32.mrb[0].mxu0
    %v574 = vadd.f32 %v415, %v573
    %v575 = vpop.f32.mrb[0].mxu0
    %576 = vmatprep.mubr.f32.mxu0 0.0
    %577 = vmatmul.mubr.f32.gmra.mrb[0].mxu0 %v175
    %v578 = vpop.f32.mrb[0].mxu0
    %v579 = vadd.f32 %v415, %v578
    %v580 = vpop.f32.mrb[0].mxu0
    %581 = vmatprep.mubr.f32.mxu0 0.0
    %582 = vmatmul.mubr.f32.gmra.mrb[0].mxu0 %v176
    %v583 = vpop.f32.mrb[0].mxu0
    %v584 = vadd.f32 %v415, %v583
    %v585 = vpop.f32.mrb[0].mxu0
    %586 = vmatprep.mubr.f32.mxu0 0.0
    %587 = vmatmul.mubr.f32.gmra.mrb[0].mxu0 %v177
    %v588 = vpop.f32.mrb[0].mxu0
    %v589 = vadd.f32 %v415, %v588
    %v590 = vpop.f32.mrb[0].mxu0
    %591 = vmatprep.mubr.f32.mxu0 0.0
    %592 = vmatmul.mubr.f32.gmra.mrb[0].mxu0 %v178
    %v593 = vpop.f32.mrb[0].mxu0
    %v594 = vadd.f32 %v415, %v593
    %v595 = vpop.f32.mrb[0].mxu0
    %596 = vmatprep.mubr.f32.mxu0 0.0
    %597 = vmatmul.mubr.f32.gmra.mrb[0].mxu0 %v179
    %v598 = vpop.f32.mrb[0].mxu0
    %v599 = vadd.f32 %v415, %v598
    %v600 = vpop.f32.mrb[0].mxu0
    %601 = vmatprep.mubr.f32.mxu0 0.0
    %602 = vmatmul.mubr.f32.gmra.mrb[0].mxu0 %v180
    %v603 = vpop.f32.mrb[0].mxu0
    %v604 = vadd.f32 %v415, %v603
    %v605 = vpop.f32.mrb[0].mxu0
    %606 = vdwg.mxu0
    %v607 = vxor.u32 %v271, 2147483648
    %v608 = vxor.u32 %v276, 2147483648
    %v609 = vxor.u32 %v281, 2147483648
    %v610 = vxor.u32 %v286, 2147483648
    %v611 = vxor.u32 %v291, 2147483648
    %v612 = vxor.u32 %v296, 2147483648
    %v613 = vxor.u32 %v301, 2147483648
    %v614 = vxor.u32 %v306, 2147483648
    %v615 = vxor.u32 %v311, 2147483648
    %v616 = vxor.u32 %v316, 2147483648
    %v617 = vxor.u32 %v321, 2147483648
    %v618 = vxor.u32 %v326, 2147483648
    %v619 = vxor.u32 %v331, 2147483648
    %v620 = vxor.u32 %v336, 2147483648
    %v621 = vxor.u32 %v341, 2147483648
    %v622 = vxor.u32 %v346, 2147483648
    %v623 = vxor.u32 %v351, 2147483648
    %v624 = vxor.u32 %v356, 2147483648
    %v625 = vxor.u32 %v361, 2147483648
    %v626 = vxor.u32 %v366, 2147483648
    %v627 = vxor.u32 %v371, 2147483648
    %v628 = vxor.u32 %v376, 2147483648
    %v629 = vxor.u32 %v381, 2147483648
    %v630 = vxor.u32 %v386, 2147483648
    %v631 = vxor.u32 %v391, 2147483648
    %v632 = vmul.f32 %v607, 1.442695
    %v633 = vpow.pop %v632
    %v634 = vmul.f32 %v608, 1.442695
    %v635 = vpow.pop %v634
    %v636 = vmul.f32 %v609, 1.442695
    %v637 = vpow.pop %v636
    %v638 = vmul.f32 %v610, 1.442695
    %v639 = vpow.pop %v638
    %v640 = vmul.f32 %v611, 1.442695
    %v641 = vpow.pop %v640
    %v642 = vmul.f32 %v612, 1.442695
    %v643 = vpow.pop %v642
    %v644 = vmul.f32 %v613, 1.442695
    %v645 = vpow.pop %v644
    %v646 = vmul.f32 %v614, 1.442695
    %v647 = vpow.pop %v646
    %v648 = vmul.f32 %v615, 1.442695
    %v649 = vpow.pop %v648
    %v650 = vmul.f32 %v616, 1.442695
    %v651 = vpow.pop %v650
    %v652 = vmul.f32 %v617, 1.442695
    %v653 = vpow.pop %v652
    %v654 = vmul.f32 %v618, 1.442695
    %v655 = vpow.pop %v654
    %v656 = vmul.f32 %v619, 1.442695
    %v657 = vpow.pop %v656
    %v658 = vmul.f32 %v620, 1.442695
    %v659 = vpow.pop %v658
    %v660 = vmul.f32 %v621, 1.442695
    %v661 = vpow.pop %v660
    %v662 = vmul.f32 %v622, 1.442695
    %v663 = vpow.pop %v662
    %v664 = vmul.f32 %v623, 1.442695
    %v665 = vpow.pop %v664
    %v666 = vmul.f32 %v624, 1.442695
    %v667 = vpow.pop %v666
    %v668 = vmul.f32 %v625, 1.442695
    %v669 = vpow.pop %v668
    %v670 = vmul.f32 %v626, 1.442695
    %v671 = vpow.pop %v670
    %v672 = vmul.f32 %v627, 1.442695
    %v673 = vpow.pop %v672
    %v674 = vmul.f32 %v628, 1.442695
    %v675 = vpow.pop %v674
    %v676 = vmul.f32 %v629, 1.442695
    %v677 = vpow.pop %v676
    %v678 = vmul.f32 %v630, 1.442695
    %v679 = vpow.pop %v678
    %v680 = vmul.f32 %v631, 1.442695
    %v681 = vpow.pop %v680
    %v682 = vadd.f32 %v633, 1.0
    %v683 = vadd.f32 %v635, 1.0
    %v684 = vadd.f32 %v637, 1.0
    %v685 = vadd.f32 %v639, 1.0
    %v686 = vadd.f32 %v641, 1.0
    %v687 = vadd.f32 %v643, 1.0
    %v688 = vadd.f32 %v645, 1.0
    %v689 = vadd.f32 %v647, 1.0
    %v690 = vadd.f32 %v649, 1.0
    %v691 = vadd.f32 %v651, 1.0
    %v692 = vadd.f32 %v653, 1.0
    %v693 = vadd.f32 %v655, 1.0
    %v694 = vadd.f32 %v657, 1.0
    %v695 = vadd.f32 %v659, 1.0
    %v696 = vadd.f32 %v661, 1.0
    %v697 = vadd.f32 %v663, 1.0
    %v698 = vadd.f32 %v665, 1.0
    %v699 = vadd.f32 %v667, 1.0
    %v700 = vadd.f32 %v669, 1.0
    %v701 = vadd.f32 %v671, 1.0
    %v702 = vadd.f32 %v673, 1.0
    %v703 = vadd.f32 %v675, 1.0
    %v704 = vadd.f32 %v677, 1.0
    %v705 = vadd.f32 %v679, 1.0
    %v706 = vadd.f32 %v681, 1.0
    %v707 = vrcp.pop %v682
    %v708 = vmul.f32 1.0, %v707
    %v709 = vrcp.pop %v683
    %v710 = vmul.f32 1.0, %v709
    %v711 = vrcp.pop %v684
    %v712 = vmul.f32 1.0, %v711
    %v713 = vrcp.pop %v685
    %v714 = vmul.f32 1.0, %v713
    %v715 = vrcp.pop %v686
    %v716 = vmul.f32 1.0, %v715
    %v717 = vrcp.pop %v687
    %v718 = vmul.f32 1.0, %v717
    %v719 = vrcp.pop %v688
    %v720 = vmul.f32 1.0, %v719
    %v721 = vrcp.pop %v689
    %v722 = vmul.f32 1.0, %v721
    %v723 = vrcp.pop %v690
    %v724 = vmul.f32 1.0, %v723
    %v725 = vrcp.pop %v691
    %v726 = vmul.f32 1.0, %v725
    %v727 = vrcp.pop %v692
    %v728 = vmul.f32 1.0, %v727
    %v729 = vrcp.pop %v693
    %v730 = vmul.f32 1.0, %v729
    %v731 = vrcp.pop %v694
    %v732 = vmul.f32 1.0, %v731
    %v733 = vrcp.pop %v695
    %v734 = vmul.f32 1.0, %v733
    %v735 = vrcp.pop %v696
    %v736 = vmul.f32 1.0, %v735
    %v737 = vrcp.pop %v697
    %v738 = vmul.f32 1.0, %v737
    %v739 = vrcp.pop %v698
    %v740 = vmul.f32 1.0, %v739
    %v741 = vrcp.pop %v699
    %v742 = vmul.f32 1.0, %v741
    %v743 = vrcp.pop %v700
    %v744 = vmul.f32 1.0, %v743
    %v745 = vrcp.pop %v701
    %v746 = vmul.f32 1.0, %v745
    %v747 = vrcp.pop %v702
    %v748 = vmul.f32 1.0, %v747
    %v749 = vrcp.pop %v703
    %v750 = vmul.f32 1.0, %v749
    %v751 = vrcp.pop %v704
    %v752 = vmul.f32 1.0, %v751
    %v753 = vrcp.pop %v705
    %v754 = vmul.f32 1.0, %v753
    %v755 = vrcp.pop %v706
    %v756 = vmul.f32 1.0, %v755
    %v757 = vmul.f32 %v708, %v484
    %v758 = vmul.f32 %v710, %v489
    %v759 = vmul.f32 %v712, %v494
    %v760 = vmul.f32 %v714, %v499
    %v761 = vmul.f32 %v716, %v504
    %v762 = vmul.f32 %v718, %v509
    %v763 = vmul.f32 %v720, %v514
    %v764 = vmul.f32 %v722, %v519
    %v765 = vmul.f32 %v724, %v524
    %v766 = vmul.f32 %v726, %v529
    %v767 = vmul.f32 %v728, %v534
    %v768 = vmul.f32 %v730, %v539
    %v769 = vmul.f32 %v732, %v544
    %v770 = vmul.f32 %v734, %v549
    %v771 = vmul.f32 %v736, %v554
    %v772 = vmul.f32 %v738, %v559
    %v773 = vmul.f32 %v740, %v564
    %v774 = vmul.f32 %v742, %v569
    %v775 = vmul.f32 %v744, %v574
    %v776 = vmul.f32 %v746, %v579
    %v777 = vmul.f32 %v748, %v584
    %v778 = vmul.f32 %v750, %v589
    %v779 = vmul.f32 %v752, %v594
    %v780 = vmul.f32 %v754, %v599
    %v781 = vmul.f32 %v756, %v604
    %v782 = vld [vmem:[#allocation2] sm:$0xff]
    %v783 = vld [vmem:[#allocation2 + $0x8] sm:$0xff]
    %v784 = vld [vmem:[#allocation2 + $0x10] sm:$0xff]
    %v785 = vld [vmem:[#allocation2 + $0x18] sm:$0xff]
    %v786 = vld [vmem:[#allocation2 + $0x20] sm:$0xff]
    %v787 = vld [vmem:[#allocation2 + $0x28] sm:$0xff]
    %v788 = vld [vmem:[#allocation2 + $0x30] sm:$0xff]
    %v789 = vld [vmem:[#allocation2 + $0x38] sm:$0xff]
    %v790 = vld [vmem:[#allocation2 + $0x40] sm:$0xff]
    %v791 = vld [vmem:[#allocation2 + $0x48] sm:$0xff]
    %v792 = vld [vmem:[#allocation2 + $0x50] sm:$0xff]
    %v793 = vld [vmem:[#allocation2 + $0x58] sm:$0xff]
    %v794 = vld [vmem:[#allocation2 + $0x60] sm:$0xff]
    %v795 = vld [vmem:[#allocation2 + $0x68] sm:$0xff]
    %v796 = vld [vmem:[#allocation2 + $0x70] sm:$0xff]
    %v797 = vld [vmem:[#allocation2 + $0x78] sm:$0xff]
    %v798 = vld [vmem:[#allocation2 + $0x80] sm:$0xff]
    %v799 = vld [vmem:[#allocation2 + $0x88] sm:$0xff]
    %v800 = vld [vmem:[#allocation2 + $0x90] sm:$0xff]
    %v801 = vld [vmem:[#allocation2 + $0x98] sm:$0xff]
    %v802 = vld [vmem:[#allocation2 + $0xa0] sm:$0xff]
    %v803 = vld [vmem:[#allocation2 + $0xa8] sm:$0xff]
    %v804 = vld [vmem:[#allocation2 + $0xb0] sm:$0xff]
    %v805 = vld [vmem:[#allocation2 + $0xb8] sm:$0xff]
    %v806 = vld [vmem:[#allocation2 + $0xc0] sm:$0xff]
    %v807 = vld [vmem:[#allocation11] sm:$0xff]
    %v808 = vld [vmem:[#allocation11 + $0x8] sm:$0xff]
    %v809 = vld [vmem:[#allocation11 + $0x10] sm:$0xff]
    %v810 = vld [vmem:[#allocation11 + $0x18] sm:$0xff]
    %v811 = vld [vmem:[#allocation11 + $0x20] sm:$0xff]
    %v812 = vld [vmem:[#allocation11 + $0x28] sm:$0xff]
    %v813 = vld [vmem:[#allocation11 + $0x30] sm:$0xff]
    %v814 = vld [vmem:[#allocation11 + $0x38] sm:$0xff]
    %v815 = vld [vmem:[#allocation11 + $0x40] sm:$0xff]
    %v816 = vld [vmem:[#allocation11 + $0x48] sm:$0xff]
    %v817 = vld [vmem:[#allocation11 + $0x50] sm:$0xff]
    %v818 = vld [vmem:[#allocation11 + $0x58] sm:$0xff]
    %v819 = vld [vmem:[#allocation11 + $0x60] sm:$0xff]
    %v820 = vld [vmem:[#allocation11 + $0x68] sm:$0xff]
    %v821 = vld [vmem:[#allocation11 + $0x70] sm:$0xff]
    %v822 = vld [vmem:[#allocation11 + $0x78] sm:$0xff]
    %823 = vmatprep.subr.mxu0 0.0
    %824 = vmatpush1.msra.mxu0 %v807
    %825 = vmatprep.subr.mxu0 0.0
    %826 = vmatpush1.msra.mxu0 %v808
    %827 = vmatprep.subr.mxu0 0.0
    %828 = vmatpush1.msra.mxu0 %v809
    %829 = vmatprep.subr.mxu0 0.0
    %830 = vmatpush1.msra.mxu0 %v810
    %831 = vmatprep.subr.mxu0 0.0
    %832 = vmatpush1.msra.mxu0 %v811
    %833 = vmatprep.subr.mxu0 0.0
    %834 = vmatpush1.msra.mxu0 %v812
    %835 = vmatprep.subr.mxu0 0.0
    %836 = vmatpush1.msra.mxu0 %v813
    %837 = vmatprep.subr.mxu0 0.0
    %838 = vmatpush1.msra.mxu0 %v814
    %839 = vmatprep.subr.mxu0 0.0
    %840 = vmatpush1.msra.mxu0 %v815
    %841 = vmatprep.subr.mxu0 0.0
    %842 = vmatpush1.msra.mxu0 %v816
    %843 = vmatprep.subr.mxu0 0.0
    %844 = vmatpush1.msra.mxu0 %v817
    %845 = vmatprep.subr.mxu0 0.0
    %846 = vmatpush1.msra.mxu0 %v818
    %847 = vmatprep.subr.mxu0 0.0
    %848 = vmatpush1.msra.mxu0 %v819
    %849 = vmatprep.subr.mxu0 0.0
    %850 = vmatpush1.msra.mxu0 %v820
    %851 = vmatprep.subr.mxu0 0.0
    %852 = vmatpush1.msra.mxu0 %v821
    %853 = vmatprep.subr.mxu0 0.0
    %854 = vmatpush1.msra.mxu0 %v822
    %855 = vmatprep.subr.mxu0 0.0
    %856 = vmatpush1.msra.mxu0 0.0
    %857 = vmatprep.subr.mxu0 0.0
    %858 = vmatpush1.msra.mxu0 0.0
    %859 = vmatprep.subr.mxu0 0.0
    %860 = vmatpush1.msra.mxu0 0.0
    %861 = vmatprep.subr.mxu0 0.0
    %862 = vmatpush1.msra.mxu0 0.0
    %863 = vmatprep.subr.mxu0 0.0
    %864 = vmatpush1.msra.mxu0 0.0
    %865 = vmatprep.subr.mxu0 0.0
    %866 = vmatpush1.msra.mxu0 0.0
    %867 = vmatprep.subr.mxu0 0.0
    %868 = vmatpush1.msra.mxu0 0.0
    %869 = vmatprep.subr.mxu0 0.0
    %870 = vmatpush1.msra.mxu0 0.0
    %871 = vmatprep.subr.mxu0 0.0
    %872 = vmatpush1.msra.mxu0 0.0
    %873 = vmatprep.subr.mxu0 0.0
    %874 = vmatpush1.msra.mxu0 0.0
    %875 = vmatprep.subr.mxu0 0.0
    %876 = vmatpush1.msra.mxu0 0.0
    %877 = vmatprep.subr.mxu0 0.0
    %878 = vmatpush1.msra.mxu0 0.0
    %879 = vmatprep.subr.mxu0 0.0
    %880 = vmatpush1.msra.mxu0 0.0
    %881 = vmatprep.subr.mxu0 0.0
    %882 = vmatpush1.msra.mxu0 0.0
    %883 = vmatprep.subr.mxu0 0.0
    %884 = vmatpush1.msra.mxu0 0.0
    %885 = vmatprep.subr.mxu0 0.0
    %886 = vmatpush1.msra.mxu0 0.0
    %887 = vmatprep.mubr.f32.mxu0 0.0
    %888 = vmatmul.mubr.f32.gmra.mrb[0].mxu0 %v757
    %v889 = vpop.f32.mrb[0].mxu0
    %v890 = vadd.f32 0.0, %v889
    %v891 = vpop.f32.mrb[0].mxu0
    %892 = vmatprep.mubr.f32.mxu0 0.0
    %893 = vmatmul.mubr.f32.gmra.mrb[0].mxu0 %v758
    %v894 = vpop.f32.mrb[0].mxu0
    %v895 = vadd.f32 0.0, %v894
    %v896 = vpop.f32.mrb[0].mxu0
    %897 = vmatprep.mubr.f32.mxu0 0.0
    %898 = vmatmul.mubr.f32.gmra.mrb[0].mxu0 %v759
    %v899 = vpop.f32.mrb[0].mxu0
    %v900 = vadd.f32 0.0, %v899
    %v901 = vpop.f32.mrb[0].mxu0
    %902 = vmatprep.mubr.f32.mxu0 0.0
    %903 = vmatmul.mubr.f32.gmra.mrb[0].mxu0 %v760
    %v904 = vpop.f32.mrb[0].mxu0
    %v905 = vadd.f32 0.0, %v904
    %v906 = vpop.f32.mrb[0].mxu0
    %907 = vmatprep.mubr.f32.mxu0 0.0
    %908 = vmatmul.mubr.f32.gmra.mrb[0].mxu0 %v761
    %v909 = vpop.f32.mrb[0].mxu0
    %v910 = vadd.f32 0.0, %v909
    %v911 = vpop.f32.mrb[0].mxu0
    %912 = vmatprep.mubr.f32.mxu0 0.0
    %913 = vmatmul.mubr.f32.gmra.mrb[0].mxu0 %v762
    %v914 = vpop.f32.mrb[0].mxu0
    %v915 = vadd.f32 0.0, %v914
    %v916 = vpop.f32.mrb[0].mxu0
    %917 = vmatprep.mubr.f32.mxu0 0.0
    %918 = vmatmul.mubr.f32.gmra.mrb[0].mxu0 %v763
    %v919 = vpop.f32.mrb[0].mxu0
    %v920 = vadd.f32 0.0, %v919
    %v921 = vpop.f32.mrb[0].mxu0
    %922 = vmatprep.mubr.f32.mxu0 0.0
    %923 = vmatmul.mubr.f32.gmra.mrb[0].mxu0 %v764
    %v924 = vpop.f32.mrb[0].mxu0
    %v925 = vadd.f32 0.0, %v924
    %v926 = vpop.f32.mrb[0].mxu0
    %927 = vmatprep.mubr.f32.mxu0 0.0
    %928 = vmatmul.mubr.f32.gmra.mrb[0].mxu0 %v765
    %v929 = vpop.f32.mrb[0].mxu0
    %v930 = vadd.f32 0.0, %v929
    %v931 = vpop.f32.mrb[0].mxu0
    %932 = vmatprep.mubr.f32.mxu0 0.0
    %933 = vmatmul.mubr.f32.gmra.mrb[0].mxu0 %v766
    %v934 = vpop.f32.mrb[0].mxu0
    %v935 = vadd.f32 0.0, %v934
    %v936 = vpop.f32.mrb[0].mxu0
    %937 = vmatprep.mubr.f32.mxu0 0.0
    %938 = vmatmul.mubr.f32.gmra.mrb[0].mxu0 %v767
    %v939 = vpop.f32.mrb[0].mxu0
    %v940 = vadd.f32 0.0, %v939
    %v941 = vpop.f32.mrb[0].mxu0
    %942 = vmatprep.mubr.f32.mxu0 0.0
    %943 = vmatmul.mubr.f32.gmra.mrb[0].mxu0 %v768
    %v944 = vpop.f32.mrb[0].mxu0
    %v945 = vadd.f32 0.0, %v944
    %v946 = vpop.f32.mrb[0].mxu0
    %947 = vmatprep.mubr.f32.mxu0 0.0
    %948 = vmatmul.mubr.f32.gmra.mrb[0].mxu0 %v769
    %v949 = vpop.f32.mrb[0].mxu0
    %v950 = vadd.f32 0.0, %v949
    %v951 = vpop.f32.mrb[0].mxu0
    %952 = vmatprep.mubr.f32.mxu0 0.0
    %953 = vmatmul.mubr.f32.gmra.mrb[0].mxu0 %v770
    %v954 = vpop.f32.mrb[0].mxu0
    %v955 = vadd.f32 0.0, %v954
    %v956 = vpop.f32.mrb[0].mxu0
    %957 = vmatprep.mubr.f32.mxu0 0.0
    %958 = vmatmul.mubr.f32.gmra.mrb[0].mxu0 %v771
    %v959 = vpop.f32.mrb[0].mxu0
    %v960 = vadd.f32 0.0, %v959
    %v961 = vpop.f32.mrb[0].mxu0
    %962 = vmatprep.mubr.f32.mxu0 0.0
    %963 = vmatmul.mubr.f32.gmra.mrb[0].mxu0 %v772
    %v964 = vpop.f32.mrb[0].mxu0
    %v965 = vadd.f32 0.0, %v964
    %v966 = vpop.f32.mrb[0].mxu0
    %967 = vmatprep.mubr.f32.mxu0 0.0
    %968 = vmatmul.mubr.f32.gmra.mrb[0].mxu0 %v773
    %v969 = vpop.f32.mrb[0].mxu0
    %v970 = vadd.f32 0.0, %v969
    %v971 = vpop.f32.mrb[0].mxu0
    %972 = vmatprep.mubr.f32.mxu0 0.0
    %973 = vmatmul.mubr.f32.gmra.mrb[0].mxu0 %v774
    %v974 = vpop.f32.mrb[0].mxu0
    %v975 = vadd.f32 0.0, %v974
    %v976 = vpop.f32.mrb[0].mxu0
    %977 = vmatprep.mubr.f32.mxu0 0.0
    %978 = vmatmul.mubr.f32.gmra.mrb[0].mxu0 %v775
    %v979 = vpop.f32.mrb[0].mxu0
    %v980 = vadd.f32 0.0, %v979
    %v981 = vpop.f32.mrb[0].mxu0
    %982 = vmatprep.mubr.f32.mxu0 0.0
    %983 = vmatmul.mubr.f32.gmra.mrb[0].mxu0 %v776
    %v984 = vpop.f32.mrb[0].mxu0
    %v985 = vadd.f32 0.0, %v984
    %v986 = vpop.f32.mrb[0].mxu0
    %987 = vmatprep.mubr.f32.mxu0 0.0
    %988 = vmatmul.mubr.f32.gmra.mrb[0].mxu0 %v777
    %v989 = vpop.f32.mrb[0].mxu0
    %v990 = vadd.f32 0.0, %v989
    %v991 = vpop.f32.mrb[0].mxu0
    %992 = vmatprep.mubr.f32.mxu0 0.0
    %993 = vmatmul.mubr.f32.gmra.mrb[0].mxu0 %v778
    %v994 = vpop.f32.mrb[0].mxu0
    %v995 = vadd.f32 0.0, %v994
    %v996 = vpop.f32.mrb[0].mxu0
    %997 = vmatprep.mubr.f32.mxu0 0.0
    %998 = vmatmul.mubr.f32.gmra.mrb[0].mxu0 %v779
    %v999 = vpop.f32.mrb[0].mxu0
    %v1000 = vadd.f32 0.0, %v999
    %v1001 = vpop.f32.mrb[0].mxu0
    %1002 = vmatprep.mubr.f32.mxu0 0.0
    %1003 = vmatmul.mubr.f32.gmra.mrb[0].mxu0 %v780
    %v1004 = vpop.f32.mrb[0].mxu0
    %v1005 = vadd.f32 0.0, %v1004
    %v1006 = vpop.f32.mrb[0].mxu0
    %1007 = vmatprep.mubr.f32.mxu0 0.0
    %1008 = vmatmul.mubr.f32.gmra.mrb[0].mxu0 %v781
    %v1009 = vpop.f32.mrb[0].mxu0
    %v1010 = vadd.f32 0.0, %v1009
    %v1011 = vpop.f32.mrb[0].mxu0
    %1012 = vdwg.mxu0
    %v1013 = vadd.f32 %v782, %v890
    %v1014 = vadd.f32 %v783, %v895
    %v1015 = vadd.f32 %v784, %v900
    %v1016 = vadd.f32 %v785, %v905
    %v1017 = vadd.f32 %v786, %v910
    %v1018 = vadd.f32 %v787, %v915
    %v1019 = vadd.f32 %v788, %v920
    %v1020 = vadd.f32 %v789, %v925
    %v1021 = vadd.f32 %v790, %v930
    %v1022 = vadd.f32 %v791, %v935
    %v1023 = vadd.f32 %v792, %v940
    %v1024 = vadd.f32 %v793, %v945
    %v1025 = vadd.f32 %v794, %v950
    %v1026 = vadd.f32 %v795, %v955
    %v1027 = vadd.f32 %v796, %v960
    %v1028 = vadd.f32 %v797, %v965
    %v1029 = vadd.f32 %v798, %v970
    %v1030 = vadd.f32 %v799, %v975
    %v1031 = vadd.f32 %v800, %v980
    %v1032 = vadd.f32 %v801, %v985
    %v1033 = vadd.f32 %v802, %v990
    %v1034 = vadd.f32 %v803, %v995
    %v1035 = vadd.f32 %v804, %v1000
    %v1036 = vadd.f32 %v805, %v1005
    %v1037 = vadd.f32 %v806, %v1010
    %1038 = vst [vmem:[#allocation2] sm:$0xff] %v1013
    %1039 = vst [vmem:[#allocation2 + $0x8] sm:$0xff] %v1014
    %1040 = vst [vmem:[#allocation2 + $0x10] sm:$0xff] %v1015
    %1041 = vst [vmem:[#allocation2 + $0x18] sm:$0xff] %v1016
    %1042 = vst [vmem:[#allocation2 + $0x20] sm:$0xff] %v1017
    %1043 = vst [vmem:[#allocation2 + $0x28] sm:$0xff] %v1018
    %1044 = vst [vmem:[#allocation2 + $0x30] sm:$0xff] %v1019
    %1045 = vst [vmem:[#allocation2 + $0x38] sm:$0xff] %v1020
    %1046 = vst [vmem:[#allocation2 + $0x40] sm:$0xff] %v1021
    %1047 = vst [vmem:[#allocation2 + $0x48] sm:$0xff] %v1022
    %1048 = vst [vmem:[#allocation2 + $0x50] sm:$0xff] %v1023
    %1049 = vst [vmem:[#allocation2 + $0x58] sm:$0xff] %v1024
    %1050 = vst [vmem:[#allocation2 + $0x60] sm:$0xff] %v1025
    %1051 = vst [vmem:[#allocation2 + $0x68] sm:$0xff] %v1026
    %1052 = vst [vmem:[#allocation2 + $0x70] sm:$0xff] %v1027
    %1053 = vst [vmem:[#allocation2 + $0x78] sm:$0xff] %v1028
    %1054 = vst [vmem:[#allocation2 + $0x80] sm:$0xff] %v1029
    %1055 = vst [vmem:[#allocation2 + $0x88] sm:$0xff] %v1030
    %1056 = vst [vmem:[#allocation2 + $0x90] sm:$0xff] %v1031
    %1057 = vst [vmem:[#allocation2 + $0x98] sm:$0xff] %v1032
    %1058 = vst [vmem:[#allocation2 + $0xa0] sm:$0xff] %v1033
    %1059 = vst [vmem:[#allocation2 + $0xa8] sm:$0xff] %v1034
    %1060 = vst [vmem:[#allocation2 + $0xb0] sm:$0xff] %v1035
    %1061 = vst [vmem:[#allocation2 + $0xb8] sm:$0xff] %v1036
    %1062 = vst [vmem:[#allocation2 + $0xc0] sm:$0xff] %v1037
    %1063 = vst [vmem:[#allocation12] sm:$0xff] %v271
    %1064 = vst [vmem:[#allocation12 + $0x8] sm:$0xff] %v276
    %1065 = vst [vmem:[#allocation12 + $0x10] sm:$0xff] %v281
    %1066 = vst [vmem:[#allocation12 + $0x18] sm:$0xff] %v286
    %1067 = vst [vmem:[#allocation12 + $0x20] sm:$0xff] %v291
    %1068 = vst [vmem:[#allocation12 + $0x28] sm:$0xff] %v296
    %1069 = vst [vmem:[#allocation12 + $0x30] sm:$0xff] %v301
    %1070 = vst [vmem:[#allocation12 + $0x38] sm:$0xff] %v306
    %1071 = vst [vmem:[#allocation12 + $0x40] sm:$0xff] %v311
    %1072 = vst [vmem:[#allocation12 + $0x48] sm:$0xff] %v316
    %1073 = vst [vmem:[#allocation12 + $0x50] sm:$0xff] %v321
    %1074 = vst [vmem:[#allocation12 + $0x58] sm:$0xff] %v326
    %1075 = vst [vmem:[#allocation12 + $0x60] sm:$0xff] %v331
    %1076 = vst [vmem:[#allocation12 + $0x68] sm:$0xff] %v336
    %1077 = vst [vmem:[#allocation12 + $0x70] sm:$0xff] %v341
    %1078 = vst [vmem:[#allocation12 + $0x78] sm:$0xff] %v346
    %1079 = vst [vmem:[#allocation12 + $0x80] sm:$0xff] %v351
    %1080 = vst [vmem:[#allocation12 + $0x88] sm:$0xff] %v356
    %1081 = vst [vmem:[#allocation12 + $0x90] sm:$0xff] %v361
    %1082 = vst [vmem:[#allocation12 + $0x98] sm:$0xff] %v366
    %1083 = vst [vmem:[#allocation12 + $0xa0] sm:$0xff] %v371
    %1084 = vst [vmem:[#allocation12 + $0xa8] sm:$0xff] %v376
    %1085 = vst [vmem:[#allocation12 + $0xb0] sm:$0xff] %v381
    %1086 = vst [vmem:[#allocation12 + $0xb8] sm:$0xff] %v386
    %1087 = vst [vmem:[#allocation12 + $0xc0] sm:$0xff] %v391
    %1088 = vst [vmem:[#allocation13] sm:$0xff] %v484
    %1089 = vst [vmem:[#allocation13 + $0x8] sm:$0xff] %v489
    %1090 = vst [vmem:[#allocation13 + $0x10] sm:$0xff] %v494
    %1091 = vst [vmem:[#allocation13 + $0x18] sm:$0xff] %v499
    %1092 = vst [vmem:[#allocation13 + $0x20] sm:$0xff] %v504
    %1093 = vst [vmem:[#allocation13 + $0x28] sm:$0xff] %v509
    %1094 = vst [vmem:[#allocation13 + $0x30] sm:$0xff] %v514
    %1095 = vst [vmem:[#allocation13 + $0x38] sm:$0xff] %v519
    %1096 = vst [vmem:[#allocation13 + $0x40] sm:$0xff] %v524
    %1097 = vst [vmem:[#allocation13 + $0x48] sm:$0xff] %v529
    %1098 = vst [vmem:[#allocation13 + $0x50] sm:$0xff] %v534
    %1099 = vst [vmem:[#allocation13 + $0x58] sm:$0xff] %v539
    %1100 = vst [vmem:[#allocation13 + $0x60] sm:$0xff] %v544
    %1101 = vst [vmem:[#allocation13 + $0x68] sm:$0xff] %v549
    %1102 = vst [vmem:[#allocation13 + $0x70] sm:$0xff] %v554
    %1103 = vst [vmem:[#allocation13 + $0x78] sm:$0xff] %v559
    %1104 = vst [vmem:[#allocation13 + $0x80] sm:$0xff] %v564
    %1105 = vst [vmem:[#allocation13 + $0x88] sm:$0xff] %v569
    %1106 = vst [vmem:[#allocation13 + $0x90] sm:$0xff] %v574
    %1107 = vst [vmem:[#allocation13 + $0x98] sm:$0xff] %v579
    %1108 = vst [vmem:[#allocation13 + $0xa0] sm:$0xff] %v584
    %1109 = vst [vmem:[#allocation13 + $0xa8] sm:$0xff] %v589
    %1110 = vst [vmem:[#allocation13 + $0xb0] sm:$0xff] %v594
    %1111 = vst [vmem:[#allocation13 + $0xb8] sm:$0xff] %v599
    %1112 = vst [vmem:[#allocation13 + $0xc0] sm:$0xff] %v604
    // Predicated region
    $region58: #{tpu_custom_call.1} parent=1 // pred_check
      %p1113 = pneg %p102
    $region59: #{tpu_custom_call.1} parent=1 // pred_check_branch
      %1115 = sbr.rel (%p1113) target = $region61
    $region60: #{tpu_custom_call.1} parent=1 // pred_region
      %v1116 = vld [vmem:[#allocation2] sm:$0xff]
      %v1117 = vld [vmem:[#allocation2 + $0x8] sm:$0xff]
      %v1118 = vld [vmem:[#allocation2 + $0x10] sm:$0xff]
      %v1119 = vld [vmem:[#allocation2 + $0x18] sm:$0xff]
      %v1120 = vld [vmem:[#allocation2 + $0x20] sm:$0xff]
      %v1121 = vld [vmem:[#allocation2 + $0x28] sm:$0xff]
      %v1122 = vld [vmem:[#allocation2 + $0x30] sm:$0xff]
      %v1123 = vld [vmem:[#allocation2 + $0x38] sm:$0xff]
      %v1124 = vld [vmem:[#allocation2 + $0x40] sm:$0xff]
      %v1125 = vld [vmem:[#allocation2 + $0x48] sm:$0xff]
      %v1126 = vld [vmem:[#allocation2 + $0x50] sm:$0xff]
      %v1127 = vld [vmem:[#allocation2 + $0x58] sm:$0xff]
      %v1128 = vld [vmem:[#allocation2 + $0x60] sm:$0xff]
      %v1129 = vld [vmem:[#allocation2 + $0x68] sm:$0xff]
      %v1130 = vld [vmem:[#allocation2 + $0x70] sm:$0xff]
      %v1131 = vld [vmem:[#allocation2 + $0x78] sm:$0xff]
      %v1132 = vld [vmem:[#allocation2 + $0x80] sm:$0xff]
      %v1133 = vld [vmem:[#allocation2 + $0x88] sm:$0xff]
      %v1134 = vld [vmem:[#allocation2 + $0x90] sm:$0xff]
      %v1135 = vld [vmem:[#allocation2 + $0x98] sm:$0xff]
      %v1136 = vld [vmem:[#allocation2 + $0xa0] sm:$0xff]
      %v1137 = vld [vmem:[#allocation2 + $0xa8] sm:$0xff]
      %v1138 = vld [vmem:[#allocation2 + $0xb0] sm:$0xff]
      %v1139 = vld [vmem:[#allocation2 + $0xb8] sm:$0xff]
      %v1140 = vld [vmem:[#allocation2 + $0xc0] sm:$0xff]
      %v1141 = vld [vmem:[%s7] sm:$0x1]
      %v1143 = vlaneseq
      %v1144 = vshrl.u32 %v1143, 7
      %v1145 = vsub.s32 0, %v1144
      %v1146 = vrot.slane %v1141, %v1145
      %v1148 = vadd.f32 %v1116, %v1146
      %v1149 = vadd.f32 %v1117, %v1146
      %v1150 = vadd.f32 %v1118, %v1146
      %v1151 = vadd.f32 %v1119, %v1146
      %v1152 = vadd.f32 %v1120, %v1146
      %v1153 = vadd.f32 %v1121, %v1146
      %v1154 = vadd.f32 %v1122, %v1146
      %v1155 = vadd.f32 %v1123, %v1146
      %v1156 = vadd.f32 %v1124, %v1146
      %v1157 = vadd.f32 %v1125, %v1146
      %v1158 = vadd.f32 %v1126, %v1146
      %v1159 = vadd.f32 %v1127, %v1146
      %v1160 = vadd.f32 %v1128, %v1146
      %v1161 = vadd.f32 %v1129, %v1146
      %v1162 = vadd.f32 %v1130, %v1146
      %v1163 = vadd.f32 %v1131, %v1146
      %v1164 = vadd.f32 %v1132, %v1146
      %v1165 = vadd.f32 %v1133, %v1146
      %v1166 = vadd.f32 %v1134, %v1146
      %v1167 = vadd.f32 %v1135, %v1146
      %v1168 = vadd.f32 %v1136, %v1146
      %v1169 = vadd.f32 %v1137, %v1146
      %v1170 = vadd.f32 %v1138, %v1146
      %v1171 = vadd.f32 %v1139, %v1146
      %v1172 = vadd.f32 %v1140, %v1146
      %1173 = vst [vmem:[#allocation15] sm:$0xff] %v1148
      %1174 = vst [vmem:[#allocation15 + $0x8] sm:$0xff] %v1149
      %1175 = vst [vmem:[#allocation15 + $0x10] sm:$0xff] %v1150
      %1176 = vst [vmem:[#allocation15 + $0x18] sm:$0xff] %v1151
      %1177 = vst [vmem:[#allocation15 + $0x20] sm:$0xff] %v1152
      %1178 = vst [vmem:[#allocation15 + $0x28] sm:$0xff] %v1153
      %1179 = vst [vmem:[#allocation15 + $0x30] sm:$0xff] %v1154
      %1180 = vst [vmem:[#allocation15 + $0x38] sm:$0xff] %v1155
      %1181 = vst [vmem:[#allocation15 + $0x40] sm:$0xff] %v1156
      %1182 = vst [vmem:[#allocation15 + $0x48] sm:$0xff] %v1157
      %1183 = vst [vmem:[#allocation15 + $0x50] sm:$0xff] %v1158
      %1184 = vst [vmem:[#allocation15 + $0x58] sm:$0xff] %v1159
      %1185 = vst [vmem:[#allocation15 + $0x60] sm:$0xff] %v1160
      %1186 = vst [vmem:[#allocation15 + $0x68] sm:$0xff] %v1161
      %1187 = vst [vmem:[#allocation15 + $0x70] sm:$0xff] %v1162
      %1188 = vst [vmem:[#allocation15 + $0x78] sm:$0xff] %v1163
      %1189 = vst [vmem:[#allocation15 + $0x80] sm:$0xff] %v1164
      %1190 = vst [vmem:[#allocation15 + $0x88] sm:$0xff] %v1165
      %1191 = vst [vmem:[#allocation15 + $0x90] sm:$0xff] %v1166
      %1192 = vst [vmem:[#allocation15 + $0x98] sm:$0xff] %v1167
      %1193 = vst [vmem:[#allocation15 + $0xa0] sm:$0xff] %v1168
      %1194 = vst [vmem:[#allocation15 + $0xa8] sm:$0xff] %v1169
      %1195 = vst [vmem:[#allocation15 + $0xb0] sm:$0xff] %v1170
      %1196 = vst [vmem:[#allocation15 + $0xb8] sm:$0xff] %v1171
      %1197 = vst [vmem:[#allocation15 + $0xc0] sm:$0xff] %v1172
    $region61: #{tpu_custom_call.1} parent=1 // pred_fallthru
      _
    // Predicated region
    $region62: #{tpu_custom_call.1} parent=1 // pred_check
      _
    $region63: #{tpu_custom_call.1} parent=1 // pred_check_branch
      %1199 = sbr.rel (0) target = $region65
    $region64: #{tpu_custom_call.1} parent=1 // pred_region
      %s1201 = ssub.s32 3200, 3200
      %1202 = vsyncadd [#allocation5], %s1201
      %s1203 = sshll.u32 [#allocation12], 4
      %s1204 = int_to_ptr.vmem [resolvable:$true] %s1203
      %1209 = dma.vmem_to_hbm [thread:$0]  %s1204, 3200, %s8, [#allocation5], 128, 128, 8
    $region65: #{tpu_custom_call.1} parent=1 // pred_fallthru
      _
    // Predicated region
    $region66: #{tpu_custom_call.1} parent=1 // pred_check
      _
    $region67: #{tpu_custom_call.1} parent=1 // pred_check_branch
      %1211 = sbr.rel (0) target = $region69
    $region68: #{tpu_custom_call.1} parent=1 // pred_region
      %s1213 = ssub.s32 3200, 3200
      %1214 = vsyncadd [#allocation14], %s1213
      %s1215 = sshll.u32 [#allocation13], 4
      %s1216 = int_to_ptr.vmem [resolvable:$true] %s1215
      %1221 = dma.vmem_to_hbm [thread:$0]  %s1216, 3200, %s9, [#allocation14], 128, 128, 8
    $region69: #{tpu_custom_call.1} parent=1 // pred_fallthru
      _
    // Predicated region
    $region70: #{tpu_custom_call.1} parent=1 // pred_check
      _
    $region71: #{tpu_custom_call.1} parent=1 // pred_check_branch
      %1223 = sbr.rel (0) target = $region73
    $region72: #{tpu_custom_call.1} parent=1 // pred_region
      %s1225 = ssub.s32 3200, 3200
      %1226 = vsyncadd [#allocation14], %s1225
      %s1227 = sshll.u32 [#allocation15], 4
      %s1228 = int_to_ptr.vmem [resolvable:$true] %s1227
      %1233 = dma.vmem_to_hbm [thread:$0]  %s1228, 3200, %s10, [#allocation14], 128, 128, 8
    $region73: #{tpu_custom_call.1} parent=1 // pred_fallthru
      _
    // Predicated region
    $region74: #{tpu_custom_call.1} parent=1 // pred_check
      _
    $region75: #{tpu_custom_call.1} parent=1 // pred_check_branch
      %1235 = sbr.rel (0) target = $region77
    $region76: #{tpu_custom_call.1} parent=1 // pred_region
      %1236 = dma.done [#allocation5], 3200
    $region77: #{tpu_custom_call.1} parent=1 // pred_fallthru
      _
    // Predicated region
    $region78: #{tpu_custom_call.1} parent=1 // pred_check
      _
    $region79: #{tpu_custom_call.1} parent=1 // pred_check_branch
      %1238 = sbr.rel (0) target = $region81
    $region80: #{tpu_custom_call.1} parent=1 // pred_region
      %1239 = dma.done [#allocation14], 3200
    $region81: #{tpu_custom_call.1} parent=1 // pred_fallthru
      _
    // Predicated region
    $region82: #{tpu_custom_call.1} parent=1 // pred_check
      _
    $region83: #{tpu_custom_call.1} parent=1 // pred_check_branch
      %1241 = sbr.rel (0) target = $region85
    $region84: #{tpu_custom_call.1} parent=1 // pred_region
      %1242 = dma.done [#allocation14], 3200
    $region85: #{tpu_custom_call.1} parent=1 // pred_fallthru
      _
    %1243 = vsyncpa [#allocation4], 1
    %1244 = vsyncpa [#allocation7], 1
    %1245 = vsyncpa [#allocation10], 1
    %1246 = vsyncpa [#allocation5], 1
    %1247 = vsyncpa [#allocation14], 1

</llo_original>
